<compile_context>
chip_gen: v7x
topology: tpu7x:2x2x1
jax: 0.10.0
libtpu: 0.0.40
codegen_flags: <defaults>
</compile_context>

<pallas_src>
import functools

import jax
import jax.numpy as jnp
from jax.experimental import pallas as pl
from jax.experimental.pallas import tpu as pltpu

BN_EPS = 1e-5
TM_MM = 512       # nominal pixel-row tile for plain matmuls (1x1 convs / im2col)
TM_CONV = 256     # nominal pixel-row tile for the 3x3 tap-DMA conv kernel
MAX_TN = 512      # max Cout tile (lane / MXU N dimension)


def _pick_vmem_limit():
    # Per-generation VMEM budget: ~3/4 of physical, capped at 100 MiB.
    # (v5e/v6e: 96 MiB of 128 MiB, v7x: 48 MiB of 64 MiB.)  Safe fallback: 48 MiB.
    try:
        cap = int(pltpu.get_tpu_info().vmem_capacity_bytes)
        return int(min(cap * 3 // 4, 100 * 1024 * 1024))
    except Exception:
        return 48 * 1024 * 1024


_VMEM_LIMIT = _pick_vmem_limit()


def _round_up(x, m):
    return (x + m - 1) // m * m


def _pick_tm(m, nominal):
    """Largest useful M-tile: nominal at scale, round_up(m, 8) for tiny inputs."""
    return min(nominal, _round_up(m, 8))


# ---------------------------------------------------------------------------
# Pallas kernels
# ---------------------------------------------------------------------------
def _mm_bias_kernel(a_ref, w_ref, b_ref, o_ref, *, relu):
    acc = jnp.dot(a_ref[...], w_ref[...], preferred_element_type=jnp.float32)
    y = acc + b_ref[...]
    if relu:
        y = jnp.maximum(y, 0.0)
    o_ref[...] = y.astype(o_ref.dtype)


def _mm_bias_res_kernel(a_ref, w_ref, b_ref, r_ref, o_ref, *, relu):
    acc = jnp.dot(a_ref[...], w_ref[...], preferred_element_type=jnp.float32)
    y = acc + b_ref[...] + r_ref[...].astype(jnp.float32)
    if relu:
        y = jnp.maximum(y, 0.0)
    o_ref[...] = y.astype(o_ref.dtype)


def _conv3x3_tap_kernel(x_hbm, w_ref, b_ref, o_ref, xbuf, sems, acc_ref, *,
                        tap_offsets, tm, relu):
    # x_hbm : (rows, C) bf16 flattened padded image in HBM (extra tail rows appended)
    # w_ref : (9, C, Cout) bf16 resident weights;  b_ref: (1, Cout) f32 folded BN bias
    # xbuf  : (2, 9, tm, C) bf16 scratch (2 slots => >=2-iteration reuse distance)
    # sems  : (2, 9) DMA semaphores;  acc_ref: (tm, Cout) f32 accumulator
    # All DMAs are started and waited within this grid step -> megacore-safe.
    m = pl.program_id(0)
    slot = m % 2
    base = m * tm

    copies = []
    for t, off in enumerate(tap_offsets):        # issue all tap DMAs up front
        cp = pltpu.make_async_copy(
            x_hbm.at[pl.ds(base + off, tm), :],
            xbuf.at[slot, t],
            sems.at[slot, t])
        cp.start()
        copies.append(cp)

    for t in range(len(tap_offsets)):            # taps t>0 DMA under taps <t matmuls
        copies[t].wait()
        part = jnp.dot(xbuf[slot, t], w_ref[t],
                       preferred_element_type=jnp.float32)
        if t == 0:
            acc_ref[...] = part + b_ref[...]     # bias folded into accumulator init
        else:
            acc_ref[...] += part

    y = acc_ref[...]
    if relu:
        y = jnp.maximum(y, 0.0)
    o_ref[...] = y.astype(o_ref.dtype)


def _max9_kernel(x_ref, o_ref):
    # x: [9, TM, C] -> max over the 9 pooling taps
    o_ref[...] = jnp.max(x_ref[...], axis=0)


def _gmax_kernel(x_ref, o_ref):
    # x: [N, H*W, TC] -> max over the spatial axis
    o_ref[...] = jnp.max(x_ref[...].astype(jnp.float32), axis=1)


# ---------------------------------------------------------------------------
# Conv / pool wrappers (glue in XLA, compute in Pallas)
# ---------------------------------------------------------------------------
def _matmul_bias(a, w, bias, *, relu, residual=None):
    """a:(M,K) bf16, w:(K,Cout) bf16 (BN scale folded), bias:(1,Cout) f32."""
    m, k = a.shape
    cout = w.shape[1]
    tn = MAX_TN if cout % MAX_TN == 0 else cout
    tm = _pick_tm(m, TM_MM)
    m_pad = _round_up(m, tm)
    if m_pad != m:
        a = jnp.pad(a, ((0, m_pad - m), (0, 0)))
        if residual is not None:
            residual = jnp.pad(residual, ((0, m_pad - m), (0, 0)))

    in_specs = [
        pl.BlockSpec((tm, k), lambda i, j: (i, 0)),
        pl.BlockSpec((k, tn), lambda i, j: (0, j)),
        pl.BlockSpec((1, tn), lambda i, j: (0, j)),
    ]
    args = [a, w, bias]
    if residual is not None:
        in_specs.append(pl.BlockSpec((tm, tn), lambda i, j: (i, j)))
        args.append(residual)
        kern = functools.partial(_mm_bias_res_kernel, relu=relu)
    else:
        kern = functools.partial(_mm_bias_kernel, relu=relu)

    out = pl.pallas_call(
        kern,
        out_shape=jax.ShapeDtypeStruct((m_pad, cout), jnp.bfloat16),
        grid=(m_pad // tm, cout // tn),
        in_specs=in_specs,
        out_specs=pl.BlockSpec((tm, tn), lambda i, j: (i, j)),
        compiler_params=pltpu.CompilerParams(
            dimension_semantics=("parallel", "parallel"),
            vmem_limit_bytes=_VMEM_LIMIT),
    )(*args)
    return out if m_pad == m else out[:m]


def _conv3x3_s1(x, w, bias, *, relu):
    """Stride-1 3x3 conv without im2col: per-tap DMA from the padded image in HBM.

    The conv is evaluated on the padded (Hq, Wq) grid so every tap is a constant
    row offset (di*Wq + dj) in the flattened image; the border/junk rows are
    sliced away afterwards.
    """
    n, h, ww, c = x.shape
    kh, kw, cin, cout = w.shape
    hq, wq = h + 2, ww + 2
    xp = jnp.pad(x, ((0, 0), (1, 1), (1, 1), (0, 0)))
    m_valid = n * hq * wq
    tm = _pick_tm(m_valid, TM_CONV)
    m_grid = _round_up(m_valid, tm)
    offs = tuple(di * wq + dj for di in range(kh) for dj in range(kw))
    m_in = _round_up(m_grid + offs[-1], 8)
    xflat = jnp.pad(xp.reshape(m_valid, c), ((0, m_in - m_valid), (0, 0)))
    wt = w.reshape(kh * kw, cin, cout)
    kk = kh * kw

    out = pl.pallas_call(
        functools.partial(_conv3x3_tap_kernel,
                          tap_offsets=offs, tm=tm, relu=relu),
        out_shape=jax.ShapeDtypeStruct((m_grid, cout), jnp.bfloat16),
        grid=(m_grid // tm,),
        in_specs=[
            pl.BlockSpec(memory_space=pl.ANY),                    # image stays in HBM
            pl.BlockSpec((kk, cin, cout), lambda i: (0, 0, 0)),   # resident weights
            pl.BlockSpec((1, cout), lambda i: (0, 0)),            # folded BN bias
        ],
        out_specs=pl.BlockSpec((tm, cout), lambda i: (i, 0)),
        scratch_shapes=[
            pltpu.VMEM((2, kk, tm, cin), jnp.bfloat16),
            pltpu.SemaphoreType.DMA((2, kk)),
            pltpu.VMEM((tm, cout), jnp.float32),
        ],
        compiler_params=pltpu.CompilerParams(
            dimension_semantics=("parallel",),
            vmem_limit_bytes=_VMEM_LIMIT),
    )(xflat, wt, bias)

    out = out[:m_valid].reshape(n, hq, wq, cout)
    return out[:, :h, :ww, :]


def conv_bn_act(x, p, stride, relu=True, residual=None):
    """x: NHWC bf16.  p: {'w': (kh,kw,cin,cout) bf16 (BN scale folded),
                          'bias': (1,cout) f32 folded BN bias}."""
    w = p["w"]
    bias = p["bias"]
    kh, kw, cin, cout = w.shape
    n, h, ww, c = x.shape
    pad = (kh - 1) // 2

    if kh == 1 and kw == 1:
        xs = x if stride == 1 else x[:, ::stride, ::stride, :]
        _, ho, wo, _ = xs.shape
        a = xs.reshape(n * ho * wo, c)
        res2d = None if residual is None else residual.reshape(n * ho * wo, cout)
        out = _matmul_bias(a, w.reshape(cin, cout), bias, relu=relu, residual=res2d)
        return out.reshape(n, ho, wo, cout)

    if kh == 3 and stride == 1 and residual is None:
        return _conv3x3_s1(x, w, bias, relu=relu)

    # im2col fallback (stem 7x7 s2 + the three stride-2 3x3 convs only), bf16
    xp = jnp.pad(x, ((0, 0), (pad, pad), (pad, pad), (0, 0)))
    ho = (h + 2 * pad - kh) // stride + 1
    wo = (ww + 2 * pad - kw) // stride + 1
    cols = []
    for i in range(kh):
        for j in range(kw):
            cols.append(xp[:, i:i + stride * ho:stride,
                           j:j + stride * wo:stride, :])
    a = jnp.concatenate(cols, axis=-1).reshape(n * ho * wo, kh * kw * c)
    out = _matmul_bias(a, w.reshape(kh * kw * cin, cout), bias, relu=relu)
    return out.reshape(n, ho, wo, cout)


def maxpool_3x3_s2(x):
    """PyTorch MaxPool2d(3, stride=2, padding=1) on NHWC, tiled over pixel rows."""
    n, h, w, c = x.shape
    pad, stride, k = 1, 2, 3
    ho = (h + 2 * pad - k) // stride + 1
    wo = (w + 2 * pad - k) // stride + 1
    xp = jnp.pad(x, ((0, 0), (pad, pad), (pad, pad), (0, 0)),
                 constant_values=-jnp.inf)
    m = n * ho * wo
    taps = [xp[:, i:i + stride * ho:stride,
               j:j + stride * wo:stride, :].reshape(1, m, c)
            for i in range(k) for j in range(k)]
    stacked = jnp.concatenate(taps, axis=0)                 # (9, M, C)

    tile_m = _pick_tm(m, 512)
    m_pad = _round_up(m, tile_m)
    if m_pad != m:
        stacked = jnp.pad(stacked, ((0, 0), (0, m_pad - m), (0, 0)))

    out = pl.pallas_call(
        _max9_kernel,
        out_shape=jax.ShapeDtypeStruct((m_pad, c), x.dtype),
        grid=(m_pad // tile_m,),
        in_specs=[pl.BlockSpec((9, tile_m, c), lambda i: (0, i, 0))],
        out_specs=pl.BlockSpec((tile_m, c), lambda i: (i, 0)),
        compiler_params=pltpu.CompilerParams(
            dimension_semantics=("parallel",),
            vmem_limit_bytes=_VMEM_LIMIT),
    )(stacked)
    out = out if m_pad == m else out[:m]
    return out.reshape(n, ho, wo, c)


def global_max_pool(x):
    """AdaptiveMaxPool2d(1) on NHWC -> [N, C] f32, tiled over channels."""
    n, h, w, c = x.shape
    hw = h * w
    tc = MAX_TN if c % MAX_TN == 0 else c
    return pl.pallas_call(
        _gmax_kernel,
        out_shape=jax.ShapeDtypeStruct((n, c), jnp.float32),
        grid=(c // tc,),
        in_specs=[pl.BlockSpec((n, hw, tc), lambda i: (0, 0, i))],
        out_specs=pl.BlockSpec((n, tc), lambda i: (0, i)),
        compiler_params=pltpu.CompilerParams(
            dimension_semantics=("parallel",),
            vmem_limit_bytes=_VMEM_LIMIT),
    )(x.reshape(n, hw, c))


# ---------------------------------------------------------------------------
# Deterministic parameter construction (ResNet101, BN folded into weights/bias)
# ---------------------------------------------------------------------------
def make_conv_bn(key, kh, kw, cin, cout):
    k1, k2, k3, k4, k5 = jax.random.split(key, 5)
    fan_in = kh * kw * cin
    w = jax.random.normal(k1, (kh, kw, cin, cout), jnp.float32) * jnp.sqrt(2.0 / fan_in)
    gamma = 1.0 + 0.1 * jax.random.uniform(k2, (cout,), jnp.float32, -1.0, 1.0)
    beta = 0.05 * jax.random.normal(k3, (cout,), jnp.float32)
    mean = 0.05 * jax.random.normal(k4, (cout,), jnp.float32)
    var = 1.0 + 0.1 * jax.random.uniform(k5, (cout,), jnp.float32, 0.0, 1.0)
    scale = gamma * jax.lax.rsqrt(var + BN_EPS)          # eval-mode BN
    bias = beta - mean * scale
    return {"w": (w * scale).astype(jnp.bfloat16),        # BN scale folded into weights
            "bias": bias.reshape(1, cout).astype(jnp.float32)}


def make_bottleneck(key, inplanes, planes, downsample):
    k1, k2, k3, k4 = jax.random.split(key, 4)
    blk = {"conv1": make_conv_bn(k1, 1, 1, inplanes, planes),
           "conv2": make_conv_bn(k2, 3, 3, planes, planes),
           "conv3": make_conv_bn(k3, 1, 1, planes, planes * 4)}
    if downsample:
        blk["downsample"] = make_conv_bn(k4, 1, 1, inplanes, planes * 4)
    return blk


LAYER_CFG = ((64, 3, 1), (128, 4, 2), (256, 23, 2), (512, 3, 2))   # ResNet-101


def make_resnet101_params(key):
    key, k = jax.random.split(key)
    params = {"conv1": make_conv_bn(k, 7, 7, 3, 64)}
    inplanes = 64
    layers = []
    for planes, nblocks, stride in LAYER_CFG:
        blocks = []
        for b in range(nblocks):
            key, k = jax.random.split(key)
            s = stride if b == 0 else 1
            ds = (b == 0) and (s != 1 or inplanes != planes * 4)
            blocks.append(make_bottleneck(k, inplanes, planes, ds))
            inplanes = planes * 4
        layers.append(blocks)
    params["layers"] = layers
    return params


# ---------------------------------------------------------------------------
# Forward (node_layers / edge_layers / final_layers)
# ---------------------------------------------------------------------------
def _bottleneck_forward(x, blk, stride):
    if "downsample" in blk:
        identity = conv_bn_act(x, blk["downsample"], stride, relu=False)
    else:
        identity = x
    out = conv_bn_act(x, blk["conv1"], 1, relu=True)
    out = conv_bn_act(out, blk["conv2"], stride, relu=True)
    # bn3 + residual add + relu fused into the 1x1 conv3 matmul epilogue
    out = conv_bn_act(out, blk["conv3"], 1, relu=True, residual=identity)
    return out


# jit per distinct (shape, stride, has-downsample) signature; the 22 identical
# layer3 blocks (and similar) reuse a single compiled executable via jit's cache.
_bottleneck_jit = jax.jit(_bottleneck_forward, static_argnames=("stride",))


@jax.jit
def _stem_jit(x, conv1):
    y = conv_bn_act(x, conv1, stride=2, relu=True)
    return maxpool_3x3_s2(y)


_gmax_jit = jax.jit(global_max_pool)


def resnet101_backbone_forward(x_nchw, params):
    # layout: convert PyTorch NCHW input to NHWC bf16 for the kernels.
    x = jnp.transpose(x_nchw, (0, 2, 3, 1)).astype(jnp.bfloat16)

    # node_layers = conv1, bn1, relu, maxpool, layer1, layer2, layer3
    x = _stem_jit(x, params["conv1"])
    for li in range(3):
        stride = LAYER_CFG[li][2]
        for b, blk in enumerate(params["layers"][li]):
            x = _bottleneck_jit(x, blk, stride=stride if b == 0 else 1)
    node_feat = x

    # edge_layers = layer4[:1]
    x = _bottleneck_jit(x, params["layers"][3][0], stride=LAYER_CFG[3][2])
    edge_feat = x

    # final_layers = layer4[1:] + AdaptiveMaxPool2d(1)
    for blk in params["layers"][3][1:]:
        x = _bottleneck_jit(x, blk, stride=1)
    final = _gmax_jit(x)                                    # (N, 2048) f32
    final = final.reshape(final.shape[0], final.shape[1], 1, 1)

    # return NCHW f32 like PyTorch
    node_feat = jnp.transpose(node_feat, (0, 3, 1, 2)).astype(jnp.float32)
    edge_feat = jnp.transpose(edge_feat, (0, 3, 1, 2)).astype(jnp.float32)
    return node_feat, edge_feat, final


# ---------------------------------------------------------------------------
if __name__ == "__main__":
    root = jax.random.PRNGKey(0)
    kx, kp = jax.random.split(root)
    # small input consistent with a 3-channel image backbone (32x downsampling)
    x = jax.random.normal(kx, (2, 3, 64, 64), jnp.float32)

    params = make_resnet101_params(kp)
    node_feat, edge_feat, final_feat = resnet101_backbone_forward(x, params)
    jax.block_until_ready((node_feat, edge_feat, final_feat))

    assert node_feat.shape == (2, 1024, 4, 4), node_feat.shape
    assert edge_feat.shape == (2, 2048, 2, 2), edge_feat.shape
    assert final_feat.shape == (2, 2048, 1, 1), final_feat.shape
    assert bool(jnp.all(jnp.isfinite(node_feat)))
    assert bool(jnp.all(jnp.isfinite(edge_feat)))
    assert bool(jnp.all(jnp.isfinite(final_feat)))
    print("KERNEL_OK")
</pallas_src>

<mosaic_0001>
module attributes {stable_mosaic.version = 11 : i64} {
  func.func @_mm_bias_kernel(%arg0: i32, %arg1: i32, %arg2: memref<512x147xbf16, #tpu.memory_space<vmem>>, %arg3: memref<147x64xbf16, #tpu.memory_space<vmem>>, %arg4: memref<1x64xf32, #tpu.memory_space<vmem>>, %arg5: memref<512x64xbf16, #tpu.memory_space<vmem>>) attributes {dimension_semantics = [#tpu.dimension_semantics<parallel>, #tpu.dimension_semantics<parallel>], iteration_bounds = array<i64: 4, 1>, scalar_prefetch = 0 : i64, scratch_operands = 0 : i64, tpu.core_type = #tpu.core_type<tc>, window_params = [{transform_indices = @transform_0, window_bounds = array<i64: 512, 147>}, {transform_indices = @transform_1, window_bounds = array<i64: 147, 64>}, {transform_indices = @transform_2, window_bounds = array<i64: 1, 64>}, {transform_indices = @transform_3, window_bounds = array<i64: 512, 64>}]} {
    %c0 = arith.constant 0 : index
    %c0_0 = arith.constant 0 : index
    %0 = vector.load %arg2[%c0, %c0_0] : memref<512x147xbf16, #tpu.memory_space<vmem>>, vector<512x147xbf16>
    %c0_1 = arith.constant 0 : index
    %c0_2 = arith.constant 0 : index
    %1 = vector.load %arg3[%c0_1, %c0_2] : memref<147x64xbf16, #tpu.memory_space<vmem>>, vector<147x64xbf16>
    %cst = arith.constant dense<0.000000e+00> : vector<512x64xf32>
    %2 = tpu.matmul %0, %1, %cst {dimension_numbers = #tpu.dot_dimension_numbers<[1], [0], [0], [1], [0, 0, 1, 1], [], []>} : vector<512x147xbf16>, vector<147x64xbf16>, vector<512x64xf32> -> vector<512x64xf32>
    %c0_3 = arith.constant 0 : index
    %c0_4 = arith.constant 0 : index
    %3 = vector.load %arg4[%c0_3, %c0_4] : memref<1x64xf32, #tpu.memory_space<vmem>>, vector<1x64xf32>
    %4 = vector.broadcast %3 : vector<1x64xf32> to vector<512x64xf32>
    %5 = arith.addf %2, %4 : vector<512x64xf32>
    %cst_5 = arith.constant 0.000000e+00 : f32
    %6 = vector.broadcast %cst_5 : f32 to vector<512x64xf32>
    %7 = arith.maximumf %5, %6 : vector<512x64xf32>
    %8 = arith.truncf %7 : vector<512x64xf32> to vector<512x64xbf16>
    %c0_6 = arith.constant 0 : index
    %c0_7 = arith.constant 0 : index
    %9 = vector.load %arg5[%c0_6, %c0_7] : memref<512x64xbf16, #tpu.memory_space<vmem>>, vector<512x64xbf16>
    tpu.vector_store %arg5[%c0_6, %c0_7], %8 {strides = array<i32>} : memref<512x64xbf16, #tpu.memory_space<vmem>>, vector<512x64xbf16>,
    return
  }
  func.func @transform_0(%arg0: i32, %arg1: i32) -> (i32, i32) {
    %c0_i32 = arith.constant 0 : i32
    %c0_i32_0 = arith.constant 0 : i32
    return %arg0, %c0_i32 : i32, i32
  }
  func.func @transform_1(%arg0: i32, %arg1: i32) -> (i32, i32) {
    %c0_i32 = arith.constant 0 : i32
    %c0_i32_0 = arith.constant 0 : i32
    return %c0_i32, %arg1 : i32, i32
  }
  func.func @transform_2(%arg0: i32, %arg1: i32) -> (i32, i32) {
    %c0_i32 = arith.constant 0 : i32
    %c0_i32_0 = arith.constant 0 : i32
    return %c0_i32, %arg1 : i32, i32
  }
  func.func @transform_3(%arg0: i32, %arg1: i32) -> (i32, i32) {
    %c0_i32 = arith.constant 0 : i32
    return %arg0, %arg1 : i32, i32
  }
}

module attributes {stable_mosaic.version = 11 : i64} {
  func.func @_max9_kernel(%arg0: i32, %arg1: memref<9x512x64xbf16, #tpu.memory_space<vmem>>, %arg2: memref<512x64xbf16, #tpu.memory_space<vmem>>) attributes {dimension_semantics = [#tpu.dimension_semantics<parallel>], iteration_bounds = array<i64: 1>, scalar_prefetch = 0 : i64, scratch_operands = 0 : i64, tpu.core_type = #tpu.core_type<tc>, window_params = [{transform_indices = @transform_0, window_bounds = array<i64: 9, 512, 64>}, {transform_indices = @transform_1, window_bounds = array<i64: 512, 64>}]} {
    %c0 = arith.constant 0 : index
    %c0_0 = arith.constant 0 : index
    %c0_1 = arith.constant 0 : index
    %0 = vector.load %arg1[%c0, %c0_0, %c0_1] : memref<9x512x64xbf16, #tpu.memory_space<vmem>>, vector<9x512x64xbf16>
    %cst = arith.constant dense<0xFF80> : vector<512x64xbf16>
    %1 = vector.multi_reduction <maximumf>, %0, %cst [0] : vector<9x512x64xbf16> to vector<512x64xbf16>
    %c0_2 = arith.constant 0 : index
    %c0_3 = arith.constant 0 : index
    %2 = vector.load %arg2[%c0_2, %c0_3] : memref<512x64xbf16, #tpu.memory_space<vmem>>, vector<512x64xbf16>
    tpu.vector_store %arg2[%c0_2, %c0_3], %1 {strides = array<i32>} : memref<512x64xbf16, #tpu.memory_space<vmem>>, vector<512x64xbf16>,
    return
  }
  func.func @transform_0(%arg0: i32) -> (i32, i32, i32) {
    %c0_i32 = arith.constant 0 : i32
    %c0_i32_0 = arith.constant 0 : i32
    %c0_i32_1 = arith.constant 0 : i32
    return %c0_i32, %arg0, %c0_i32_0 : i32, i32, i32
  }
  func.func @transform_1(%arg0: i32) -> (i32, i32) {
    %c0_i32 = arith.constant 0 : i32
    %c0_i32_0 = arith.constant 0 : i32
    return %arg0, %c0_i32 : i32, i32
  }
}

</mosaic_0001>

<llo_original>
// kernel: _stem_jit.2
$region0: #{_stem_jit.2}
  #allocation0 [shape = 'u32[]', space=smem, size = 0x4, offset = 0x4, fixed_abs, tag = 'smem constant byte address 0x4 - core index']
  #allocation1 [shape = 'u32[144,128]{1,0:T(1,128)}', space=vmem, size = 0x12000, scoped, tag = 'internal scratch']
  %s0 = inlined_call_operand.vmem [shape: bf16[2048,147], index: 0, kind: input, shape index: {}]
  %s1 = inlined_call_operand.vmem [shape: bf16[147,64], index: 1, kind: input, shape index: {}]
  %s2 = inlined_call_operand.vmem [shape: f32[1,64], index: 2, kind: input, shape index: {}]
  %s3 = inlined_call_operand.vmem [shape: bf16[2048,64], index: 3, kind: output, shape index: {}]
  %s4 = sld [smem:[#allocation0]]
  $region45: #{_stem_jit.2} parent=0
    _
  %s6 = ssub.s32 1, %s4
  %s7 = scalar_select 0, %s6, %s4
  loop: start=0, step=1, limit=6
  $region2: #{_stem_jit.2} parent=0 // loop_pre_header
    _
  $region3: #{_stem_jit.2} parent=0 // loop_header
    %s9 = sphi 0, %s13
    %p10 = scmp.ge.s32.totalorder %s9, 6
    %s16 = sphi 0, %s28
    %s17 = sphi 0, %s24
    %s18 = sphi 0, %s16
    %s19 = sphi 0, %s17
    %s20 = sphi 0, %s18
    %s21 = sphi 0, %s19
    %s31 = sphi 0, %s33
    %s34 = sphi 0, %s31
    %s35 = sphi 0, %s34
    %s51 = sphi 0, %s35
    %s57 = sphi 0, %s59
    %s60 = sphi 0, %s57
    %s61 = sphi 0, %s60
    %s77 = sphi 0, %s61
    %s83 = sphi 0, %s85
    %s86 = sphi 0, %s83
    %s87 = sphi 0, %s86
    %s103 = sphi 0, %s87
    %s111 = sphi 0, %s113
    %s114 = sphi 0, %s111
    %s115 = sphi 0, %s114
    %s131 = sphi 0, %s115
  $region4: #{_stem_jit.2} parent=0 // loop_header_branch
    %12 = sbr.rel (%p10) target = $region8
  $region5: #{_stem_jit.2} parent=0 // loop_body
    %s14 = ssub.s32 %s9, 1
    %s15 = ssub.s32 %s9, 2
    %s22 = sadd.s32 1, %s17
    %p23 = scmp.ge.s32.totalorder %s22, 1
    %s24 = scalar_select %p23, 0, %s22
    %s25 = sadd.s32 1, %s16
    %s26 = scalar_select %p23, %s25, %s16
    %p27 = scmp.ge.s32.totalorder %s26, 4
    %s28 = scalar_select %p27, 0, %s26
    %s29 = ssub.s32 %s16, %s28
    %p30 = scmp.eq.s32.totalorder %s29, 0
    %s32 = sadd.s32 %s31, 1
    %s33 = scalar_select %p30, %s31, %s32
    %p36 = pneg %p30
    %p37 = scmp.eq.s32.totalorder %s9, 3
    %p38 = por %p36, %p37
    %p39 = scmp.ne.s32.totalorder %s31, %s34
    %p40 = scmp.eq.s32.totalorder %s9, 0
    %p41 = por %p39, %p40
    %p42 = scmp.ne.s32.totalorder %s31, %s34
    %p43 = scmp.eq.s32.totalorder %s14, 3
    %p44 = por %p42, %p43
    %p45 = scmp.ne.s32.totalorder %s34, %s35
    %p46 = scmp.eq.s32.totalorder %s14, 0
    %p47 = por %p45, %p46
    %p48 = scmp.ne.s32.totalorder %s34, %s35
    %p49 = scmp.eq.s32.totalorder %s15, 3
    %p50 = por %p48, %p49
    %p52 = scmp.ne.s32.totalorder %s35, %s51
    %p53 = scmp.eq.s32.totalorder %s15, 0
    %p54 = por %p52, %p53
    %s55 = ssub.s32 %s17, %s24
    %p56 = scmp.eq.s32.totalorder %s55, 0
    %s58 = sadd.s32 %s57, 1
    %s59 = scalar_select %p56, %s57, %s58
    %p62 = pneg %p56
    %p63 = scmp.eq.s32.totalorder %s9, 3
    %p64 = por %p62, %p63
    %p65 = scmp.ne.s32.totalorder %s57, %s60
    %p66 = scmp.eq.s32.totalorder %s9, 0
    %p67 = por %p65, %p66
    %p68 = scmp.ne.s32.totalorder %s57, %s60
    %p69 = scmp.eq.s32.totalorder %s14, 3
    %p70 = por %p68, %p69
    %p71 = scmp.ne.s32.totalorder %s60, %s61
    %p72 = scmp.eq.s32.totalorder %s14, 0
    %p73 = por %p71, %p72
    %p74 = scmp.ne.s32.totalorder %s60, %s61
    %p75 = scmp.eq.s32.totalorder %s15, 3
    %p76 = por %p74, %p75
    %p78 = scmp.ne.s32.totalorder %s61, %s77
    %p79 = scmp.eq.s32.totalorder %s15, 0
    %p80 = por %p78, %p79
    %s81 = ssub.s32 %s17, %s24
    %p82 = scmp.eq.s32.totalorder %s81, 0
    %s84 = sadd.s32 %s83, 1
    %s85 = scalar_select %p82, %s83, %s84
    %p88 = pneg %p82
    %p89 = scmp.eq.s32.totalorder %s9, 3
    %p90 = por %p88, %p89
    %p91 = scmp.ne.s32.totalorder %s83, %s86
    %p92 = scmp.eq.s32.totalorder %s9, 0
    %p93 = por %p91, %p92
    %p94 = scmp.ne.s32.totalorder %s83, %s86
    %p95 = scmp.eq.s32.totalorder %s14, 3
    %p96 = por %p94, %p95
    %p97 = scmp.ne.s32.totalorder %s86, %s87
    %p98 = scmp.eq.s32.totalorder %s14, 0
    %p99 = por %p97, %p98
    %p100 = scmp.ne.s32.totalorder %s86, %s87
    %p101 = scmp.eq.s32.totalorder %s15, 3
    %p102 = por %p100, %p101
    %p104 = scmp.ne.s32.totalorder %s87, %s103
    %p105 = scmp.eq.s32.totalorder %s15, 0
    %p106 = por %p104, %p105
    %s107 = ssub.s32 %s16, %s28
    %s108 = ssub.s32 %s17, %s24
    %s109 = sor.u32 %s107, %s108
    %p110 = scmp.eq.s32.totalorder %s109, 0
    %s112 = sadd.s32 %s111, 1
    %s113 = scalar_select %p110, %s111, %s112
    %p116 = pneg %p110
    %p117 = scmp.eq.s32.totalorder %s9, 3
    %p118 = por %p116, %p117
    %p119 = scmp.ne.s32.totalorder %s111, %s114
    %p120 = scmp.eq.s32.totalorder %s9, 0
    %p121 = por %p119, %p120
    %p122 = scmp.ne.s32.totalorder %s111, %s114
    %p123 = scmp.eq.s32.totalorder %s14, 3
    %p124 = por %p122, %p123
    %p125 = scmp.ne.s32.totalorder %s114, %s115
    %p126 = scmp.eq.s32.totalorder %s14, 0
    %p127 = por %p125, %p126
    %p128 = scmp.ne.s32.totalorder %s114, %s115
    %p129 = scmp.eq.s32.totalorder %s15, 3
    %p130 = por %p128, %p129
    %p132 = scmp.ne.s32.totalorder %s115, %s131
    %p133 = scmp.eq.s32.totalorder %s15, 0
    %p134 = por %p132, %p133
    %p135 = scmp.le.s32.totalorder 1, %s9
    %p136 = scmp.lt.s32.totalorder %s9, 5
    %p137 = pnand %p135, %p136
    %p138 = pneg %p137
    // Predicated region
    $region9: #{_stem_jit.2} parent=5 // pred_check
      _
    $region10: #{_stem_jit.2} parent=5 // pred_check_branch
      %140 = sbr.rel (%p137) target = $region12
    $region11: #{_stem_jit.2} parent=5 // pred_region
      %s141 = ssub.s32 %s9, 1
      // Predicated region
      $region13: #{_stem_jit.2} parent=11 // pred_check
        %p142 = pneg %p73
      $region14: #{_stem_jit.2} parent=11 // pred_check_branch
        %144 = sbr.rel (%p142) target = $region16
      $region15: #{_stem_jit.2} parent=11 // pred_region
        %p145 = scmp.lt.s32.totalorder %s19, 0
        %s146 = scalar_select %p145, %s19, 0
        %s147 = smul.addr %s146, 4
        %s148 = scalar_lea.vmem %s1, %s147
      $region16: #{_stem_jit.2} parent=11 // pred_fallthru
        _
      // Predicated region
      $region17: #{_stem_jit.2} parent=11 // pred_check
        %p149 = pneg %p99
      $region18: #{_stem_jit.2} parent=11 // pred_check_branch
        %151 = sbr.rel (%p149) target = $region20
      $region19: #{_stem_jit.2} parent=11 // pred_region
        %p152 = scmp.lt.s32.totalorder %s19, 0
        %s153 = scalar_select %p152, %s19, 0
        %s154 = scalar_lea.vmem %s2, %s153
      $region20: #{_stem_jit.2} parent=11 // pred_fallthru
        _
    $region12: #{_stem_jit.2} parent=5 // pred_fallthru
      _
    %p155 = scmp.lt.s32.totalorder %s9, 4
    // Predicated region
    $region21: #{_stem_jit.2} parent=5 // pred_check
      %p156 = pneg %p155
    $region22: #{_stem_jit.2} parent=5 // pred_check_branch
      %158 = sbr.rel (%p156) target = $region24
    $region23: #{_stem_jit.2} parent=5 // pred_region
      // Predicated region
      $region25: #{_stem_jit.2} parent=23 // pred_check
        %p159 = pneg %p41
      $region26: #{_stem_jit.2} parent=23 // pred_check_branch
        %161 = sbr.rel (%p159) target = $region28
      $region27: #{_stem_jit.2} parent=23 // pred_region
        %s162 = smul.u32 64, %s16
        %p163 = scmp.lt.s32.totalorder %s162, 255
        %s164 = scalar_select %p163, %s162, 255
        %s165 = smul.addr %s164, 2
        %s166 = smul.addr %s165, 4
        %s167 = scalar_lea.vmem %s0, %s166
        %s168 = smul.u32 64, %s16
      $region28: #{_stem_jit.2} parent=23 // pred_fallthru
        _
    $region24: #{_stem_jit.2} parent=5 // pred_fallthru
      _
    %p169 = scmp.le.s32.totalorder 1, %s9
    %p170 = scmp.lt.s32.totalorder %s9, 5
    %p171 = pnand %p169, %p170
    %p172 = pneg %p171
    // Predicated region
    $region29: #{_stem_jit.2} parent=5 // pred_check
      _
    $region30: #{_stem_jit.2} parent=5 // pred_check_branch
      %174 = sbr.rel (%p171) target = $region32
    $region31: #{_stem_jit.2} parent=5 // pred_region
      %s175 = ssub.s32 %s9, 1
      %s176 = smul.u32 64, %s18
      %p177 = scmp.lt.s32.totalorder %s176, 255
      %s178 = scalar_select %p177, %s176, 255
      %s179 = smul.addr %s178, 2
      %s180 = smul.addr %s179, 4
      %s181 = scalar_lea.vmem %s0, %s180
      %p182 = pneg %p47
      %p183 = pneg %p44
      %p184 = scmp.lt.s32.totalorder %s19, 0
      %s185 = scalar_select %p184, %s19, 0
      %s186 = smul.addr %s185, 4
      %s187 = scalar_lea.vmem %s1, %s186
      %p188 = pneg %p73
      %p189 = pneg %p70
      %p190 = scmp.lt.s32.totalorder %s19, 0
      %s191 = scalar_select %p190, %s19, 0
      %s192 = scalar_lea.vmem %s2, %s191
      %p193 = pneg %p99
      %p194 = pneg %p96
      %p195 = pneg %p127
      %p196 = pneg %p124
      %s197 = smul.u32 64, %s18
      %p198 = scmp.lt.s32.totalorder %s197, 255
      %s199 = scalar_select %p198, %s197, 255
      %p200 = scmp.lt.s32.totalorder %s19, 0
      %s201 = scalar_select %p200, %s19, 0
      %s202 = sadd.s32 %s201, %s199
      %s203 = smul.addr %s202, 4
      %s204 = scalar_lea.vmem %s3, %s203
      %s205 = smul.u32 64, %s18
      %p206 = scmp.lt.s32.totalorder %s205, 255
      %s207 = scalar_select %p206, %s205, 255
      %s208 = smul.addr %s207, 2
      %s209 = smul.addr %s208, 4
      %s210 = scalar_lea.vmem %s0, %s209
      %s211 = smul.u32 64, %s18
      %p212 = scmp.lt.s32.totalorder %s19, 0
      %s213 = scalar_select %p212, %s19, 0
      %s214 = smul.addr %s213, 4
      %s215 = scalar_lea.vmem %s1, %s214
      %p216 = scmp.lt.s32.totalorder %s19, 0
      %s217 = scalar_select %p216, %s19, 0
      %s218 = scalar_lea.vmem %s2, %s217
      %s219 = smul.u32 64, %s18
      %p220 = scmp.lt.s32.totalorder %s219, 255
      %s221 = scalar_select %p220, %s219, 255
      %p222 = scmp.lt.s32.totalorder %s19, 0
      %s223 = scalar_select %p222, %s19, 0
      %s224 = sadd.s32 %s223, %s221
      %s225 = smul.addr %s224, 4
      %s226 = scalar_lea.vmem %s3, %s225
      %s227 = smul.u32 64, %s18
      %v229 = vld [vmem:[%s210] sm:$0xff]
      %v230 = vld [vmem:[%s210 + $0x8] sm:$0xff]
      %v231 = vld [vmem:[%s210 + $0x10] sm:$0xff]
      %v232 = vld [vmem:[%s210 + $0x18] sm:$0xff]
      %v233 = vld [vmem:[%s210 + $0x20] sm:$0xff]
      %v234 = vld [vmem:[%s210 + $0x28] sm:$0xff]
      %v235 = vld [vmem:[%s210 + $0x30] sm:$0xff]
      %v236 = vld [vmem:[%s210 + $0x38] sm:$0xff]
      %v237 = vld [vmem:[%s210 + $0x40] sm:$0xff]
      %v238 = vld [vmem:[%s210 + $0x48] sm:$0xff]
      %v239 = vld [vmem:[%s210 + $0x50] sm:$0xff]
      %v240 = vld [vmem:[%s210 + $0x58] sm:$0xff]
      %v241 = vld [vmem:[%s210 + $0x60] sm:$0xff]
      %v242 = vld [vmem:[%s210 + $0x68] sm:$0xff]
      %v243 = vld [vmem:[%s210 + $0x70] sm:$0xff]
      %v244 = vld [vmem:[%s210 + $0x78] sm:$0xff]
      %v245 = vld [vmem:[%s210 + $0x80] sm:$0xff]
      %v246 = vld [vmem:[%s210 + $0x88] sm:$0xff]
      %v247 = vld [vmem:[%s210 + $0x90] sm:$0xff]
      %v248 = vld [vmem:[%s210 + $0x98] sm:$0xff]
      %v249 = vld [vmem:[%s210 + $0xa0] sm:$0xff]
      %v250 = vld [vmem:[%s210 + $0xa8] sm:$0xff]
      %v251 = vld [vmem:[%s210 + $0xb0] sm:$0xff]
      %v252 = vld [vmem:[%s210 + $0xb8] sm:$0xff]
      %v253 = vld [vmem:[%s210 + $0xc0] sm:$0xff]
      %v254 = vld [vmem:[%s210 + $0xc8] sm:$0xff]
      %v255 = vld [vmem:[%s210 + $0xd0] sm:$0xff]
      %v256 = vld [vmem:[%s210 + $0xd8] sm:$0xff]
      %v257 = vld [vmem:[%s210 + $0xe0] sm:$0xff]
      %v258 = vld [vmem:[%s210 + $0xe8] sm:$0xff]
      %v259 = vld [vmem:[%s210 + $0xf0] sm:$0xff]
      %v260 = vld [vmem:[%s210 + $0xf8] sm:$0xff]
      %v261 = vld [vmem:[%s210 + $0x100] sm:$0xff]
      %v262 = vld [vmem:[%s210 + $0x108] sm:$0xff]
      %v263 = vld [vmem:[%s210 + $0x110] sm:$0xff]
      %v264 = vld [vmem:[%s210 + $0x118] sm:$0xff]
      %v265 = vld [vmem:[%s210 + $0x120] sm:$0xff]
      %v266 = vld [vmem:[%s210 + $0x128] sm:$0xff]
      %v267 = vld [vmem:[%s210 + $0x130] sm:$0xff]
      %v268 = vld [vmem:[%s210 + $0x138] sm:$0xff]
      %v269 = vld [vmem:[%s210 + $0x140] sm:$0xff]
      %v270 = vld [vmem:[%s210 + $0x148] sm:$0xff]
      %v271 = vld [vmem:[%s210 + $0x150] sm:$0xff]
      %v272 = vld [vmem:[%s210 + $0x158] sm:$0xff]
      %v273 = vld [vmem:[%s210 + $0x160] sm:$0xff]
      %v274 = vld [vmem:[%s210 + $0x168] sm:$0xff]
      %v275 = vld [vmem:[%s210 + $0x170] sm:$0xff]
      %v276 = vld [vmem:[%s210 + $0x178] sm:$0xff]
      %v277 = vld [vmem:[%s210 + $0x180] sm:$0xff]
      %v278 = vld [vmem:[%s210 + $0x188] sm:$0xff]
      %v279 = vld [vmem:[%s210 + $0x190] sm:$0xff]
      %v280 = vld [vmem:[%s210 + $0x198] sm:$0xff]
      %v281 = vld [vmem:[%s210 + $0x1a0] sm:$0xff]
      %v282 = vld [vmem:[%s210 + $0x1a8] sm:$0xff]
      %v283 = vld [vmem:[%s210 + $0x1b0] sm:$0xff]
      %v284 = vld [vmem:[%s210 + $0x1b8] sm:$0xff]
      %v285 = vld [vmem:[%s210 + $0x1c0] sm:$0xff]
      %v286 = vld [vmem:[%s210 + $0x1c8] sm:$0xff]
      %v287 = vld [vmem:[%s210 + $0x1d0] sm:$0xff]
      %v288 = vld [vmem:[%s210 + $0x1d8] sm:$0xff]
      %v289 = vld [vmem:[%s210 + $0x1e0] sm:$0xff]
      %v290 = vld [vmem:[%s210 + $0x1e8] sm:$0xff]
      %v291 = vld [vmem:[%s210 + $0x1f0] sm:$0xff]
      %v292 = vld [vmem:[%s210 + $0x1f8] sm:$0xff]
      %v293 = vld [vmem:[%s215] sm:$0xf]
      %v294 = vld [vmem:[%s215 + $0x4] sm:$0xf]
      %v295 = vld [vmem:[%s215 + $0x8] sm:$0xf]
      %v296 = vld [vmem:[%s215 + $0xc] sm:$0xf]
      %v297 = vld [vmem:[%s215 + $0x10] sm:$0xf]
      %v298 = vld [vmem:[%s215 + $0x14] sm:$0xf]
      %v299 = vld [vmem:[%s215 + $0x18] sm:$0xf]
      %v300 = vld [vmem:[%s215 + $0x1c] sm:$0xf]
      %v301 = vld [vmem:[%s215 + $0x20] sm:$0xf]
      %v302 = vld [vmem:[%s215 + $0x24] sm:$0xf]
      %v303 = vld [vmem:[%s215 + $0x28] sm:$0xf]
      %v304 = vld [vmem:[%s215 + $0x2c] sm:$0xf]
      %v305 = vld [vmem:[%s215 + $0x30] sm:$0xf]
      %v306 = vld [vmem:[%s215 + $0x34] sm:$0xf]
      %v307 = vld [vmem:[%s215 + $0x38] sm:$0xf]
      %v308 = vld [vmem:[%s215 + $0x3c] sm:$0xf]
      %v309 = vld [vmem:[%s215 + $0x40] sm:$0xf]
      %v310 = vld [vmem:[%s215 + $0x44] sm:$0xf]
      %v311 = vld [vmem:[%s215 + $0x48] sm:$0x3]
      %v312 = vld [vmem:[%s218] sm:$0x1]
      %v314 = vlaneseq
      %v315 = vshrl.u32 %v314, 7
      %v316 = vsub.s32 0, %v315
      %v317 = vrot.slane %v312, %v316
      %v383 = vunpack.c.l.b16 %v229
      %v384 = vunpack.c.h.b16 %v229
      %v385 = vunpack.c.l.b16 %v230
      %v386 = vunpack.c.h.b16 %v230
      %v387 = vunpack.c.l.b16 %v231
      %v388 = vunpack.c.h.b16 %v231
      %v389 = vunpack.c.l.b16 %v232
      %v390 = vunpack.c.h.b16 %v232
      %v391 = vunpack.c.l.b16 %v233
      %v392 = vunpack.c.h.b16 %v233
      %v393 = vunpack.c.l.b16 %v234
      %v394 = vunpack.c.h.b16 %v234
      %v395 = vunpack.c.l.b16 %v235
      %v396 = vunpack.c.h.b16 %v235
      %v397 = vunpack.c.l.b16 %v236
      %v398 = vunpack.c.h.b16 %v236
      %v399 = vunpack.c.l.b16 %v237
      %v400 = vunpack.c.h.b16 %v237
      %v401 = vunpack.c.l.b16 %v238
      %v402 = vunpack.c.h.b16 %v238
      %v403 = vunpack.c.l.b16 %v239
      %v404 = vunpack.c.h.b16 %v239
      %v405 = vunpack.c.l.b16 %v240
      %v406 = vunpack.c.h.b16 %v240
      %v407 = vunpack.c.l.b16 %v241
      %v408 = vunpack.c.h.b16 %v241
      %v409 = vunpack.c.l.b16 %v242
      %v410 = vunpack.c.h.b16 %v242
      %v411 = vunpack.c.l.b16 %v243
      %v412 = vunpack.c.h.b16 %v243
      %v413 = vunpack.c.l.b16 %v244
      %v414 = vunpack.c.h.b16 %v244
      %v415 = vunpack.c.l.b16 %v245
      %v416 = vunpack.c.h.b16 %v245
      %v417 = vunpack.c.l.b16 %v246
      %v418 = vunpack.c.h.b16 %v246
      %v419 = vunpack.c.l.b16 %v247
      %v420 = vunpack.c.h.b16 %v247
      %v421 = vunpack.c.l.b16 %v248
      %v422 = vunpack.c.h.b16 %v248
      %v423 = vunpack.c.l.b16 %v249
      %v424 = vunpack.c.h.b16 %v249
      %v425 = vunpack.c.l.b16 %v250
      %v426 = vunpack.c.h.b16 %v250
      %v427 = vunpack.c.l.b16 %v251
      %v428 = vunpack.c.h.b16 %v251
      %v429 = vunpack.c.l.b16 %v252
      %v430 = vunpack.c.h.b16 %v252
      %v431 = vunpack.c.l.b16 %v253
      %v432 = vunpack.c.h.b16 %v253
      %v433 = vunpack.c.l.b16 %v254
      %v434 = vunpack.c.h.b16 %v254
      %v435 = vunpack.c.l.b16 %v255
      %v436 = vunpack.c.h.b16 %v255
      %v437 = vunpack.c.l.b16 %v256
      %v438 = vunpack.c.h.b16 %v256
      %v439 = vunpack.c.l.b16 %v257
      %v440 = vunpack.c.h.b16 %v257
      %v441 = vunpack.c.l.b16 %v258
      %v442 = vunpack.c.h.b16 %v258
      %v443 = vunpack.c.l.b16 %v259
      %v444 = vunpack.c.h.b16 %v259
      %v445 = vunpack.c.l.b16 %v260
      %v446 = vunpack.c.h.b16 %v260
      %v447 = vunpack.c.l.b16 %v261
      %v448 = vunpack.c.h.b16 %v261
      %v449 = vunpack.c.l.b16 %v262
      %v450 = vunpack.c.h.b16 %v262
      %v451 = vunpack.c.l.b16 %v263
      %v452 = vunpack.c.h.b16 %v263
      %v453 = vunpack.c.l.b16 %v264
      %v454 = vunpack.c.h.b16 %v264
      %v455 = vunpack.c.l.b16 %v265
      %v456 = vunpack.c.h.b16 %v265
      %v457 = vunpack.c.l.b16 %v266
      %v458 = vunpack.c.h.b16 %v266
      %v459 = vunpack.c.l.b16 %v267
      %v460 = vunpack.c.h.b16 %v267
      %v461 = vunpack.c.l.b16 %v268
      %v462 = vunpack.c.h.b16 %v268
      %v463 = vunpack.c.l.b16 %v269
      %v464 = vunpack.c.h.b16 %v269
      %v465 = vunpack.c.l.b16 %v270
      %v466 = vunpack.c.h.b16 %v270
      %v467 = vunpack.c.l.b16 %v271
      %v468 = vunpack.c.h.b16 %v271
      %v469 = vunpack.c.l.b16 %v272
      %v470 = vunpack.c.h.b16 %v272
      %v471 = vunpack.c.l.b16 %v273
      %v472 = vunpack.c.h.b16 %v273
      %v473 = vunpack.c.l.b16 %v274
      %v474 = vunpack.c.h.b16 %v274
      %v475 = vunpack.c.l.b16 %v275
      %v476 = vunpack.c.h.b16 %v275
      %v477 = vunpack.c.l.b16 %v276
      %v478 = vunpack.c.h.b16 %v276
      %v479 = vunpack.c.l.b16 %v277
      %v480 = vunpack.c.h.b16 %v277
      %v481 = vunpack.c.l.b16 %v278
      %v482 = vunpack.c.h.b16 %v278
      %v483 = vunpack.c.l.b16 %v279
      %v484 = vunpack.c.h.b16 %v279
      %v485 = vunpack.c.l.b16 %v280
      %v486 = vunpack.c.h.b16 %v280
      %v487 = vunpack.c.l.b16 %v281
      %v488 = vunpack.c.h.b16 %v281
      %v489 = vunpack.c.l.b16 %v282
      %v490 = vunpack.c.h.b16 %v282
      %v491 = vunpack.c.l.b16 %v283
      %v492 = vunpack.c.h.b16 %v283
      %v493 = vunpack.c.l.b16 %v284
      %v494 = vunpack.c.h.b16 %v284
      %v495 = vunpack.c.l.b16 %v285
      %v496 = vunpack.c.h.b16 %v285
      %v497 = vunpack.c.l.b16 %v286
      %v498 = vunpack.c.h.b16 %v286
      %v499 = vunpack.c.l.b16 %v287
      %v500 = vunpack.c.h.b16 %v287
      %v501 = vunpack.c.l.b16 %v288
      %v502 = vunpack.c.h.b16 %v288
      %v503 = vunpack.c.l.b16 %v289
      %v504 = vunpack.c.h.b16 %v289
      %v505 = vunpack.c.l.b16 %v290
      %v506 = vunpack.c.h.b16 %v290
      %v507 = vunpack.c.l.b16 %v291
      %v508 = vunpack.c.h.b16 %v291
      %v509 = vunpack.c.l.b16 %v292
      %v510 = vunpack.c.h.b16 %v292
      %v511 = vpack.c.b16 %v385, %v383
      %v512 = vpack.c.b16 %v386, %v384
      %v513 = vpack.c.b16 %v389, %v387
      %v514 = vpack.c.b16 %v390, %v388
      %v515 = vpack.c.b16 %v393, %v391
      %v516 = vpack.c.b16 %v394, %v392
      %v517 = vpack.c.b16 %v397, %v395
      %v518 = vpack.c.b16 %v398, %v396
      %v519 = vpack.c.b16 %v401, %v399
      %v520 = vpack.c.b16 %v402, %v400
      %v521 = vpack.c.b16 %v405, %v403
      %v522 = vpack.c.b16 %v406, %v404
      %v523 = vpack.c.b16 %v409, %v407
      %v524 = vpack.c.b16 %v410, %v408
      %v525 = vpack.c.b16 %v413, %v411
      %v526 = vpack.c.b16 %v414, %v412
      %v527 = vpack.c.b16 %v417, %v415
      %v528 = vpack.c.b16 %v418, %v416
      %v529 = vpack.c.b16 %v421, %v419
      %v530 = vpack.c.b16 %v422, %v420
      %v531 = vpack.c.b16 %v425, %v423
      %v532 = vpack.c.b16 %v426, %v424
      %v533 = vpack.c.b16 %v429, %v427
      %v534 = vpack.c.b16 %v430, %v428
      %v535 = vpack.c.b16 %v433, %v431
      %v536 = vpack.c.b16 %v434, %v432
      %v537 = vpack.c.b16 %v437, %v435
      %v538 = vpack.c.b16 %v438, %v436
      %v539 = vpack.c.b16 %v441, %v439
      %v540 = vpack.c.b16 %v442, %v440
      %v541 = vpack.c.b16 %v445, %v443
      %v542 = vpack.c.b16 %v446, %v444
      %v543 = vpack.c.b16 %v449, %v447
      %v544 = vpack.c.b16 %v450, %v448
      %v545 = vpack.c.b16 %v453, %v451
      %v546 = vpack.c.b16 %v454, %v452
      %v547 = vpack.c.b16 %v457, %v455
      %v548 = vpack.c.b16 %v458, %v456
      %v549 = vpack.c.b16 %v461, %v459
      %v550 = vpack.c.b16 %v462, %v460
      %v551 = vpack.c.b16 %v465, %v463
      %v552 = vpack.c.b16 %v466, %v464
      %v553 = vpack.c.b16 %v469, %v467
      %v554 = vpack.c.b16 %v470, %v468
      %v555 = vpack.c.b16 %v473, %v471
      %v556 = vpack.c.b16 %v474, %v472
      %v557 = vpack.c.b16 %v477, %v475
      %v558 = vpack.c.b16 %v478, %v476
      %v559 = vpack.c.b16 %v481, %v479
      %v560 = vpack.c.b16 %v482, %v480
      %v561 = vpack.c.b16 %v485, %v483
      %v562 = vpack.c.b16 %v486, %v484
      %v563 = vpack.c.b16 %v489, %v487
      %v564 = vpack.c.b16 %v490, %v488
      %v565 = vpack.c.b16 %v493, %v491
      %v566 = vpack.c.b16 %v494, %v492
      %v567 = vpack.c.b16 %v497, %v495
      %v568 = vpack.c.b16 %v498, %v496
      %v569 = vpack.c.b16 %v501, %v499
      %v570 = vpack.c.b16 %v502, %v500
      %v571 = vpack.c.b16 %v505, %v503
      %v572 = vpack.c.b16 %v506, %v504
      %v573 = vpack.c.b16 %v509, %v507
      %v574 = vpack.c.b16 %v510, %v508
      %v626 = vunpack.c.l.b16 %v293
      %v627 = vunpack.c.l.b16 %v294
      %v628 = vunpack.c.l.b16 %v295
      %v629 = vunpack.c.l.b16 %v296
      %v630 = vunpack.c.l.b16 %v297
      %v631 = vunpack.c.l.b16 %v298
      %v632 = vunpack.c.l.b16 %v299
      %v633 = vunpack.c.l.b16 %v300
      %v634 = vunpack.c.l.b16 %v301
      %v635 = vunpack.c.l.b16 %v302
      %v636 = vunpack.c.l.b16 %v303
      %v637 = vunpack.c.l.b16 %v304
      %v638 = vunpack.c.l.b16 %v305
      %v639 = vunpack.c.l.b16 %v306
      %v640 = vunpack.c.l.b16 %v307
      %v641 = vunpack.c.l.b16 %v308
      %v642 = vunpack.c.l.b16 %v309
      %v643 = vunpack.c.l.b16 %v310
      %v644 = vunpack.c.l.b16 %v311
      %v645 = vpack.c.b16 %v627, %v626
      %v646 = vpack.c.b16 %v629, %v628
      %v647 = vpack.c.b16 %v631, %v630
      %v648 = vpack.c.b16 %v633, %v632
      %v649 = vpack.c.b16 %v635, %v634
      %v650 = vpack.c.b16 %v637, %v636
      %v651 = vpack.c.b16 %v639, %v638
      %v652 = vpack.c.b16 %v641, %v640
      %v653 = vpack.c.b16 %v643, %v642
      %v654 = vpack.c.b16 %v644, %v644
      %vm664 = vcmask 154624
      %v666 = vsel %vm664, %v512, 0
      %v669 = vsel %vm664, %v514, 0
      %v672 = vsel %vm664, %v516, 0
      %v675 = vsel %vm664, %v518, 0
      %v678 = vsel %vm664, %v520, 0
      %v681 = vsel %vm664, %v522, 0
      %v684 = vsel %vm664, %v524, 0
      %v687 = vsel %vm664, %v526, 0
      %v690 = vsel %vm664, %v528, 0
      %v693 = vsel %vm664, %v530, 0
      %v696 = vsel %vm664, %v532, 0
      %v699 = vsel %vm664, %v534, 0
      %v702 = vsel %vm664, %v536, 0
      %v705 = vsel %vm664, %v538, 0
      %v708 = vsel %vm664, %v540, 0
      %v711 = vsel %vm664, %v542, 0
      %v714 = vsel %vm664, %v544, 0
      %v717 = vsel %vm664, %v546, 0
      %v720 = vsel %vm664, %v548, 0
      %v723 = vsel %vm664, %v550, 0
      %v726 = vsel %vm664, %v552, 0
      %v729 = vsel %vm664, %v554, 0
      %v732 = vsel %vm664, %v556, 0
      %v735 = vsel %vm664, %v558, 0
      %v738 = vsel %vm664, %v560, 0
      %v741 = vsel %vm664, %v562, 0
      %v744 = vsel %vm664, %v564, 0
      %v747 = vsel %vm664, %v566, 0
      %v750 = vsel %vm664, %v568, 0
      %v753 = vsel %vm664, %v570, 0
      %v756 = vsel %vm664, %v572, 0
      %v759 = vsel %vm664, %v574, 0
      %vm761 = vcmask 1040384
      %vm762 = vcmask 1041408
      %v763 = vsel %vm761, 4294967295, 65535
      %v764 = vsel %vm762, %v763, 0
      %v766 = vand.u32 %v654, %v764
      %768 = vmatprep.subr.bf16.mxu0 0
      %769 = vmatpush1.bf16.msra.mxu0 %v645
      %770 = vmatprep.subr.bf16.mxu0 0
      %771 = vmatpush1.bf16.msra.mxu0 %v646
      %772 = vmatprep.subr.bf16.mxu0 0
      %773 = vmatpush1.bf16.msra.mxu0 %v647
      %774 = vmatprep.subr.bf16.mxu0 0
      %775 = vmatpush1.bf16.msra.mxu0 %v648
      %776 = vmatprep.subr.bf16.mxu0 0
      %777 = vmatpush1.bf16.msra.mxu0 %v649
      %778 = vmatprep.subr.bf16.mxu0 0
      %779 = vmatpush1.bf16.msra.mxu0 %v650
      %780 = vmatprep.subr.bf16.mxu0 0
      %781 = vmatpush1.bf16.msra.mxu0 %v651
      %782 = vmatprep.subr.bf16.mxu0 0
      %783 = vmatpush1.bf16.msra.mxu0 %v652
      %784 = vmatprep.subr.bf16.mxu0 0
      %785 = vmatpush1.bf16.msra.mxu0 %v653
      %786 = vmatprep.subr.bf16.mxu0 0
      %787 = vmatpush1.bf16.msra.mxu0 %v766
      %788 = vmatprep.subr.bf16.mxu0 0
      %789 = vmatpush1.bf16.msra.mxu0 0
      %790 = vmatprep.subr.bf16.mxu0 0
      %791 = vmatpush1.bf16.msra.mxu0 0
      %792 = vmatprep.subr.bf16.mxu0 0
      %793 = vmatpush1.bf16.msra.mxu0 0
      %794 = vmatprep.subr.bf16.mxu0 0
      %795 = vmatpush1.bf16.msra.mxu0 0
      %796 = vmatprep.subr.bf16.mxu0 0
      %797 = vmatpush1.bf16.msra.mxu0 0
      %798 = vmatprep.subr.bf16.mxu0 0
      %799 = vmatpush1.bf16.msra.mxu0 0
      %800 = vmatprep.mubr.bf16.mxu0 %v666
      %801 = vmatmul.mubr.bf16.gmra.mrb[0].mxu0 %v511
      %v802 = vpop.f32.mrb[0].mxu0
      %v803 = vadd.f32 %v317, %v802
      %v804 = vpop.f32.mrb[0].mxu0
      %v805 = vpop.f32.mrb[0].mxu0
      %v806 = vadd.f32 %v317, %v805
      %v807 = vpop.f32.mrb[0].mxu0
      %808 = vmatprep.mubr.bf16.mxu0 %v669
      %809 = vmatmul.mubr.bf16.gmra.mrb[0].mxu0 %v513
      %v810 = vpop.f32.mrb[0].mxu0
      %v811 = vadd.f32 %v317, %v810
      %v812 = vpop.f32.mrb[0].mxu0
      %v813 = vpop.f32.mrb[0].mxu0
      %v814 = vadd.f32 %v317, %v813
      %v815 = vpop.f32.mrb[0].mxu0
      %816 = vmatprep.mubr.bf16.mxu0 %v672
      %817 = vmatmul.mubr.bf16.gmra.mrb[0].mxu0 %v515
      %v818 = vpop.f32.mrb[0].mxu0
      %v819 = vadd.f32 %v317, %v818
      %v820 = vpop.f32.mrb[0].mxu0
      %v821 = vpop.f32.mrb[0].mxu0
      %v822 = vadd.f32 %v317, %v821
      %v823 = vpop.f32.mrb[0].mxu0
      %824 = vmatprep.mubr.bf16.mxu0 %v675
      %825 = vmatmul.mubr.bf16.gmra.mrb[0].mxu0 %v517
      %v826 = vpop.f32.mrb[0].mxu0
      %v827 = vadd.f32 %v317, %v826
      %v828 = vpop.f32.mrb[0].mxu0
      %v829 = vpop.f32.mrb[0].mxu0
      %v830 = vadd.f32 %v317, %v829
      %v831 = vpop.f32.mrb[0].mxu0
      %832 = vmatprep.mubr.bf16.mxu0 %v678
      %833 = vmatmul.mubr.bf16.gmra.mrb[0].mxu0 %v519
      %v834 = vpop.f32.mrb[0].mxu0
      %v835 = vadd.f32 %v317, %v834
      %v836 = vpop.f32.mrb[0].mxu0
      %v837 = vpop.f32.mrb[0].mxu0
      %v838 = vadd.f32 %v317, %v837
      %v839 = vpop.f32.mrb[0].mxu0
      %840 = vmatprep.mubr.bf16.mxu0 %v681
      %841 = vmatmul.mubr.bf16.gmra.mrb[0].mxu0 %v521
      %v842 = vpop.f32.mrb[0].mxu0
      %v843 = vadd.f32 %v317, %v842
      %v844 = vpop.f32.mrb[0].mxu0
      %v845 = vpop.f32.mrb[0].mxu0
      %v846 = vadd.f32 %v317, %v845
      %v847 = vpop.f32.mrb[0].mxu0
      %848 = vmatprep.mubr.bf16.mxu0 %v684
      %849 = vmatmul.mubr.bf16.gmra.mrb[0].mxu0 %v523
      %v850 = vpop.f32.mrb[0].mxu0
      %v851 = vadd.f32 %v317, %v850
      %v852 = vpop.f32.mrb[0].mxu0
      %v853 = vpop.f32.mrb[0].mxu0
      %v854 = vadd.f32 %v317, %v853
      %v855 = vpop.f32.mrb[0].mxu0
      %856 = vmatprep.mubr.bf16.mxu0 %v687
      %857 = vmatmul.mubr.bf16.gmra.mrb[0].mxu0 %v525
      %v858 = vpop.f32.mrb[0].mxu0
      %v859 = vadd.f32 %v317, %v858
      %v860 = vpop.f32.mrb[0].mxu0
      %v861 = vpop.f32.mrb[0].mxu0
      %v862 = vadd.f32 %v317, %v861
      %v863 = vpop.f32.mrb[0].mxu0
      %864 = vmatprep.mubr.bf16.mxu0 %v690
      %865 = vmatmul.mubr.bf16.gmra.mrb[0].mxu0 %v527
      %v866 = vpop.f32.mrb[0].mxu0
      %v867 = vadd.f32 %v317, %v866
      %v868 = vpop.f32.mrb[0].mxu0
      %v869 = vpop.f32.mrb[0].mxu0
      %v870 = vadd.f32 %v317, %v869
      %v871 = vpop.f32.mrb[0].mxu0
      %872 = vmatprep.mubr.bf16.mxu0 %v693
      %873 = vmatmul.mubr.bf16.gmra.mrb[0].mxu0 %v529
      %v874 = vpop.f32.mrb[0].mxu0
      %v875 = vadd.f32 %v317, %v874
      %v876 = vpop.f32.mrb[0].mxu0
      %v877 = vpop.f32.mrb[0].mxu0
      %v878 = vadd.f32 %v317, %v877
      %v879 = vpop.f32.mrb[0].mxu0
      %880 = vmatprep.mubr.bf16.mxu0 %v696
      %881 = vmatmul.mubr.bf16.gmra.mrb[0].mxu0 %v531
      %v882 = vpop.f32.mrb[0].mxu0
      %v883 = vadd.f32 %v317, %v882
      %v884 = vpop.f32.mrb[0].mxu0
      %v885 = vpop.f32.mrb[0].mxu0
      %v886 = vadd.f32 %v317, %v885
      %v887 = vpop.f32.mrb[0].mxu0
      %888 = vmatprep.mubr.bf16.mxu0 %v699
      %889 = vmatmul.mubr.bf16.gmra.mrb[0].mxu0 %v533
      %v890 = vpop.f32.mrb[0].mxu0
      %v891 = vadd.f32 %v317, %v890
      %v892 = vpop.f32.mrb[0].mxu0
      %v893 = vpop.f32.mrb[0].mxu0
      %v894 = vadd.f32 %v317, %v893
      %v895 = vpop.f32.mrb[0].mxu0
      %896 = vmatprep.mubr.bf16.mxu0 %v702
      %897 = vmatmul.mubr.bf16.gmra.mrb[0].mxu0 %v535
      %v898 = vpop.f32.mrb[0].mxu0
      %v899 = vadd.f32 %v317, %v898
      %v900 = vpop.f32.mrb[0].mxu0
      %v901 = vpop.f32.mrb[0].mxu0
      %v902 = vadd.f32 %v317, %v901
      %v903 = vpop.f32.mrb[0].mxu0
      %904 = vmatprep.mubr.bf16.mxu0 %v705
      %905 = vmatmul.mubr.bf16.gmra.mrb[0].mxu0 %v537
      %v906 = vpop.f32.mrb[0].mxu0
      %v907 = vadd.f32 %v317, %v906
      %v908 = vpop.f32.mrb[0].mxu0
      %v909 = vpop.f32.mrb[0].mxu0
      %v910 = vadd.f32 %v317, %v909
      %v911 = vpop.f32.mrb[0].mxu0
      %912 = vmatprep.mubr.bf16.mxu0 %v708
      %913 = vmatmul.mubr.bf16.gmra.mrb[0].mxu0 %v539
      %v914 = vpop.f32.mrb[0].mxu0
      %v915 = vadd.f32 %v317, %v914
      %v916 = vpop.f32.mrb[0].mxu0
      %v917 = vpop.f32.mrb[0].mxu0
      %v918 = vadd.f32 %v317, %v917
      %v919 = vpop.f32.mrb[0].mxu0
      %920 = vmatprep.mubr.bf16.mxu0 %v711
      %921 = vmatmul.mubr.bf16.gmra.mrb[0].mxu0 %v541
      %v922 = vpop.f32.mrb[0].mxu0
      %v923 = vadd.f32 %v317, %v922
      %v924 = vpop.f32.mrb[0].mxu0
      %v925 = vpop.f32.mrb[0].mxu0
      %v926 = vadd.f32 %v317, %v925
      %v927 = vpop.f32.mrb[0].mxu0
      %928 = vmatprep.mubr.bf16.mxu0 %v714
      %929 = vmatmul.mubr.bf16.gmra.mrb[0].mxu0 %v543
      %v930 = vpop.f32.mrb[0].mxu0
      %v931 = vadd.f32 %v317, %v930
      %v932 = vpop.f32.mrb[0].mxu0
      %v933 = vpop.f32.mrb[0].mxu0
      %v934 = vadd.f32 %v317, %v933
      %v935 = vpop.f32.mrb[0].mxu0
      %936 = vmatprep.mubr.bf16.mxu0 %v717
      %937 = vmatmul.mubr.bf16.gmra.mrb[0].mxu0 %v545
      %v938 = vpop.f32.mrb[0].mxu0
      %v939 = vadd.f32 %v317, %v938
      %v940 = vpop.f32.mrb[0].mxu0
      %v941 = vpop.f32.mrb[0].mxu0
      %v942 = vadd.f32 %v317, %v941
      %v943 = vpop.f32.mrb[0].mxu0
      %944 = vmatprep.mubr.bf16.mxu0 %v720
      %945 = vmatmul.mubr.bf16.gmra.mrb[0].mxu0 %v547
      %v946 = vpop.f32.mrb[0].mxu0
      %v947 = vadd.f32 %v317, %v946
      %v948 = vpop.f32.mrb[0].mxu0
      %v949 = vpop.f32.mrb[0].mxu0
      %v950 = vadd.f32 %v317, %v949
      %v951 = vpop.f32.mrb[0].mxu0
      %952 = vmatprep.mubr.bf16.mxu0 %v723
      %953 = vmatmul.mubr.bf16.gmra.mrb[0].mxu0 %v549
      %v954 = vpop.f32.mrb[0].mxu0
      %v955 = vadd.f32 %v317, %v954
      %v956 = vpop.f32.mrb[0].mxu0
      %v957 = vpop.f32.mrb[0].mxu0
      %v958 = vadd.f32 %v317, %v957
      %v959 = vpop.f32.mrb[0].mxu0
      %960 = vmatprep.mubr.bf16.mxu0 %v726
      %961 = vmatmul.mubr.bf16.gmra.mrb[0].mxu0 %v551
      %v962 = vpop.f32.mrb[0].mxu0
      %v963 = vadd.f32 %v317, %v962
      %v964 = vpop.f32.mrb[0].mxu0
      %v965 = vpop.f32.mrb[0].mxu0
      %v966 = vadd.f32 %v317, %v965
      %v967 = vpop.f32.mrb[0].mxu0
      %968 = vmatprep.mubr.bf16.mxu0 %v729
      %969 = vmatmul.mubr.bf16.gmra.mrb[0].mxu0 %v553
      %v970 = vpop.f32.mrb[0].mxu0
      %v971 = vadd.f32 %v317, %v970
      %v972 = vpop.f32.mrb[0].mxu0
      %v973 = vpop.f32.mrb[0].mxu0
      %v974 = vadd.f32 %v317, %v973
      %v975 = vpop.f32.mrb[0].mxu0
      %976 = vmatprep.mubr.bf16.mxu0 %v732
      %977 = vmatmul.mubr.bf16.gmra.mrb[0].mxu0 %v555
      %v978 = vpop.f32.mrb[0].mxu0
      %v979 = vadd.f32 %v317, %v978
      %v980 = vpop.f32.mrb[0].mxu0
      %v981 = vpop.f32.mrb[0].mxu0
      %v982 = vadd.f32 %v317, %v981
      %v983 = vpop.f32.mrb[0].mxu0
      %984 = vmatprep.mubr.bf16.mxu0 %v735
      %985 = vmatmul.mubr.bf16.gmra.mrb[0].mxu0 %v557
      %v986 = vpop.f32.mrb[0].mxu0
      %v987 = vadd.f32 %v317, %v986
      %v988 = vpop.f32.mrb[0].mxu0
      %v989 = vpop.f32.mrb[0].mxu0
      %v990 = vadd.f32 %v317, %v989
      %v991 = vpop.f32.mrb[0].mxu0
      %992 = vmatprep.mubr.bf16.mxu0 %v738
      %993 = vmatmul.mubr.bf16.gmra.mrb[0].mxu0 %v559
      %v994 = vpop.f32.mrb[0].mxu0
      %v995 = vadd.f32 %v317, %v994
      %v996 = vpop.f32.mrb[0].mxu0
      %v997 = vpop.f32.mrb[0].mxu0
      %v998 = vadd.f32 %v317, %v997
      %v999 = vpop.f32.mrb[0].mxu0
      %1000 = vmatprep.mubr.bf16.mxu0 %v741
      %1001 = vmatmul.mubr.bf16.gmra.mrb[0].mxu0 %v561
      %v1002 = vpop.f32.mrb[0].mxu0
      %v1003 = vadd.f32 %v317, %v1002
      %v1004 = vpop.f32.mrb[0].mxu0
      %v1005 = vpop.f32.mrb[0].mxu0
      %v1006 = vadd.f32 %v317, %v1005
      %v1007 = vpop.f32.mrb[0].mxu0
      %1008 = vmatprep.mubr.bf16.mxu0 %v744
      %1009 = vmatmul.mubr.bf16.gmra.mrb[0].mxu0 %v563
      %v1010 = vpop.f32.mrb[0].mxu0
      %v1011 = vadd.f32 %v317, %v1010
      %v1012 = vpop.f32.mrb[0].mxu0
      %v1013 = vpop.f32.mrb[0].mxu0
      %v1014 = vadd.f32 %v317, %v1013
      %v1015 = vpop.f32.mrb[0].mxu0
      %1016 = vmatprep.mubr.bf16.mxu0 %v747
      %1017 = vmatmul.mubr.bf16.gmra.mrb[0].mxu0 %v565
      %v1018 = vpop.f32.mrb[0].mxu0
      %v1019 = vadd.f32 %v317, %v1018
      %v1020 = vpop.f32.mrb[0].mxu0
      %v1021 = vpop.f32.mrb[0].mxu0
      %v1022 = vadd.f32 %v317, %v1021
      %v1023 = vpop.f32.mrb[0].mxu0
      %1024 = vmatprep.mubr.bf16.mxu0 %v750
      %1025 = vmatmul.mubr.bf16.gmra.mrb[0].mxu0 %v567
      %v1026 = vpop.f32.mrb[0].mxu0
      %v1027 = vadd.f32 %v317, %v1026
      %v1028 = vpop.f32.mrb[0].mxu0
      %v1029 = vpop.f32.mrb[0].mxu0
      %v1030 = vadd.f32 %v317, %v1029
      %v1031 = vpop.f32.mrb[0].mxu0
      %1032 = vmatprep.mubr.bf16.mxu0 %v753
      %1033 = vmatmul.mubr.bf16.gmra.mrb[0].mxu0 %v569
      %v1034 = vpop.f32.mrb[0].mxu0
      %v1035 = vadd.f32 %v317, %v1034
      %v1036 = vpop.f32.mrb[0].mxu0
      %v1037 = vpop.f32.mrb[0].mxu0
      %v1038 = vadd.f32 %v317, %v1037
      %v1039 = vpop.f32.mrb[0].mxu0
      %1040 = vmatprep.mubr.bf16.mxu0 %v756
      %1041 = vmatmul.mubr.bf16.gmra.mrb[0].mxu0 %v571
      %v1042 = vpop.f32.mrb[0].mxu0
      %v1043 = vadd.f32 %v317, %v1042
      %v1044 = vpop.f32.mrb[0].mxu0
      %v1045 = vpop.f32.mrb[0].mxu0
      %v1046 = vadd.f32 %v317, %v1045
      %v1047 = vpop.f32.mrb[0].mxu0
      %1048 = vmatprep.mubr.bf16.mxu0 %v759
      %1049 = vmatmul.mubr.bf16.gmra.mrb[0].mxu0 %v573
      %v1050 = vpop.f32.mrb[0].mxu0
      %v1051 = vadd.f32 %v317, %v1050
      %v1052 = vpop.f32.mrb[0].mxu0
      %v1053 = vpop.f32.mrb[0].mxu0
      %v1054 = vadd.f32 %v317, %v1053
      %v1055 = vpop.f32.mrb[0].mxu0
      %1056 = vdwg.mxu0
      %v1057 = vmax.f32 %v803, 0.0
      %v1058 = vmax.f32 %v806, 0.0
      %v1059 = vmax.f32 %v811, 0.0
      %v1060 = vmax.f32 %v814, 0.0
      %v1061 = vmax.f32 %v819, 0.0
      %v1062 = vmax.f32 %v822, 0.0
      %v1063 = vmax.f32 %v827, 0.0
      %v1064 = vmax.f32 %v830, 0.0
      %v1065 = vmax.f32 %v835, 0.0
      %v1066 = vmax.f32 %v838, 0.0
      %v1067 = vmax.f32 %v843, 0.0
      %v1068 = vmax.f32 %v846, 0.0
      %v1069 = vmax.f32 %v851, 0.0
      %v1070 = vmax.f32 %v854, 0.0
      %v1071 = vmax.f32 %v859, 0.0
      %v1072 = vmax.f32 %v862, 0.0
      %v1073 = vmax.f32 %v867, 0.0
      %v1074 = vmax.f32 %v870, 0.0
      %v1075 = vmax.f32 %v875, 0.0
      %v1076 = vmax.f32 %v878, 0.0
      %v1077 = vmax.f32 %v883, 0.0
      %v1078 = vmax.f32 %v886, 0.0
      %v1079 = vmax.f32 %v891, 0.0
      %v1080 = vmax.f32 %v894, 0.0
      %v1081 = vmax.f32 %v899, 0.0
      %v1082 = vmax.f32 %v902, 0.0
      %v1083 = vmax.f32 %v907, 0.0
      %v1084 = vmax.f32 %v910, 0.0
      %v1085 = vmax.f32 %v915, 0.0
      %v1086 = vmax.f32 %v918, 0.0
      %v1087 = vmax.f32 %v923, 0.0
      %v1088 = vmax.f32 %v926, 0.0
      %v1089 = vmax.f32 %v931, 0.0
      %v1090 = vmax.f32 %v934, 0.0
      %v1091 = vmax.f32 %v939, 0.0
      %v1092 = vmax.f32 %v942, 0.0
      %v1093 = vmax.f32 %v947, 0.0
      %v1094 = vmax.f32 %v950, 0.0
      %v1095 = vmax.f32 %v955, 0.0
      %v1096 = vmax.f32 %v958, 0.0
      %v1097 = vmax.f32 %v963, 0.0
      %v1098 = vmax.f32 %v966, 0.0
      %v1099 = vmax.f32 %v971, 0.0
      %v1100 = vmax.f32 %v974, 0.0
      %v1101 = vmax.f32 %v979, 0.0
      %v1102 = vmax.f32 %v982, 0.0
      %v1103 = vmax.f32 %v987, 0.0
      %v1104 = vmax.f32 %v990, 0.0
      %v1105 = vmax.f32 %v995, 0.0
      %v1106 = vmax.f32 %v998, 0.0
      %v1107 = vmax.f32 %v1003, 0.0
      %v1108 = vmax.f32 %v1006, 0.0
      %v1109 = vmax.f32 %v1011, 0.0
      %v1110 = vmax.f32 %v1014, 0.0
      %v1111 = vmax.f32 %v1019, 0.0
      %v1112 = vmax.f32 %v1022, 0.0
      %v1113 = vmax.f32 %v1027, 0.0
      %v1114 = vmax.f32 %v1030, 0.0
      %v1115 = vmax.f32 %v1035, 0.0
      %v1116 = vmax.f32 %v1038, 0.0
      %v1117 = vmax.f32 %v1043, 0.0
      %v1118 = vmax.f32 %v1046, 0.0
      %v1119 = vmax.f32 %v1051, 0.0
      %v1120 = vmax.f32 %v1054, 0.0
      %v1121 = vpack.c.bf16 %v1058, %v1057
      %v1122 = vpack.c.bf16 %v1060, %v1059
      %v1123 = vpack.c.bf16 %v1062, %v1061
      %v1124 = vpack.c.bf16 %v1064, %v1063
      %v1125 = vpack.c.bf16 %v1066, %v1065
      %v1126 = vpack.c.bf16 %v1068, %v1067
      %v1127 = vpack.c.bf16 %v1070, %v1069
      %v1128 = vpack.c.bf16 %v1072, %v1071
      %v1129 = vpack.c.bf16 %v1074, %v1073
      %v1130 = vpack.c.bf16 %v1076, %v1075
      %v1131 = vpack.c.bf16 %v1078, %v1077
      %v1132 = vpack.c.bf16 %v1080, %v1079
      %v1133 = vpack.c.bf16 %v1082, %v1081
      %v1134 = vpack.c.bf16 %v1084, %v1083
      %v1135 = vpack.c.bf16 %v1086, %v1085
      %v1136 = vpack.c.bf16 %v1088, %v1087
      %v1137 = vpack.c.bf16 %v1090, %v1089
      %v1138 = vpack.c.bf16 %v1092, %v1091
      %v1139 = vpack.c.bf16 %v1094, %v1093
      %v1140 = vpack.c.bf16 %v1096, %v1095
      %v1141 = vpack.c.bf16 %v1098, %v1097
      %v1142 = vpack.c.bf16 %v1100, %v1099
      %v1143 = vpack.c.bf16 %v1102, %v1101
      %v1144 = vpack.c.bf16 %v1104, %v1103
      %v1145 = vpack.c.bf16 %v1106, %v1105
      %v1146 = vpack.c.bf16 %v1108, %v1107
      %v1147 = vpack.c.bf16 %v1110, %v1109
      %v1148 = vpack.c.bf16 %v1112, %v1111
      %v1149 = vpack.c.bf16 %v1114, %v1113
      %v1150 = vpack.c.bf16 %v1116, %v1115
      %v1151 = vpack.c.bf16 %v1118, %v1117
      %v1152 = vpack.c.bf16 %v1120, %v1119
      %v1185 = vunpack.c.l.b16 %v1121
      %v1186 = vunpack.c.h.b16 %v1121
      %v1187 = vunpack.c.l.b16 %v1122
      %v1188 = vunpack.c.h.b16 %v1122
      %v1189 = vunpack.c.l.b16 %v1123
      %v1190 = vunpack.c.h.b16 %v1123
      %v1191 = vunpack.c.l.b16 %v1124
      %v1192 = vunpack.c.h.b16 %v1124
      %v1193 = vunpack.c.l.b16 %v1125
      %v1194 = vunpack.c.h.b16 %v1125
      %v1195 = vunpack.c.l.b16 %v1126
      %v1196 = vunpack.c.h.b16 %v1126
      %v1197 = vunpack.c.l.b16 %v1127
      %v1198 = vunpack.c.h.b16 %v1127
      %v1199 = vunpack.c.l.b16 %v1128
      %v1200 = vunpack.c.h.b16 %v1128
      %v1201 = vunpack.c.l.b16 %v1129
      %v1202 = vunpack.c.h.b16 %v1129
      %v1203 = vunpack.c.l.b16 %v1130
      %v1204 = vunpack.c.h.b16 %v1130
      %v1205 = vunpack.c.l.b16 %v1131
      %v1206 = vunpack.c.h.b16 %v1131
      %v1207 = vunpack.c.l.b16 %v1132
      %v1208 = vunpack.c.h.b16 %v1132
      %v1209 = vunpack.c.l.b16 %v1133
      %v1210 = vunpack.c.h.b16 %v1133
      %v1211 = vunpack.c.l.b16 %v1134
      %v1212 = vunpack.c.h.b16 %v1134
      %v1213 = vunpack.c.l.b16 %v1135
      %v1214 = vunpack.c.h.b16 %v1135
      %v1215 = vunpack.c.l.b16 %v1136
      %v1216 = vunpack.c.h.b16 %v1136
      %v1217 = vunpack.c.l.b16 %v1137
      %v1218 = vunpack.c.h.b16 %v1137
      %v1219 = vunpack.c.l.b16 %v1138
      %v1220 = vunpack.c.h.b16 %v1138
      %v1221 = vunpack.c.l.b16 %v1139
      %v1222 = vunpack.c.h.b16 %v1139
      %v1223 = vunpack.c.l.b16 %v1140
      %v1224 = vunpack.c.h.b16 %v1140
      %v1225 = vunpack.c.l.b16 %v1141
      %v1226 = vunpack.c.h.b16 %v1141
      %v1227 = vunpack.c.l.b16 %v1142
      %v1228 = vunpack.c.h.b16 %v1142
      %v1229 = vunpack.c.l.b16 %v1143
      %v1230 = vunpack.c.h.b16 %v1143
      %v1231 = vunpack.c.l.b16 %v1144
      %v1232 = vunpack.c.h.b16 %v1144
      %v1233 = vunpack.c.l.b16 %v1145
      %v1234 = vunpack.c.h.b16 %v1145
      %v1235 = vunpack.c.l.b16 %v1146
      %v1236 = vunpack.c.h.b16 %v1146
      %v1237 = vunpack.c.l.b16 %v1147
      %v1238 = vunpack.c.h.b16 %v1147
      %v1239 = vunpack.c.l.b16 %v1148
      %v1240 = vunpack.c.h.b16 %v1148
      %v1241 = vunpack.c.l.b16 %v1149
      %v1242 = vunpack.c.h.b16 %v1149
      %v1243 = vunpack.c.l.b16 %v1150
      %v1244 = vunpack.c.h.b16 %v1150
      %v1245 = vunpack.c.l.b16 %v1151
      %v1246 = vunpack.c.h.b16 %v1151
      %v1247 = vunpack.c.l.b16 %v1152
      %v1248 = vunpack.c.h.b16 %v1152
      %v1249 = vpack.c.b16 %v1185, %v1185
      %v1250 = vpack.c.b16 %v1186, %v1186
      %v1251 = vpack.c.b16 %v1187, %v1187
      %v1252 = vpack.c.b16 %v1188, %v1188
      %v1253 = vpack.c.b16 %v1189, %v1189
      %v1254 = vpack.c.b16 %v1190, %v1190
      %v1255 = vpack.c.b16 %v1191, %v1191
      %v1256 = vpack.c.b16 %v1192, %v1192
      %v1257 = vpack.c.b16 %v1193, %v1193
      %v1258 = vpack.c.b16 %v1194, %v1194
      %v1259 = vpack.c.b16 %v1195, %v1195
      %v1260 = vpack.c.b16 %v1196, %v1196
      %v1261 = vpack.c.b16 %v1197, %v1197
      %v1262 = vpack.c.b16 %v1198, %v1198
      %v1263 = vpack.c.b16 %v1199, %v1199
      %v1264 = vpack.c.b16 %v1200, %v1200
      %v1265 = vpack.c.b16 %v1201, %v1201
      %v1266 = vpack.c.b16 %v1202, %v1202
      %v1267 = vpack.c.b16 %v1203, %v1203
      %v1268 = vpack.c.b16 %v1204, %v1204
      %v1269 = vpack.c.b16 %v1205, %v1205
      %v1270 = vpack.c.b16 %v1206, %v1206
      %v1271 = vpack.c.b16 %v1207, %v1207
      %v1272 = vpack.c.b16 %v1208, %v1208
      %v1273 = vpack.c.b16 %v1209, %v1209
      %v1274 = vpack.c.b16 %v1210, %v1210
      %v1275 = vpack.c.b16 %v1211, %v1211
      %v1276 = vpack.c.b16 %v1212, %v1212
      %v1277 = vpack.c.b16 %v1213, %v1213
      %v1278 = vpack.c.b16 %v1214, %v1214
      %v1279 = vpack.c.b16 %v1215, %v1215
      %v1280 = vpack.c.b16 %v1216, %v1216
      %v1281 = vpack.c.b16 %v1217, %v1217
      %v1282 = vpack.c.b16 %v1218, %v1218
      %v1283 = vpack.c.b16 %v1219, %v1219
      %v1284 = vpack.c.b16 %v1220, %v1220
      %v1285 = vpack.c.b16 %v1221, %v1221
      %v1286 = vpack.c.b16 %v1222, %v1222
      %v1287 = vpack.c.b16 %v1223, %v1223
      %v1288 = vpack.c.b16 %v1224, %v1224
      %v1289 = vpack.c.b16 %v1225, %v1225
      %v1290 = vpack.c.b16 %v1226, %v1226
      %v1291 = vpack.c.b16 %v1227, %v1227
      %v1292 = vpack.c.b16 %v1228, %v1228
      %v1293 = vpack.c.b16 %v1229, %v1229
      %v1294 = vpack.c.b16 %v1230, %v1230
      %v1295 = vpack.c.b16 %v1231, %v1231
      %v1296 = vpack.c.b16 %v1232, %v1232
      %v1297 = vpack.c.b16 %v1233, %v1233
      %v1298 = vpack.c.b16 %v1234, %v1234
      %v1299 = vpack.c.b16 %v1235, %v1235
      %v1300 = vpack.c.b16 %v1236, %v1236
      %v1301 = vpack.c.b16 %v1237, %v1237
      %v1302 = vpack.c.b16 %v1238, %v1238
      %v1303 = vpack.c.b16 %v1239, %v1239
      %v1304 = vpack.c.b16 %v1240, %v1240
      %v1305 = vpack.c.b16 %v1241, %v1241
      %v1306 = vpack.c.b16 %v1242, %v1242
      %v1307 = vpack.c.b16 %v1243, %v1243
      %v1308 = vpack.c.b16 %v1244, %v1244
      %v1309 = vpack.c.b16 %v1245, %v1245
      %v1310 = vpack.c.b16 %v1246, %v1246
      %v1311 = vpack.c.b16 %v1247, %v1247
      %v1312 = vpack.c.b16 %v1248, %v1248
      %vm1377 = vcmask 519168
      %1378 = vst.msk [vmem:[%s226] sm:$0xf] %vm1377, %v1249
      %1379 = vst.msk [vmem:[%s226 + $0x4] sm:$0xf] %vm1377, %v1250
      %1380 = vst.msk [vmem:[%s226 + $0x8] sm:$0xf] %vm1377, %v1251
      %1381 = vst.msk [vmem:[%s226 + $0xc] sm:$0xf] %vm1377, %v1252
      %1382 = vst.msk [vmem:[%s226 + $0x10] sm:$0xf] %vm1377, %v1253
      %1383 = vst.msk [vmem:[%s226 + $0x14] sm:$0xf] %vm1377, %v1254
      %1384 = vst.msk [vmem:[%s226 + $0x18] sm:$0xf] %vm1377, %v1255
      %1385 = vst.msk [vmem:[%s226 + $0x1c] sm:$0xf] %vm1377, %v1256
      %1386 = vst.msk [vmem:[%s226 + $0x20] sm:$0xf] %vm1377, %v1257
      %1387 = vst.msk [vmem:[%s226 + $0x24] sm:$0xf] %vm1377, %v1258
      %1388 = vst.msk [vmem:[%s226 + $0x28] sm:$0xf] %vm1377, %v1259
      %1389 = vst.msk [vmem:[%s226 + $0x2c] sm:$0xf] %vm1377, %v1260
      %1390 = vst.msk [vmem:[%s226 + $0x30] sm:$0xf] %vm1377, %v1261
      %1391 = vst.msk [vmem:[%s226 + $0x34] sm:$0xf] %vm1377, %v1262
      %1392 = vst.msk [vmem:[%s226 + $0x38] sm:$0xf] %vm1377, %v1263
      %1393 = vst.msk [vmem:[%s226 + $0x3c] sm:$0xf] %vm1377, %v1264
      %1394 = vst.msk [vmem:[%s226 + $0x40] sm:$0xf] %vm1377, %v1265
      %1395 = vst.msk [vmem:[%s226 + $0x44] sm:$0xf] %vm1377, %v1266
      %1396 = vst.msk [vmem:[%s226 + $0x48] sm:$0xf] %vm1377, %v1267
      %1397 = vst.msk [vmem:[%s226 + $0x4c] sm:$0xf] %vm1377, %v1268
      %1398 = vst.msk [vmem:[%s226 + $0x50] sm:$0xf] %vm1377, %v1269
      %1399 = vst.msk [vmem:[%s226 + $0x54] sm:$0xf] %vm1377, %v1270
      %1400 = vst.msk [vmem:[%s226 + $0x58] sm:$0xf] %vm1377, %v1271
      %1401 = vst.msk [vmem:[%s226 + $0x5c] sm:$0xf] %vm1377, %v1272
      %1402 = vst.msk [vmem:[%s226 + $0x60] sm:$0xf] %vm1377, %v1273
      %1403 = vst.msk [vmem:[%s226 + $0x64] sm:$0xf] %vm1377, %v1274
      %1404 = vst.msk [vmem:[%s226 + $0x68] sm:$0xf] %vm1377, %v1275
      %1405 = vst.msk [vmem:[%s226 + $0x6c] sm:$0xf] %vm1377, %v1276
      %1406 = vst.msk [vmem:[%s226 + $0x70] sm:$0xf] %vm1377, %v1277
      %1407 = vst.msk [vmem:[%s226 + $0x74] sm:$0xf] %vm1377, %v1278
      %1408 = vst.msk [vmem:[%s226 + $0x78] sm:$0xf] %vm1377, %v1279
      %1409 = vst.msk [vmem:[%s226 + $0x7c] sm:$0xf] %vm1377, %v1280
      %1410 = vst.msk [vmem:[%s226 + $0x80] sm:$0xf] %vm1377, %v1281
      %1411 = vst.msk [vmem:[%s226 + $0x84] sm:$0xf] %vm1377, %v1282
      %1412 = vst.msk [vmem:[%s226 + $0x88] sm:$0xf] %vm1377, %v1283
      %1413 = vst.msk [vmem:[%s226 + $0x8c] sm:$0xf] %vm1377, %v1284
      %1414 = vst.msk [vmem:[%s226 + $0x90] sm:$0xf] %vm1377, %v1285
      %1415 = vst.msk [vmem:[%s226 + $0x94] sm:$0xf] %vm1377, %v1286
      %1416 = vst.msk [vmem:[%s226 + $0x98] sm:$0xf] %vm1377, %v1287
      %1417 = vst.msk [vmem:[%s226 + $0x9c] sm:$0xf] %vm1377, %v1288
      %1418 = vst.msk [vmem:[%s226 + $0xa0] sm:$0xf] %vm1377, %v1289
      %1419 = vst.msk [vmem:[%s226 + $0xa4] sm:$0xf] %vm1377, %v1290
      %1420 = vst.msk [vmem:[%s226 + $0xa8] sm:$0xf] %vm1377, %v1291
      %1421 = vst.msk [vmem:[%s226 + $0xac] sm:$0xf] %vm1377, %v1292
      %1422 = vst.msk [vmem:[%s226 + $0xb0] sm:$0xf] %vm1377, %v1293
      %1423 = vst.msk [vmem:[%s226 + $0xb4] sm:$0xf] %vm1377, %v1294
      %1424 = vst.msk [vmem:[%s226 + $0xb8] sm:$0xf] %vm1377, %v1295
      %1425 = vst.msk [vmem:[%s226 + $0xbc] sm:$0xf] %vm1377, %v1296
      %1426 = vst.msk [vmem:[%s226 + $0xc0] sm:$0xf] %vm1377, %v1297
      %1427 = vst.msk [vmem:[%s226 + $0xc4] sm:$0xf] %vm1377, %v1298
      %1428 = vst.msk [vmem:[%s226 + $0xc8] sm:$0xf] %vm1377, %v1299
      %1429 = vst.msk [vmem:[%s226 + $0xcc] sm:$0xf] %vm1377, %v1300
      %1430 = vst.msk [vmem:[%s226 + $0xd0] sm:$0xf] %vm1377, %v1301
      %1431 = vst.msk [vmem:[%s226 + $0xd4] sm:$0xf] %vm1377, %v1302
      %1432 = vst.msk [vmem:[%s226 + $0xd8] sm:$0xf] %vm1377, %v1303
      %1433 = vst.msk [vmem:[%s226 + $0xdc] sm:$0xf] %vm1377, %v1304
      %1434 = vst.msk [vmem:[%s226 + $0xe0] sm:$0xf] %vm1377, %v1305
      %1435 = vst.msk [vmem:[%s226 + $0xe4] sm:$0xf] %vm1377, %v1306
      %1436 = vst.msk [vmem:[%s226 + $0xe8] sm:$0xf] %vm1377, %v1307
      %1437 = vst.msk [vmem:[%s226 + $0xec] sm:$0xf] %vm1377, %v1308
      %1438 = vst.msk [vmem:[%s226 + $0xf0] sm:$0xf] %vm1377, %v1309
      %1439 = vst.msk [vmem:[%s226 + $0xf4] sm:$0xf] %vm1377, %v1310
      %1440 = vst.msk [vmem:[%s226 + $0xf8] sm:$0xf] %vm1377, %v1311
      %1441 = vst.msk [vmem:[%s226 + $0xfc] sm:$0xf] %vm1377, %v1312
      %s1442 = smul.u32 64, %s18
      %p1443 = scmp.lt.s32.totalorder %s1442, 255
      %s1444 = scalar_select %p1443, %s1442, 255
      %p1445 = scmp.lt.s32.totalorder %s19, 0
      %s1446 = scalar_select %p1445, %s19, 0
      %s1447 = sadd.s32 %s1446, %s1444
      %s1448 = smul.addr %s1447, 4
      %s1449 = scalar_lea.vmem %s3, %s1448
      // Predicated region
      $region33: #{_stem_jit.2} parent=31 // pred_check
        %p1450 = pneg %p124
      $region34: #{_stem_jit.2} parent=31 // pred_check_branch
        %1452 = sbr.rel (%p1450) target = $region36
      $region35: #{_stem_jit.2} parent=31 // pred_region
        %s1453 = smul.u32 64, %s18
      $region36: #{_stem_jit.2} parent=31 // pred_fallthru
        _
    $region32: #{_stem_jit.2} parent=5 // pred_fallthru
      _
    %p1454 = scmp.le.s32.totalorder 2, %s9
    // Predicated region
    $region37: #{_stem_jit.2} parent=5 // pred_check
      %p1455 = pneg %p1454
    $region38: #{_stem_jit.2} parent=5 // pred_check_branch
      %1457 = sbr.rel (%p1455) target = $region40
    $region39: #{_stem_jit.2} parent=5 // pred_region
      %s1458 = ssub.s32 %s9, 2
      // Predicated region
      $region41: #{_stem_jit.2} parent=39 // pred_check
        %p1459 = pneg %p130
      $region42: #{_stem_jit.2} parent=39 // pred_check_branch
        %1461 = sbr.rel (%p1459) target = $region44
      $region43: #{_stem_jit.2} parent=39 // pred_region
        %s1462 = smul.u32 64, %s20
        %p1463 = scmp.lt.s32.totalorder %s1462, 255
        %s1464 = scalar_select %p1463, %s1462, 255
        %p1465 = scmp.lt.s32.totalorder %s21, 0
        %s1466 = scalar_select %p1465, %s21, 0
        %s1467 = sadd.s32 %s1466, %s1464
        %s1468 = smul.addr %s1467, 4
        %s1469 = scalar_lea.vmem %s3, %s1468
      $region44: #{_stem_jit.2} parent=39 // pred_fallthru
        _
    $region40: #{_stem_jit.2} parent=5 // pred_fallthru
      _
  $region6: #{_stem_jit.2} parent=0 // loop_footer
    %s13 = sadd.s32 1, %s9
  $region7: #{_stem_jit.2} parent=0 // loop_footer_branch
    %8 = sbr.rel target = $region3
  $region8: #{_stem_jit.2} parent=0 // loop_exit
    _

// kernel: _stem_jit.3
$region0: #{_stem_jit.3}
  #allocation0 [shape = 'u32[]', space=smem, size = 0x4, offset = 0x4, fixed_abs, tag = 'smem constant byte address 0x4 - core index']
  #allocation1 [shape = 'u32[144,128]{1,0:T(1,128)}', space=vmem, size = 0x12000, scoped, tag = 'internal scratch']
  %s0 = inlined_call_operand.vmem [shape: bf16[9,512,64], index: 0, kind: input, shape index: {}]
  %s1 = inlined_call_operand.hbm [shape: bf16[512,64], index: 1, kind: output, shape index: {}]
  %s2 = sld [smem:[#allocation0]]
  $region14: #{_stem_jit.3} parent=0
    _
  %s4 = ssub.s32 1, %s2
  %s5 = scalar_select 0, %s4, %s2
  $region1: #{_stem_jit.3} parent=0
    #allocation2 [shape = 'u8[131072]{0}', space=vmem, size = 0x20000, scoped, tag = 'output window, operand 0, single buffered']
    #allocation3 [shape = 's32[1]{0}', space=sflag, size = 0x4, scoped, tag = 'scoped memory for _stem_jit.3']
    %6 = vsyncpa [#allocation3], 0
    // Predicated region
    $region2: #{_stem_jit.3} parent=1 // pred_check
      _
    $region3: #{_stem_jit.3} parent=1 // pred_check_branch
      %8 = sbr.rel (0) target = $region5
    $region4: #{_stem_jit.3} parent=1 // pred_region
      _
    $region5: #{_stem_jit.3} parent=1 // pred_fallthru
      _
    %v10 = vld [vmem:[%s0] sm:$0xf]
    %v11 = vld [vmem:[%s0 + $0x4] sm:$0xf]
    %v12 = vld [vmem:[%s0 + $0x8] sm:$0xf]
    %v13 = vld [vmem:[%s0 + $0xc] sm:$0xf]
    %v14 = vld [vmem:[%s0 + $0x10] sm:$0xf]
    %v15 = vld [vmem:[%s0 + $0x14] sm:$0xf]
    %v16 = vld [vmem:[%s0 + $0x18] sm:$0xf]
    %v17 = vld [vmem:[%s0 + $0x1c] sm:$0xf]
    %v18 = vld [vmem:[%s0 + $0x20] sm:$0xf]
    %v19 = vld [vmem:[%s0 + $0x24] sm:$0xf]
    %v20 = vld [vmem:[%s0 + $0x28] sm:$0xf]
    %v21 = vld [vmem:[%s0 + $0x2c] sm:$0xf]
    %v22 = vld [vmem:[%s0 + $0x30] sm:$0xf]
    %v23 = vld [vmem:[%s0 + $0x34] sm:$0xf]
    %v24 = vld [vmem:[%s0 + $0x38] sm:$0xf]
    %v25 = vld [vmem:[%s0 + $0x3c] sm:$0xf]
    %v26 = vld [vmem:[%s0 + $0x40] sm:$0xf]
    %v27 = vld [vmem:[%s0 + $0x44] sm:$0xf]
    %v28 = vld [vmem:[%s0 + $0x48] sm:$0xf]
    %v29 = vld [vmem:[%s0 + $0x4c] sm:$0xf]
    %v30 = vld [vmem:[%s0 + $0x50] sm:$0xf]
    %v31 = vld [vmem:[%s0 + $0x54] sm:$0xf]
    %v32 = vld [vmem:[%s0 + $0x58] sm:$0xf]
    %v33 = vld [vmem:[%s0 + $0x5c] sm:$0xf]
    %v34 = vld [vmem:[%s0 + $0x60] sm:$0xf]
    %v35 = vld [vmem:[%s0 + $0x64] sm:$0xf]
    %v36 = vld [vmem:[%s0 + $0x68] sm:$0xf]
    %v37 = vld [vmem:[%s0 + $0x6c] sm:$0xf]
    %v38 = vld [vmem:[%s0 + $0x70] sm:$0xf]
    %v39 = vld [vmem:[%s0 + $0x74] sm:$0xf]
    %v40 = vld [vmem:[%s0 + $0x78] sm:$0xf]
    %v41 = vld [vmem:[%s0 + $0x7c] sm:$0xf]
    %v42 = vld [vmem:[%s0 + $0x80] sm:$0xf]
    %v43 = vld [vmem:[%s0 + $0x84] sm:$0xf]
    %v44 = vld [vmem:[%s0 + $0x88] sm:$0xf]
    %v45 = vld [vmem:[%s0 + $0x8c] sm:$0xf]
    %v46 = vld [vmem:[%s0 + $0x90] sm:$0xf]
    %v47 = vld [vmem:[%s0 + $0x94] sm:$0xf]
    %v48 = vld [vmem:[%s0 + $0x98] sm:$0xf]
    %v49 = vld [vmem:[%s0 + $0x9c] sm:$0xf]
    %v50 = vld [vmem:[%s0 + $0xa0] sm:$0xf]
    %v51 = vld [vmem:[%s0 + $0xa4] sm:$0xf]
    %v52 = vld [vmem:[%s0 + $0xa8] sm:$0xf]
    %v53 = vld [vmem:[%s0 + $0xac] sm:$0xf]
    %v54 = vld [vmem:[%s0 + $0xb0] sm:$0xf]
    %v55 = vld [vmem:[%s0 + $0xb4] sm:$0xf]
    %v56 = vld [vmem:[%s0 + $0xb8] sm:$0xf]
    %v57 = vld [vmem:[%s0 + $0xbc] sm:$0xf]
    %v58 = vld [vmem:[%s0 + $0xc0] sm:$0xf]
    %v59 = vld [vmem:[%s0 + $0xc4] sm:$0xf]
    %v60 = vld [vmem:[%s0 + $0xc8] sm:$0xf]
    %v61 = vld [vmem:[%s0 + $0xcc] sm:$0xf]
    %v62 = vld [vmem:[%s0 + $0xd0] sm:$0xf]
    %v63 = vld [vmem:[%s0 + $0xd4] sm:$0xf]
    %v64 = vld [vmem:[%s0 + $0xd8] sm:$0xf]
    %v65 = vld [vmem:[%s0 + $0xdc] sm:$0xf]
    %v66 = vld [vmem:[%s0 + $0xe0] sm:$0xf]
    %v67 = vld [vmem:[%s0 + $0xe4] sm:$0xf]
    %v68 = vld [vmem:[%s0 + $0xe8] sm:$0xf]
    %v69 = vld [vmem:[%s0 + $0xec] sm:$0xf]
    %v70 = vld [vmem:[%s0 + $0xf0] sm:$0xf]
    %v71 = vld [vmem:[%s0 + $0xf4] sm:$0xf]
    %v72 = vld [vmem:[%s0 + $0xf8] sm:$0xf]
    %v73 = vld [vmem:[%s0 + $0xfc] sm:$0xf]
    %v74 = vld [vmem:[%s0 + $0x100] sm:$0xf]
    %v75 = vld [vmem:[%s0 + $0x104] sm:$0xf]
    %v76 = vld [vmem:[%s0 + $0x108] sm:$0xf]
    %v77 = vld [vmem:[%s0 + $0x10c] sm:$0xf]
    %v78 = vld [vmem:[%s0 + $0x110] sm:$0xf]
    %v79 = vld [vmem:[%s0 + $0x114] sm:$0xf]
    %v80 = vld [vmem:[%s0 + $0x118] sm:$0xf]
    %v81 = vld [vmem:[%s0 + $0x11c] sm:$0xf]
    %v82 = vld [vmem:[%s0 + $0x120] sm:$0xf]
    %v83 = vld [vmem:[%s0 + $0x124] sm:$0xf]
    %v84 = vld [vmem:[%s0 + $0x128] sm:$0xf]
    %v85 = vld [vmem:[%s0 + $0x12c] sm:$0xf]
    %v86 = vld [vmem:[%s0 + $0x130] sm:$0xf]
    %v87 = vld [vmem:[%s0 + $0x134] sm:$0xf]
    %v88 = vld [vmem:[%s0 + $0x138] sm:$0xf]
    %v89 = vld [vmem:[%s0 + $0x13c] sm:$0xf]
    %v90 = vld [vmem:[%s0 + $0x140] sm:$0xf]
    %v91 = vld [vmem:[%s0 + $0x144] sm:$0xf]
    %v92 = vld [vmem:[%s0 + $0x148] sm:$0xf]
    %v93 = vld [vmem:[%s0 + $0x14c] sm:$0xf]
    %v94 = vld [vmem:[%s0 + $0x150] sm:$0xf]
    %v95 = vld [vmem:[%s0 + $0x154] sm:$0xf]
    %v96 = vld [vmem:[%s0 + $0x158] sm:$0xf]
    %v97 = vld [vmem:[%s0 + $0x15c] sm:$0xf]
    %v98 = vld [vmem:[%s0 + $0x160] sm:$0xf]
    %v99 = vld [vmem:[%s0 + $0x164] sm:$0xf]
    %v100 = vld [vmem:[%s0 + $0x168] sm:$0xf]
    %v101 = vld [vmem:[%s0 + $0x16c] sm:$0xf]
    %v102 = vld [vmem:[%s0 + $0x170] sm:$0xf]
    %v103 = vld [vmem:[%s0 + $0x174] sm:$0xf]
    %v104 = vld [vmem:[%s0 + $0x178] sm:$0xf]
    %v105 = vld [vmem:[%s0 + $0x17c] sm:$0xf]
    %v106 = vld [vmem:[%s0 + $0x180] sm:$0xf]
    %v107 = vld [vmem:[%s0 + $0x184] sm:$0xf]
    %v108 = vld [vmem:[%s0 + $0x188] sm:$0xf]
    %v109 = vld [vmem:[%s0 + $0x18c] sm:$0xf]
    %v110 = vld [vmem:[%s0 + $0x190] sm:$0xf]
    %v111 = vld [vmem:[%s0 + $0x194] sm:$0xf]
    %v112 = vld [vmem:[%s0 + $0x198] sm:$0xf]
    %v113 = vld [vmem:[%s0 + $0x19c] sm:$0xf]
    %v114 = vld [vmem:[%s0 + $0x1a0] sm:$0xf]
    %v115 = vld [vmem:[%s0 + $0x1a4] sm:$0xf]
    %v116 = vld [vmem:[%s0 + $0x1a8] sm:$0xf]
    %v117 = vld [vmem:[%s0 + $0x1ac] sm:$0xf]
    %v118 = vld [vmem:[%s0 + $0x1b0] sm:$0xf]
    %v119 = vld [vmem:[%s0 + $0x1b4] sm:$0xf]
    %v120 = vld [vmem:[%s0 + $0x1b8] sm:$0xf]
    %v121 = vld [vmem:[%s0 + $0x1bc] sm:$0xf]
    %v122 = vld [vmem:[%s0 + $0x1c0] sm:$0xf]
    %v123 = vld [vmem:[%s0 + $0x1c4] sm:$0xf]
    %v124 = vld [vmem:[%s0 + $0x1c8] sm:$0xf]
    %v125 = vld [vmem:[%s0 + $0x1cc] sm:$0xf]
    %v126 = vld [vmem:[%s0 + $0x1d0] sm:$0xf]
    %v127 = vld [vmem:[%s0 + $0x1d4] sm:$0xf]
    %v128 = vld [vmem:[%s0 + $0x1d8] sm:$0xf]
    %v129 = vld [vmem:[%s0 + $0x1dc] sm:$0xf]
    %v130 = vld [vmem:[%s0 + $0x1e0] sm:$0xf]
    %v131 = vld [vmem:[%s0 + $0x1e4] sm:$0xf]
    %v132 = vld [vmem:[%s0 + $0x1e8] sm:$0xf]
    %v133 = vld [vmem:[%s0 + $0x1ec] sm:$0xf]
    %v134 = vld [vmem:[%s0 + $0x1f0] sm:$0xf]
    %v135 = vld [vmem:[%s0 + $0x1f4] sm:$0xf]
    %v136 = vld [vmem:[%s0 + $0x1f8] sm:$0xf]
    %v137 = vld [vmem:[%s0 + $0x1fc] sm:$0xf]
    %v138 = vld [vmem:[%s0 + $0x200] sm:$0xf]
    %v139 = vld [vmem:[%s0 + $0x204] sm:$0xf]
    %v140 = vld [vmem:[%s0 + $0x208] sm:$0xf]
    %v141 = vld [vmem:[%s0 + $0x20c] sm:$0xf]
    %v142 = vld [vmem:[%s0 + $0x210] sm:$0xf]
    %v143 = vld [vmem:[%s0 + $0x214] sm:$0xf]
    %v144 = vld [vmem:[%s0 + $0x218] sm:$0xf]
    %v145 = vld [vmem:[%s0 + $0x21c] sm:$0xf]
    %v146 = vld [vmem:[%s0 + $0x220] sm:$0xf]
    %v147 = vld [vmem:[%s0 + $0x224] sm:$0xf]
    %v148 = vld [vmem:[%s0 + $0x228] sm:$0xf]
    %v149 = vld [vmem:[%s0 + $0x22c] sm:$0xf]
    %v150 = vld [vmem:[%s0 + $0x230] sm:$0xf]
    %v151 = vld [vmem:[%s0 + $0x234] sm:$0xf]
    %v152 = vld [vmem:[%s0 + $0x238] sm:$0xf]
    %v153 = vld [vmem:[%s0 + $0x23c] sm:$0xf]
    %v154 = vld [vmem:[%s0 + $0x240] sm:$0xf]
    %v155 = vld [vmem:[%s0 + $0x244] sm:$0xf]
    %v156 = vld [vmem:[%s0 + $0x248] sm:$0xf]
    %v157 = vld [vmem:[%s0 + $0x24c] sm:$0xf]
    %v158 = vld [vmem:[%s0 + $0x250] sm:$0xf]
    %v159 = vld [vmem:[%s0 + $0x254] sm:$0xf]
    %v160 = vld [vmem:[%s0 + $0x258] sm:$0xf]
    %v161 = vld [vmem:[%s0 + $0x25c] sm:$0xf]
    %v162 = vld [vmem:[%s0 + $0x260] sm:$0xf]
    %v163 = vld [vmem:[%s0 + $0x264] sm:$0xf]
    %v164 = vld [vmem:[%s0 + $0x268] sm:$0xf]
    %v165 = vld [vmem:[%s0 + $0x26c] sm:$0xf]
    %v166 = vld [vmem:[%s0 + $0x270] sm:$0xf]
    %v167 = vld [vmem:[%s0 + $0x274] sm:$0xf]
    %v168 = vld [vmem:[%s0 + $0x278] sm:$0xf]
    %v169 = vld [vmem:[%s0 + $0x27c] sm:$0xf]
    %v170 = vld [vmem:[%s0 + $0x280] sm:$0xf]
    %v171 = vld [vmem:[%s0 + $0x284] sm:$0xf]
    %v172 = vld [vmem:[%s0 + $0x288] sm:$0xf]
    %v173 = vld [vmem:[%s0 + $0x28c] sm:$0xf]
    %v174 = vld [vmem:[%s0 + $0x290] sm:$0xf]
    %v175 = vld [vmem:[%s0 + $0x294] sm:$0xf]
    %v176 = vld [vmem:[%s0 + $0x298] sm:$0xf]
    %v177 = vld [vmem:[%s0 + $0x29c] sm:$0xf]
    %v178 = vld [vmem:[%s0 + $0x2a0] sm:$0xf]
    %v179 = vld [vmem:[%s0 + $0x2a4] sm:$0xf]
    %v180 = vld [vmem:[%s0 + $0x2a8] sm:$0xf]
    %v181 = vld [vmem:[%s0 + $0x2ac] sm:$0xf]
    %v182 = vld [vmem:[%s0 + $0x2b0] sm:$0xf]
    %v183 = vld [vmem:[%s0 + $0x2b4] sm:$0xf]
    %v184 = vld [vmem:[%s0 + $0x2b8] sm:$0xf]
    %v185 = vld [vmem:[%s0 + $0x2bc] sm:$0xf]
    %v186 = vld [vmem:[%s0 + $0x2c0] sm:$0xf]
    %v187 = vld [vmem:[%s0 + $0x2c4] sm:$0xf]
    %v188 = vld [vmem:[%s0 + $0x2c8] sm:$0xf]
    %v189 = vld [vmem:[%s0 + $0x2cc] sm:$0xf]
    %v190 = vld [vmem:[%s0 + $0x2d0] sm:$0xf]
    %v191 = vld [vmem:[%s0 + $0x2d4] sm:$0xf]
    %v192 = vld [vmem:[%s0 + $0x2d8] sm:$0xf]
    %v193 = vld [vmem:[%s0 + $0x2dc] sm:$0xf]
    %v194 = vld [vmem:[%s0 + $0x2e0] sm:$0xf]
    %v195 = vld [vmem:[%s0 + $0x2e4] sm:$0xf]
    %v196 = vld [vmem:[%s0 + $0x2e8] sm:$0xf]
    %v197 = vld [vmem:[%s0 + $0x2ec] sm:$0xf]
    %v198 = vld [vmem:[%s0 + $0x2f0] sm:$0xf]
    %v199 = vld [vmem:[%s0 + $0x2f4] sm:$0xf]
    %v200 = vld [vmem:[%s0 + $0x2f8] sm:$0xf]
    %v201 = vld [vmem:[%s0 + $0x2fc] sm:$0xf]
    %v202 = vld [vmem:[%s0 + $0x300] sm:$0xf]
    %v203 = vld [vmem:[%s0 + $0x304] sm:$0xf]
    %v204 = vld [vmem:[%s0 + $0x308] sm:$0xf]
    %v205 = vld [vmem:[%s0 + $0x30c] sm:$0xf]
    %v206 = vld [vmem:[%s0 + $0x310] sm:$0xf]
    %v207 = vld [vmem:[%s0 + $0x314] sm:$0xf]
    %v208 = vld [vmem:[%s0 + $0x318] sm:$0xf]
    %v209 = vld [vmem:[%s0 + $0x31c] sm:$0xf]
    %v210 = vld [vmem:[%s0 + $0x320] sm:$0xf]
    %v211 = vld [vmem:[%s0 + $0x324] sm:$0xf]
    %v212 = vld [vmem:[%s0 + $0x328] sm:$0xf]
    %v213 = vld [vmem:[%s0 + $0x32c] sm:$0xf]
    %v214 = vld [vmem:[%s0 + $0x330] sm:$0xf]
    %v215 = vld [vmem:[%s0 + $0x334] sm:$0xf]
    %v216 = vld [vmem:[%s0 + $0x338] sm:$0xf]
    %v217 = vld [vmem:[%s0 + $0x33c] sm:$0xf]
    %v218 = vld [vmem:[%s0 + $0x340] sm:$0xf]
    %v219 = vld [vmem:[%s0 + $0x344] sm:$0xf]
    %v220 = vld [vmem:[%s0 + $0x348] sm:$0xf]
    %v221 = vld [vmem:[%s0 + $0x34c] sm:$0xf]
    %v222 = vld [vmem:[%s0 + $0x350] sm:$0xf]
    %v223 = vld [vmem:[%s0 + $0x354] sm:$0xf]
    %v224 = vld [vmem:[%s0 + $0x358] sm:$0xf]
    %v225 = vld [vmem:[%s0 + $0x35c] sm:$0xf]
    %v226 = vld [vmem:[%s0 + $0x360] sm:$0xf]
    %v227 = vld [vmem:[%s0 + $0x364] sm:$0xf]
    %v228 = vld [vmem:[%s0 + $0x368] sm:$0xf]
    %v229 = vld [vmem:[%s0 + $0x36c] sm:$0xf]
    %v230 = vld [vmem:[%s0 + $0x370] sm:$0xf]
    %v231 = vld [vmem:[%s0 + $0x374] sm:$0xf]
    %v232 = vld [vmem:[%s0 + $0x378] sm:$0xf]
    %v233 = vld [vmem:[%s0 + $0x37c] sm:$0xf]
    %v234 = vld [vmem:[%s0 + $0x380] sm:$0xf]
    %v235 = vld [vmem:[%s0 + $0x384] sm:$0xf]
    %v236 = vld [vmem:[%s0 + $0x388] sm:$0xf]
    %v237 = vld [vmem:[%s0 + $0x38c] sm:$0xf]
    %v238 = vld [vmem:[%s0 + $0x390] sm:$0xf]
    %v239 = vld [vmem:[%s0 + $0x394] sm:$0xf]
    %v240 = vld [vmem:[%s0 + $0x398] sm:$0xf]
    %v241 = vld [vmem:[%s0 + $0x39c] sm:$0xf]
    %v242 = vld [vmem:[%s0 + $0x3a0] sm:$0xf]
    %v243 = vld [vmem:[%s0 + $0x3a4] sm:$0xf]
    %v244 = vld [vmem:[%s0 + $0x3a8] sm:$0xf]
    %v245 = vld [vmem:[%s0 + $0x3ac] sm:$0xf]
    %v246 = vld [vmem:[%s0 + $0x3b0] sm:$0xf]
    %v247 = vld [vmem:[%s0 + $0x3b4] sm:$0xf]
    %v248 = vld [vmem:[%s0 + $0x3b8] sm:$0xf]
    %v249 = vld [vmem:[%s0 + $0x3bc] sm:$0xf]
    %v250 = vld [vmem:[%s0 + $0x3c0] sm:$0xf]
    %v251 = vld [vmem:[%s0 + $0x3c4] sm:$0xf]
    %v252 = vld [vmem:[%s0 + $0x3c8] sm:$0xf]
    %v253 = vld [vmem:[%s0 + $0x3cc] sm:$0xf]
    %v254 = vld [vmem:[%s0 + $0x3d0] sm:$0xf]
    %v255 = vld [vmem:[%s0 + $0x3d4] sm:$0xf]
    %v256 = vld [vmem:[%s0 + $0x3d8] sm:$0xf]
    %v257 = vld [vmem:[%s0 + $0x3dc] sm:$0xf]
    %v258 = vld [vmem:[%s0 + $0x3e0] sm:$0xf]
    %v259 = vld [vmem:[%s0 + $0x3e4] sm:$0xf]
    %v260 = vld [vmem:[%s0 + $0x3e8] sm:$0xf]
    %v261 = vld [vmem:[%s0 + $0x3ec] sm:$0xf]
    %v262 = vld [vmem:[%s0 + $0x3f0] sm:$0xf]
    %v263 = vld [vmem:[%s0 + $0x3f4] sm:$0xf]
    %v264 = vld [vmem:[%s0 + $0x3f8] sm:$0xf]
    %v265 = vld [vmem:[%s0 + $0x3fc] sm:$0xf]
    %v266 = vld [vmem:[%s0 + $0x400] sm:$0xf]
    %v267 = vld [vmem:[%s0 + $0x404] sm:$0xf]
    %v268 = vld [vmem:[%s0 + $0x408] sm:$0xf]
    %v269 = vld [vmem:[%s0 + $0x40c] sm:$0xf]
    %v270 = vld [vmem:[%s0 + $0x410] sm:$0xf]
    %v271 = vld [vmem:[%s0 + $0x414] sm:$0xf]
    %v272 = vld [vmem:[%s0 + $0x418] sm:$0xf]
    %v273 = vld [vmem:[%s0 + $0x41c] sm:$0xf]
    %v274 = vld [vmem:[%s0 + $0x420] sm:$0xf]
    %v275 = vld [vmem:[%s0 + $0x424] sm:$0xf]
    %v276 = vld [vmem:[%s0 + $0x428] sm:$0xf]
    %v277 = vld [vmem:[%s0 + $0x42c] sm:$0xf]
    %v278 = vld [vmem:[%s0 + $0x430] sm:$0xf]
    %v279 = vld [vmem:[%s0 + $0x434] sm:$0xf]
    %v280 = vld [vmem:[%s0 + $0x438] sm:$0xf]
    %v281 = vld [vmem:[%s0 + $0x43c] sm:$0xf]
    %v282 = vld [vmem:[%s0 + $0x440] sm:$0xf]
    %v283 = vld [vmem:[%s0 + $0x444] sm:$0xf]
    %v284 = vld [vmem:[%s0 + $0x448] sm:$0xf]
    %v285 = vld [vmem:[%s0 + $0x44c] sm:$0xf]
    %v286 = vld [vmem:[%s0 + $0x450] sm:$0xf]
    %v287 = vld [vmem:[%s0 + $0x454] sm:$0xf]
    %v288 = vld [vmem:[%s0 + $0x458] sm:$0xf]
    %v289 = vld [vmem:[%s0 + $0x45c] sm:$0xf]
    %v290 = vld [vmem:[%s0 + $0x460] sm:$0xf]
    %v291 = vld [vmem:[%s0 + $0x464] sm:$0xf]
    %v292 = vld [vmem:[%s0 + $0x468] sm:$0xf]
    %v293 = vld [vmem:[%s0 + $0x46c] sm:$0xf]
    %v294 = vld [vmem:[%s0 + $0x470] sm:$0xf]
    %v295 = vld [vmem:[%s0 + $0x474] sm:$0xf]
    %v296 = vld [vmem:[%s0 + $0x478] sm:$0xf]
    %v297 = vld [vmem:[%s0 + $0x47c] sm:$0xf]
    %v298 = vld [vmem:[%s0 + $0x480] sm:$0xf]
    %v299 = vld [vmem:[%s0 + $0x484] sm:$0xf]
    %v300 = vld [vmem:[%s0 + $0x488] sm:$0xf]
    %v301 = vld [vmem:[%s0 + $0x48c] sm:$0xf]
    %v302 = vld [vmem:[%s0 + $0x490] sm:$0xf]
    %v303 = vld [vmem:[%s0 + $0x494] sm:$0xf]
    %v304 = vld [vmem:[%s0 + $0x498] sm:$0xf]
    %v305 = vld [vmem:[%s0 + $0x49c] sm:$0xf]
    %v306 = vld [vmem:[%s0 + $0x4a0] sm:$0xf]
    %v307 = vld [vmem:[%s0 + $0x4a4] sm:$0xf]
    %v308 = vld [vmem:[%s0 + $0x4a8] sm:$0xf]
    %v309 = vld [vmem:[%s0 + $0x4ac] sm:$0xf]
    %v310 = vld [vmem:[%s0 + $0x4b0] sm:$0xf]
    %v311 = vld [vmem:[%s0 + $0x4b4] sm:$0xf]
    %v312 = vld [vmem:[%s0 + $0x4b8] sm:$0xf]
    %v313 = vld [vmem:[%s0 + $0x4bc] sm:$0xf]
    %v314 = vld [vmem:[%s0 + $0x4c0] sm:$0xf]
    %v315 = vld [vmem:[%s0 + $0x4c4] sm:$0xf]
    %v316 = vld [vmem:[%s0 + $0x4c8] sm:$0xf]
    %v317 = vld [vmem:[%s0 + $0x4cc] sm:$0xf]
    %v318 = vld [vmem:[%s0 + $0x4d0] sm:$0xf]
    %v319 = vld [vmem:[%s0 + $0x4d4] sm:$0xf]
    %v320 = vld [vmem:[%s0 + $0x4d8] sm:$0xf]
    %v321 = vld [vmem:[%s0 + $0x4dc] sm:$0xf]
    %v322 = vld [vmem:[%s0 + $0x4e0] sm:$0xf]
    %v323 = vld [vmem:[%s0 + $0x4e4] sm:$0xf]
    %v324 = vld [vmem:[%s0 + $0x4e8] sm:$0xf]
    %v325 = vld [vmem:[%s0 + $0x4ec] sm:$0xf]
    %v326 = vld [vmem:[%s0 + $0x4f0] sm:$0xf]
    %v327 = vld [vmem:[%s0 + $0x4f4] sm:$0xf]
    %v328 = vld [vmem:[%s0 + $0x4f8] sm:$0xf]
    %v329 = vld [vmem:[%s0 + $0x4fc] sm:$0xf]
    %v330 = vld [vmem:[%s0 + $0x500] sm:$0xf]
    %v331 = vld [vmem:[%s0 + $0x504] sm:$0xf]
    %v332 = vld [vmem:[%s0 + $0x508] sm:$0xf]
    %v333 = vld [vmem:[%s0 + $0x50c] sm:$0xf]
    %v334 = vld [vmem:[%s0 + $0x510] sm:$0xf]
    %v335 = vld [vmem:[%s0 + $0x514] sm:$0xf]
    %v336 = vld [vmem:[%s0 + $0x518] sm:$0xf]
    %v337 = vld [vmem:[%s0 + $0x51c] sm:$0xf]
    %v338 = vld [vmem:[%s0 + $0x520] sm:$0xf]
    %v339 = vld [vmem:[%s0 + $0x524] sm:$0xf]
    %v340 = vld [vmem:[%s0 + $0x528] sm:$0xf]
    %v341 = vld [vmem:[%s0 + $0x52c] sm:$0xf]
    %v342 = vld [vmem:[%s0 + $0x530] sm:$0xf]
    %v343 = vld [vmem:[%s0 + $0x534] sm:$0xf]
    %v344 = vld [vmem:[%s0 + $0x538] sm:$0xf]
    %v345 = vld [vmem:[%s0 + $0x53c] sm:$0xf]
    %v346 = vld [vmem:[%s0 + $0x540] sm:$0xf]
    %v347 = vld [vmem:[%s0 + $0x544] sm:$0xf]
    %v348 = vld [vmem:[%s0 + $0x548] sm:$0xf]
    %v349 = vld [vmem:[%s0 + $0x54c] sm:$0xf]
    %v350 = vld [vmem:[%s0 + $0x550] sm:$0xf]
    %v351 = vld [vmem:[%s0 + $0x554] sm:$0xf]
    %v352 = vld [vmem:[%s0 + $0x558] sm:$0xf]
    %v353 = vld [vmem:[%s0 + $0x55c] sm:$0xf]
    %v354 = vld [vmem:[%s0 + $0x560] sm:$0xf]
    %v355 = vld [vmem:[%s0 + $0x564] sm:$0xf]
    %v356 = vld [vmem:[%s0 + $0x568] sm:$0xf]
    %v357 = vld [vmem:[%s0 + $0x56c] sm:$0xf]
    %v358 = vld [vmem:[%s0 + $0x570] sm:$0xf]
    %v359 = vld [vmem:[%s0 + $0x574] sm:$0xf]
    %v360 = vld [vmem:[%s0 + $0x578] sm:$0xf]
    %v361 = vld [vmem:[%s0 + $0x57c] sm:$0xf]
    %v362 = vld [vmem:[%s0 + $0x580] sm:$0xf]
    %v363 = vld [vmem:[%s0 + $0x584] sm:$0xf]
    %v364 = vld [vmem:[%s0 + $0x588] sm:$0xf]
    %v365 = vld [vmem:[%s0 + $0x58c] sm:$0xf]
    %v366 = vld [vmem:[%s0 + $0x590] sm:$0xf]
    %v367 = vld [vmem:[%s0 + $0x594] sm:$0xf]
    %v368 = vld [vmem:[%s0 + $0x598] sm:$0xf]
    %v369 = vld [vmem:[%s0 + $0x59c] sm:$0xf]
    %v370 = vld [vmem:[%s0 + $0x5a0] sm:$0xf]
    %v371 = vld [vmem:[%s0 + $0x5a4] sm:$0xf]
    %v372 = vld [vmem:[%s0 + $0x5a8] sm:$0xf]
    %v373 = vld [vmem:[%s0 + $0x5ac] sm:$0xf]
    %v374 = vld [vmem:[%s0 + $0x5b0] sm:$0xf]
    %v375 = vld [vmem:[%s0 + $0x5b4] sm:$0xf]
    %v376 = vld [vmem:[%s0 + $0x5b8] sm:$0xf]
    %v377 = vld [vmem:[%s0 + $0x5bc] sm:$0xf]
    %v378 = vld [vmem:[%s0 + $0x5c0] sm:$0xf]
    %v379 = vld [vmem:[%s0 + $0x5c4] sm:$0xf]
    %v380 = vld [vmem:[%s0 + $0x5c8] sm:$0xf]
    %v381 = vld [vmem:[%s0 + $0x5cc] sm:$0xf]
    %v382 = vld [vmem:[%s0 + $0x5d0] sm:$0xf]
    %v383 = vld [vmem:[%s0 + $0x5d4] sm:$0xf]
    %v384 = vld [vmem:[%s0 + $0x5d8] sm:$0xf]
    %v385 = vld [vmem:[%s0 + $0x5dc] sm:$0xf]
    %v386 = vld [vmem:[%s0 + $0x5e0] sm:$0xf]
    %v387 = vld [vmem:[%s0 + $0x5e4] sm:$0xf]
    %v388 = vld [vmem:[%s0 + $0x5e8] sm:$0xf]
    %v389 = vld [vmem:[%s0 + $0x5ec] sm:$0xf]
    %v390 = vld [vmem:[%s0 + $0x5f0] sm:$0xf]
    %v391 = vld [vmem:[%s0 + $0x5f4] sm:$0xf]
    %v392 = vld [vmem:[%s0 + $0x5f8] sm:$0xf]
    %v393 = vld [vmem:[%s0 + $0x5fc] sm:$0xf]
    %v394 = vld [vmem:[%s0 + $0x600] sm:$0xf]
    %v395 = vld [vmem:[%s0 + $0x604] sm:$0xf]
    %v396 = vld [vmem:[%s0 + $0x608] sm:$0xf]
    %v397 = vld [vmem:[%s0 + $0x60c] sm:$0xf]
    %v398 = vld [vmem:[%s0 + $0x610] sm:$0xf]
    %v399 = vld [vmem:[%s0 + $0x614] sm:$0xf]
    %v400 = vld [vmem:[%s0 + $0x618] sm:$0xf]
    %v401 = vld [vmem:[%s0 + $0x61c] sm:$0xf]
    %v402 = vld [vmem:[%s0 + $0x620] sm:$0xf]
    %v403 = vld [vmem:[%s0 + $0x624] sm:$0xf]
    %v404 = vld [vmem:[%s0 + $0x628] sm:$0xf]
    %v405 = vld [vmem:[%s0 + $0x62c] sm:$0xf]
    %v406 = vld [vmem:[%s0 + $0x630] sm:$0xf]
    %v407 = vld [vmem:[%s0 + $0x634] sm:$0xf]
    %v408 = vld [vmem:[%s0 + $0x638] sm:$0xf]
    %v409 = vld [vmem:[%s0 + $0x63c] sm:$0xf]
    %v410 = vld [vmem:[%s0 + $0x640] sm:$0xf]
    %v411 = vld [vmem:[%s0 + $0x644] sm:$0xf]
    %v412 = vld [vmem:[%s0 + $0x648] sm:$0xf]
    %v413 = vld [vmem:[%s0 + $0x64c] sm:$0xf]
    %v414 = vld [vmem:[%s0 + $0x650] sm:$0xf]
    %v415 = vld [vmem:[%s0 + $0x654] sm:$0xf]
    %v416 = vld [vmem:[%s0 + $0x658] sm:$0xf]
    %v417 = vld [vmem:[%s0 + $0x65c] sm:$0xf]
    %v418 = vld [vmem:[%s0 + $0x660] sm:$0xf]
    %v419 = vld [vmem:[%s0 + $0x664] sm:$0xf]
    %v420 = vld [vmem:[%s0 + $0x668] sm:$0xf]
    %v421 = vld [vmem:[%s0 + $0x66c] sm:$0xf]
    %v422 = vld [vmem:[%s0 + $0x670] sm:$0xf]
    %v423 = vld [vmem:[%s0 + $0x674] sm:$0xf]
    %v424 = vld [vmem:[%s0 + $0x678] sm:$0xf]
    %v425 = vld [vmem:[%s0 + $0x67c] sm:$0xf]
    %v426 = vld [vmem:[%s0 + $0x680] sm:$0xf]
    %v427 = vld [vmem:[%s0 + $0x684] sm:$0xf]
    %v428 = vld [vmem:[%s0 + $0x688] sm:$0xf]
    %v429 = vld [vmem:[%s0 + $0x68c] sm:$0xf]
    %v430 = vld [vmem:[%s0 + $0x690] sm:$0xf]
    %v431 = vld [vmem:[%s0 + $0x694] sm:$0xf]
    %v432 = vld [vmem:[%s0 + $0x698] sm:$0xf]
    %v433 = vld [vmem:[%s0 + $0x69c] sm:$0xf]
    %v434 = vld [vmem:[%s0 + $0x6a0] sm:$0xf]
    %v435 = vld [vmem:[%s0 + $0x6a4] sm:$0xf]
    %v436 = vld [vmem:[%s0 + $0x6a8] sm:$0xf]
    %v437 = vld [vmem:[%s0 + $0x6ac] sm:$0xf]
    %v438 = vld [vmem:[%s0 + $0x6b0] sm:$0xf]
    %v439 = vld [vmem:[%s0 + $0x6b4] sm:$0xf]
    %v440 = vld [vmem:[%s0 + $0x6b8] sm:$0xf]
    %v441 = vld [vmem:[%s0 + $0x6bc] sm:$0xf]
    %v442 = vld [vmem:[%s0 + $0x6c0] sm:$0xf]
    %v443 = vld [vmem:[%s0 + $0x6c4] sm:$0xf]
    %v444 = vld [vmem:[%s0 + $0x6c8] sm:$0xf]
    %v445 = vld [vmem:[%s0 + $0x6cc] sm:$0xf]
    %v446 = vld [vmem:[%s0 + $0x6d0] sm:$0xf]
    %v447 = vld [vmem:[%s0 + $0x6d4] sm:$0xf]
    %v448 = vld [vmem:[%s0 + $0x6d8] sm:$0xf]
    %v449 = vld [vmem:[%s0 + $0x6dc] sm:$0xf]
    %v450 = vld [vmem:[%s0 + $0x6e0] sm:$0xf]
    %v451 = vld [vmem:[%s0 + $0x6e4] sm:$0xf]
    %v452 = vld [vmem:[%s0 + $0x6e8] sm:$0xf]
    %v453 = vld [vmem:[%s0 + $0x6ec] sm:$0xf]
    %v454 = vld [vmem:[%s0 + $0x6f0] sm:$0xf]
    %v455 = vld [vmem:[%s0 + $0x6f4] sm:$0xf]
    %v456 = vld [vmem:[%s0 + $0x6f8] sm:$0xf]
    %v457 = vld [vmem:[%s0 + $0x6fc] sm:$0xf]
    %v458 = vld [vmem:[%s0 + $0x700] sm:$0xf]
    %v459 = vld [vmem:[%s0 + $0x704] sm:$0xf]
    %v460 = vld [vmem:[%s0 + $0x708] sm:$0xf]
    %v461 = vld [vmem:[%s0 + $0x70c] sm:$0xf]
    %v462 = vld [vmem:[%s0 + $0x710] sm:$0xf]
    %v463 = vld [vmem:[%s0 + $0x714] sm:$0xf]
    %v464 = vld [vmem:[%s0 + $0x718] sm:$0xf]
    %v465 = vld [vmem:[%s0 + $0x71c] sm:$0xf]
    %v466 = vld [vmem:[%s0 + $0x720] sm:$0xf]
    %v467 = vld [vmem:[%s0 + $0x724] sm:$0xf]
    %v468 = vld [vmem:[%s0 + $0x728] sm:$0xf]
    %v469 = vld [vmem:[%s0 + $0x72c] sm:$0xf]
    %v470 = vld [vmem:[%s0 + $0x730] sm:$0xf]
    %v471 = vld [vmem:[%s0 + $0x734] sm:$0xf]
    %v472 = vld [vmem:[%s0 + $0x738] sm:$0xf]
    %v473 = vld [vmem:[%s0 + $0x73c] sm:$0xf]
    %v474 = vld [vmem:[%s0 + $0x740] sm:$0xf]
    %v475 = vld [vmem:[%s0 + $0x744] sm:$0xf]
    %v476 = vld [vmem:[%s0 + $0x748] sm:$0xf]
    %v477 = vld [vmem:[%s0 + $0x74c] sm:$0xf]
    %v478 = vld [vmem:[%s0 + $0x750] sm:$0xf]
    %v479 = vld [vmem:[%s0 + $0x754] sm:$0xf]
    %v480 = vld [vmem:[%s0 + $0x758] sm:$0xf]
    %v481 = vld [vmem:[%s0 + $0x75c] sm:$0xf]
    %v482 = vld [vmem:[%s0 + $0x760] sm:$0xf]
    %v483 = vld [vmem:[%s0 + $0x764] sm:$0xf]
    %v484 = vld [vmem:[%s0 + $0x768] sm:$0xf]
    %v485 = vld [vmem:[%s0 + $0x76c] sm:$0xf]
    %v486 = vld [vmem:[%s0 + $0x770] sm:$0xf]
    %v487 = vld [vmem:[%s0 + $0x774] sm:$0xf]
    %v488 = vld [vmem:[%s0 + $0x778] sm:$0xf]
    %v489 = vld [vmem:[%s0 + $0x77c] sm:$0xf]
    %v490 = vld [vmem:[%s0 + $0x780] sm:$0xf]
    %v491 = vld [vmem:[%s0 + $0x784] sm:$0xf]
    %v492 = vld [vmem:[%s0 + $0x788] sm:$0xf]
    %v493 = vld [vmem:[%s0 + $0x78c] sm:$0xf]
    %v494 = vld [vmem:[%s0 + $0x790] sm:$0xf]
    %v495 = vld [vmem:[%s0 + $0x794] sm:$0xf]
    %v496 = vld [vmem:[%s0 + $0x798] sm:$0xf]
    %v497 = vld [vmem:[%s0 + $0x79c] sm:$0xf]
    %v498 = vld [vmem:[%s0 + $0x7a0] sm:$0xf]
    %v499 = vld [vmem:[%s0 + $0x7a4] sm:$0xf]
    %v500 = vld [vmem:[%s0 + $0x7a8] sm:$0xf]
    %v501 = vld [vmem:[%s0 + $0x7ac] sm:$0xf]
    %v502 = vld [vmem:[%s0 + $0x7b0] sm:$0xf]
    %v503 = vld [vmem:[%s0 + $0x7b4] sm:$0xf]
    %v504 = vld [vmem:[%s0 + $0x7b8] sm:$0xf]
    %v505 = vld [vmem:[%s0 + $0x7bc] sm:$0xf]
    %v506 = vld [vmem:[%s0 + $0x7c0] sm:$0xf]
    %v507 = vld [vmem:[%s0 + $0x7c4] sm:$0xf]
    %v508 = vld [vmem:[%s0 + $0x7c8] sm:$0xf]
    %v509 = vld [vmem:[%s0 + $0x7cc] sm:$0xf]
    %v510 = vld [vmem:[%s0 + $0x7d0] sm:$0xf]
    %v511 = vld [vmem:[%s0 + $0x7d4] sm:$0xf]
    %v512 = vld [vmem:[%s0 + $0x7d8] sm:$0xf]
    %v513 = vld [vmem:[%s0 + $0x7dc] sm:$0xf]
    %v514 = vld [vmem:[%s0 + $0x7e0] sm:$0xf]
    %v515 = vld [vmem:[%s0 + $0x7e4] sm:$0xf]
    %v516 = vld [vmem:[%s0 + $0x7e8] sm:$0xf]
    %v517 = vld [vmem:[%s0 + $0x7ec] sm:$0xf]
    %v518 = vld [vmem:[%s0 + $0x7f0] sm:$0xf]
    %v519 = vld [vmem:[%s0 + $0x7f4] sm:$0xf]
    %v520 = vld [vmem:[%s0 + $0x7f8] sm:$0xf]
    %v521 = vld [vmem:[%s0 + $0x7fc] sm:$0xf]
    %v522 = vld [vmem:[%s0 + $0x800] sm:$0xf]
    %v523 = vld [vmem:[%s0 + $0x804] sm:$0xf]
    %v524 = vld [vmem:[%s0 + $0x808] sm:$0xf]
    %v525 = vld [vmem:[%s0 + $0x80c] sm:$0xf]
    %v526 = vld [vmem:[%s0 + $0x810] sm:$0xf]
    %v527 = vld [vmem:[%s0 + $0x814] sm:$0xf]
    %v528 = vld [vmem:[%s0 + $0x818] sm:$0xf]
    %v529 = vld [vmem:[%s0 + $0x81c] sm:$0xf]
    %v530 = vld [vmem:[%s0 + $0x820] sm:$0xf]
    %v531 = vld [vmem:[%s0 + $0x824] sm:$0xf]
    %v532 = vld [vmem:[%s0 + $0x828] sm:$0xf]
    %v533 = vld [vmem:[%s0 + $0x82c] sm:$0xf]
    %v534 = vld [vmem:[%s0 + $0x830] sm:$0xf]
    %v535 = vld [vmem:[%s0 + $0x834] sm:$0xf]
    %v536 = vld [vmem:[%s0 + $0x838] sm:$0xf]
    %v537 = vld [vmem:[%s0 + $0x83c] sm:$0xf]
    %v538 = vld [vmem:[%s0 + $0x840] sm:$0xf]
    %v539 = vld [vmem:[%s0 + $0x844] sm:$0xf]
    %v540 = vld [vmem:[%s0 + $0x848] sm:$0xf]
    %v541 = vld [vmem:[%s0 + $0x84c] sm:$0xf]
    %v542 = vld [vmem:[%s0 + $0x850] sm:$0xf]
    %v543 = vld [vmem:[%s0 + $0x854] sm:$0xf]
    %v544 = vld [vmem:[%s0 + $0x858] sm:$0xf]
    %v545 = vld [vmem:[%s0 + $0x85c] sm:$0xf]
    %v546 = vld [vmem:[%s0 + $0x860] sm:$0xf]
    %v547 = vld [vmem:[%s0 + $0x864] sm:$0xf]
    %v548 = vld [vmem:[%s0 + $0x868] sm:$0xf]
    %v549 = vld [vmem:[%s0 + $0x86c] sm:$0xf]
    %v550 = vld [vmem:[%s0 + $0x870] sm:$0xf]
    %v551 = vld [vmem:[%s0 + $0x874] sm:$0xf]
    %v552 = vld [vmem:[%s0 + $0x878] sm:$0xf]
    %v553 = vld [vmem:[%s0 + $0x87c] sm:$0xf]
    %v554 = vld [vmem:[%s0 + $0x880] sm:$0xf]
    %v555 = vld [vmem:[%s0 + $0x884] sm:$0xf]
    %v556 = vld [vmem:[%s0 + $0x888] sm:$0xf]
    %v557 = vld [vmem:[%s0 + $0x88c] sm:$0xf]
    %v558 = vld [vmem:[%s0 + $0x890] sm:$0xf]
    %v559 = vld [vmem:[%s0 + $0x894] sm:$0xf]
    %v560 = vld [vmem:[%s0 + $0x898] sm:$0xf]
    %v561 = vld [vmem:[%s0 + $0x89c] sm:$0xf]
    %v562 = vld [vmem:[%s0 + $0x8a0] sm:$0xf]
    %v563 = vld [vmem:[%s0 + $0x8a4] sm:$0xf]
    %v564 = vld [vmem:[%s0 + $0x8a8] sm:$0xf]
    %v565 = vld [vmem:[%s0 + $0x8ac] sm:$0xf]
    %v566 = vld [vmem:[%s0 + $0x8b0] sm:$0xf]
    %v567 = vld [vmem:[%s0 + $0x8b4] sm:$0xf]
    %v568 = vld [vmem:[%s0 + $0x8b8] sm:$0xf]
    %v569 = vld [vmem:[%s0 + $0x8bc] sm:$0xf]
    %v570 = vld [vmem:[%s0 + $0x8c0] sm:$0xf]
    %v571 = vld [vmem:[%s0 + $0x8c4] sm:$0xf]
    %v572 = vld [vmem:[%s0 + $0x8c8] sm:$0xf]
    %v573 = vld [vmem:[%s0 + $0x8cc] sm:$0xf]
    %v574 = vld [vmem:[%s0 + $0x8d0] sm:$0xf]
    %v575 = vld [vmem:[%s0 + $0x8d4] sm:$0xf]
    %v576 = vld [vmem:[%s0 + $0x8d8] sm:$0xf]
    %v577 = vld [vmem:[%s0 + $0x8dc] sm:$0xf]
    %v578 = vld [vmem:[%s0 + $0x8e0] sm:$0xf]
    %v579 = vld [vmem:[%s0 + $0x8e4] sm:$0xf]
    %v580 = vld [vmem:[%s0 + $0x8e8] sm:$0xf]
    %v581 = vld [vmem:[%s0 + $0x8ec] sm:$0xf]
    %v582 = vld [vmem:[%s0 + $0x8f0] sm:$0xf]
    %v583 = vld [vmem:[%s0 + $0x8f4] sm:$0xf]
    %v584 = vld [vmem:[%s0 + $0x8f8] sm:$0xf]
    %v585 = vld [vmem:[%s0 + $0x8fc] sm:$0xf]
    %vm586 = vcmask 519168
    %v589 = vsel %vm586, %v10, 4286644096
    %v592 = vsel %vm586, %v74, 4286644096
    %v594 = vmax.bf16 %v589, %v592
    %v596 = vsel %vm586, %v138, 4286644096
    %v598 = vmax.bf16 %v594, %v596
    %v600 = vsel %vm586, %v202, 4286644096
    %v602 = vmax.bf16 %v598, %v600
    %v604 = vsel %vm586, %v266, 4286644096
    %v606 = vmax.bf16 %v602, %v604
    %v608 = vsel %vm586, %v330, 4286644096
    %v610 = vmax.bf16 %v606, %v608
    %v612 = vsel %vm586, %v394, 4286644096
    %v614 = vmax.bf16 %v610, %v612
    %v616 = vsel %vm586, %v458, 4286644096
    %v618 = vmax.bf16 %v614, %v616
    %v620 = vsel %vm586, %v522, 4286644096
    %v622 = vmax.bf16 %v618, %v620
    %v624 = vsel %vm586, %v11, 4286644096
    %v627 = vsel %vm586, %v75, 4286644096
    %v629 = vmax.bf16 %v624, %v627
    %v631 = vsel %vm586, %v139, 4286644096
    %v633 = vmax.bf16 %v629, %v631
    %v635 = vsel %vm586, %v203, 4286644096
    %v637 = vmax.bf16 %v633, %v635
    %v639 = vsel %vm586, %v267, 4286644096
    %v641 = vmax.bf16 %v637, %v639
    %v643 = vsel %vm586, %v331, 4286644096
    %v645 = vmax.bf16 %v641, %v643
    %v647 = vsel %vm586, %v395, 4286644096
    %v649 = vmax.bf16 %v645, %v647
    %v651 = vsel %vm586, %v459, 4286644096
    %v653 = vmax.bf16 %v649, %v651
    %v655 = vsel %vm586, %v523, 4286644096
    %v657 = vmax.bf16 %v653, %v655
    %v659 = vsel %vm586, %v12, 4286644096
    %v662 = vsel %vm586, %v76, 4286644096
    %v664 = vmax.bf16 %v659, %v662
    %v666 = vsel %vm586, %v140, 4286644096
    %v668 = vmax.bf16 %v664, %v666
    %v670 = vsel %vm586, %v204, 4286644096
    %v672 = vmax.bf16 %v668, %v670
    %v674 = vsel %vm586, %v268, 4286644096
    %v676 = vmax.bf16 %v672, %v674
    %v678 = vsel %vm586, %v332, 4286644096
    %v680 = vmax.bf16 %v676, %v678
    %v682 = vsel %vm586, %v396, 4286644096
    %v684 = vmax.bf16 %v680, %v682
    %v686 = vsel %vm586, %v460, 4286644096
    %v688 = vmax.bf16 %v684, %v686
    %v690 = vsel %vm586, %v524, 4286644096
    %v692 = vmax.bf16 %v688, %v690
    %v694 = vsel %vm586, %v13, 4286644096
    %v697 = vsel %vm586, %v77, 4286644096
    %v699 = vmax.bf16 %v694, %v697
    %v701 = vsel %vm586, %v141, 4286644096
    %v703 = vmax.bf16 %v699, %v701
    %v705 = vsel %vm586, %v205, 4286644096
    %v707 = vmax.bf16 %v703, %v705
    %v709 = vsel %vm586, %v269, 4286644096
    %v711 = vmax.bf16 %v707, %v709
    %v713 = vsel %vm586, %v333, 4286644096
    %v715 = vmax.bf16 %v711, %v713
    %v717 = vsel %vm586, %v397, 4286644096
    %v719 = vmax.bf16 %v715, %v717
    %v721 = vsel %vm586, %v461, 4286644096
    %v723 = vmax.bf16 %v719, %v721
    %v725 = vsel %vm586, %v525, 4286644096
    %v727 = vmax.bf16 %v723, %v725
    %v729 = vsel %vm586, %v14, 4286644096
    %v732 = vsel %vm586, %v78, 4286644096
    %v734 = vmax.bf16 %v729, %v732
    %v736 = vsel %vm586, %v142, 4286644096
    %v738 = vmax.bf16 %v734, %v736
    %v740 = vsel %vm586, %v206, 4286644096
    %v742 = vmax.bf16 %v738, %v740
    %v744 = vsel %vm586, %v270, 4286644096
    %v746 = vmax.bf16 %v742, %v744
    %v748 = vsel %vm586, %v334, 4286644096
    %v750 = vmax.bf16 %v746, %v748
    %v752 = vsel %vm586, %v398, 4286644096
    %v754 = vmax.bf16 %v750, %v752
    %v756 = vsel %vm586, %v462, 4286644096
    %v758 = vmax.bf16 %v754, %v756
    %v760 = vsel %vm586, %v526, 4286644096
    %v762 = vmax.bf16 %v758, %v760
    %v764 = vsel %vm586, %v15, 4286644096
    %v767 = vsel %vm586, %v79, 4286644096
    %v769 = vmax.bf16 %v764, %v767
    %v771 = vsel %vm586, %v143, 4286644096
    %v773 = vmax.bf16 %v769, %v771
    %v775 = vsel %vm586, %v207, 4286644096
    %v777 = vmax.bf16 %v773, %v775
    %v779 = vsel %vm586, %v271, 4286644096
    %v781 = vmax.bf16 %v777, %v779
    %v783 = vsel %vm586, %v335, 4286644096
    %v785 = vmax.bf16 %v781, %v783
    %v787 = vsel %vm586, %v399, 4286644096
    %v789 = vmax.bf16 %v785, %v787
    %v791 = vsel %vm586, %v463, 4286644096
    %v793 = vmax.bf16 %v789, %v791
    %v795 = vsel %vm586, %v527, 4286644096
    %v797 = vmax.bf16 %v793, %v795
    %v799 = vsel %vm586, %v16, 4286644096
    %v802 = vsel %vm586, %v80, 4286644096
    %v804 = vmax.bf16 %v799, %v802
    %v806 = vsel %vm586, %v144, 4286644096
    %v808 = vmax.bf16 %v804, %v806
    %v810 = vsel %vm586, %v208, 4286644096
    %v812 = vmax.bf16 %v808, %v810
    %v814 = vsel %vm586, %v272, 4286644096
    %v816 = vmax.bf16 %v812, %v814
    %v818 = vsel %vm586, %v336, 4286644096
    %v820 = vmax.bf16 %v816, %v818
    %v822 = vsel %vm586, %v400, 4286644096
    %v824 = vmax.bf16 %v820, %v822
    %v826 = vsel %vm586, %v464, 4286644096
    %v828 = vmax.bf16 %v824, %v826
    %v830 = vsel %vm586, %v528, 4286644096
    %v832 = vmax.bf16 %v828, %v830
    %v834 = vsel %vm586, %v17, 4286644096
    %v837 = vsel %vm586, %v81, 4286644096
    %v839 = vmax.bf16 %v834, %v837
    %v841 = vsel %vm586, %v145, 4286644096
    %v843 = vmax.bf16 %v839, %v841
    %v845 = vsel %vm586, %v209, 4286644096
    %v847 = vmax.bf16 %v843, %v845
    %v849 = vsel %vm586, %v273, 4286644096
    %v851 = vmax.bf16 %v847, %v849
    %v853 = vsel %vm586, %v337, 4286644096
    %v855 = vmax.bf16 %v851, %v853
    %v857 = vsel %vm586, %v401, 4286644096
    %v859 = vmax.bf16 %v855, %v857
    %v861 = vsel %vm586, %v465, 4286644096
    %v863 = vmax.bf16 %v859, %v861
    %v865 = vsel %vm586, %v529, 4286644096
    %v867 = vmax.bf16 %v863, %v865
    %v869 = vsel %vm586, %v18, 4286644096
    %v872 = vsel %vm586, %v82, 4286644096
    %v874 = vmax.bf16 %v869, %v872
    %v876 = vsel %vm586, %v146, 4286644096
    %v878 = vmax.bf16 %v874, %v876
    %v880 = vsel %vm586, %v210, 4286644096
    %v882 = vmax.bf16 %v878, %v880
    %v884 = vsel %vm586, %v274, 4286644096
    %v886 = vmax.bf16 %v882, %v884
    %v888 = vsel %vm586, %v338, 4286644096
    %v890 = vmax.bf16 %v886, %v888
    %v892 = vsel %vm586, %v402, 4286644096
    %v894 = vmax.bf16 %v890, %v892
    %v896 = vsel %vm586, %v466, 4286644096
    %v898 = vmax.bf16 %v894, %v896
    %v900 = vsel %vm586, %v530, 4286644096
    %v902 = vmax.bf16 %v898, %v900
    %v904 = vsel %vm586, %v19, 4286644096
    %v907 = vsel %vm586, %v83, 4286644096
    %v909 = vmax.bf16 %v904, %v907
    %v911 = vsel %vm586, %v147, 4286644096
    %v913 = vmax.bf16 %v909, %v911
    %v915 = vsel %vm586, %v211, 4286644096
    %v917 = vmax.bf16 %v913, %v915
    %v919 = vsel %vm586, %v275, 4286644096
    %v921 = vmax.bf16 %v917, %v919
    %v923 = vsel %vm586, %v339, 4286644096
    %v925 = vmax.bf16 %v921, %v923
    %v927 = vsel %vm586, %v403, 4286644096
    %v929 = vmax.bf16 %v925, %v927
    %v931 = vsel %vm586, %v467, 4286644096
    %v933 = vmax.bf16 %v929, %v931
    %v935 = vsel %vm586, %v531, 4286644096
    %v937 = vmax.bf16 %v933, %v935
    %v939 = vsel %vm586, %v20, 4286644096
    %v942 = vsel %vm586, %v84, 4286644096
    %v944 = vmax.bf16 %v939, %v942
    %v946 = vsel %vm586, %v148, 4286644096
    %v948 = vmax.bf16 %v944, %v946
    %v950 = vsel %vm586, %v212, 4286644096
    %v952 = vmax.bf16 %v948, %v950
    %v954 = vsel %vm586, %v276, 4286644096
    %v956 = vmax.bf16 %v952, %v954
    %v958 = vsel %vm586, %v340, 4286644096
    %v960 = vmax.bf16 %v956, %v958
    %v962 = vsel %vm586, %v404, 4286644096
    %v964 = vmax.bf16 %v960, %v962
    %v966 = vsel %vm586, %v468, 4286644096
    %v968 = vmax.bf16 %v964, %v966
    %v970 = vsel %vm586, %v532, 4286644096
    %v972 = vmax.bf16 %v968, %v970
    %v974 = vsel %vm586, %v21, 4286644096
    %v977 = vsel %vm586, %v85, 4286644096
    %v979 = vmax.bf16 %v974, %v977
    %v981 = vsel %vm586, %v149, 4286644096
    %v983 = vmax.bf16 %v979, %v981
    %v985 = vsel %vm586, %v213, 4286644096
    %v987 = vmax.bf16 %v983, %v985
    %v989 = vsel %vm586, %v277, 4286644096
    %v991 = vmax.bf16 %v987, %v989
    %v993 = vsel %vm586, %v341, 4286644096
    %v995 = vmax.bf16 %v991, %v993
    %v997 = vsel %vm586, %v405, 4286644096
    %v999 = vmax.bf16 %v995, %v997
    %v1001 = vsel %vm586, %v469, 4286644096
    %v1003 = vmax.bf16 %v999, %v1001
    %v1005 = vsel %vm586, %v533, 4286644096
    %v1007 = vmax.bf16 %v1003, %v1005
    %v1009 = vsel %vm586, %v22, 4286644096
    %v1012 = vsel %vm586, %v86, 4286644096
    %v1014 = vmax.bf16 %v1009, %v1012
    %v1016 = vsel %vm586, %v150, 4286644096
    %v1018 = vmax.bf16 %v1014, %v1016
    %v1020 = vsel %vm586, %v214, 4286644096
    %v1022 = vmax.bf16 %v1018, %v1020
    %v1024 = vsel %vm586, %v278, 4286644096
    %v1026 = vmax.bf16 %v1022, %v1024
    %v1028 = vsel %vm586, %v342, 4286644096
    %v1030 = vmax.bf16 %v1026, %v1028
    %v1032 = vsel %vm586, %v406, 4286644096
    %v1034 = vmax.bf16 %v1030, %v1032
    %v1036 = vsel %vm586, %v470, 4286644096
    %v1038 = vmax.bf16 %v1034, %v1036
    %v1040 = vsel %vm586, %v534, 4286644096
    %v1042 = vmax.bf16 %v1038, %v1040
    %v1044 = vsel %vm586, %v23, 4286644096
    %v1047 = vsel %vm586, %v87, 4286644096
    %v1049 = vmax.bf16 %v1044, %v1047
    %v1051 = vsel %vm586, %v151, 4286644096
    %v1053 = vmax.bf16 %v1049, %v1051
    %v1055 = vsel %vm586, %v215, 4286644096
    %v1057 = vmax.bf16 %v1053, %v1055
    %v1059 = vsel %vm586, %v279, 4286644096
    %v1061 = vmax.bf16 %v1057, %v1059
    %v1063 = vsel %vm586, %v343, 4286644096
    %v1065 = vmax.bf16 %v1061, %v1063
    %v1067 = vsel %vm586, %v407, 4286644096
    %v1069 = vmax.bf16 %v1065, %v1067
    %v1071 = vsel %vm586, %v471, 4286644096
    %v1073 = vmax.bf16 %v1069, %v1071
    %v1075 = vsel %vm586, %v535, 4286644096
    %v1077 = vmax.bf16 %v1073, %v1075
    %v1079 = vsel %vm586, %v24, 4286644096
    %v1082 = vsel %vm586, %v88, 4286644096
    %v1084 = vmax.bf16 %v1079, %v1082
    %v1086 = vsel %vm586, %v152, 4286644096
    %v1088 = vmax.bf16 %v1084, %v1086
    %v1090 = vsel %vm586, %v216, 4286644096
    %v1092 = vmax.bf16 %v1088, %v1090
    %v1094 = vsel %vm586, %v280, 4286644096
    %v1096 = vmax.bf16 %v1092, %v1094
    %v1098 = vsel %vm586, %v344, 4286644096
    %v1100 = vmax.bf16 %v1096, %v1098
    %v1102 = vsel %vm586, %v408, 4286644096
    %v1104 = vmax.bf16 %v1100, %v1102
    %v1106 = vsel %vm586, %v472, 4286644096
    %v1108 = vmax.bf16 %v1104, %v1106
    %v1110 = vsel %vm586, %v536, 4286644096
    %v1112 = vmax.bf16 %v1108, %v1110
    %v1114 = vsel %vm586, %v25, 4286644096
    %v1117 = vsel %vm586, %v89, 4286644096
    %v1119 = vmax.bf16 %v1114, %v1117
    %v1121 = vsel %vm586, %v153, 4286644096
    %v1123 = vmax.bf16 %v1119, %v1121
    %v1125 = vsel %vm586, %v217, 4286644096
    %v1127 = vmax.bf16 %v1123, %v1125
    %v1129 = vsel %vm586, %v281, 4286644096
    %v1131 = vmax.bf16 %v1127, %v1129
    %v1133 = vsel %vm586, %v345, 4286644096
    %v1135 = vmax.bf16 %v1131, %v1133
    %v1137 = vsel %vm586, %v409, 4286644096
    %v1139 = vmax.bf16 %v1135, %v1137
    %v1141 = vsel %vm586, %v473, 4286644096
    %v1143 = vmax.bf16 %v1139, %v1141
    %v1145 = vsel %vm586, %v537, 4286644096
    %v1147 = vmax.bf16 %v1143, %v1145
    %v1149 = vsel %vm586, %v26, 4286644096
    %v1152 = vsel %vm586, %v90, 4286644096
    %v1154 = vmax.bf16 %v1149, %v1152
    %v1156 = vsel %vm586, %v154, 4286644096
    %v1158 = vmax.bf16 %v1154, %v1156
    %v1160 = vsel %vm586, %v218, 4286644096
    %v1162 = vmax.bf16 %v1158, %v1160
    %v1164 = vsel %vm586, %v282, 4286644096
    %v1166 = vmax.bf16 %v1162, %v1164
    %v1168 = vsel %vm586, %v346, 4286644096
    %v1170 = vmax.bf16 %v1166, %v1168
    %v1172 = vsel %vm586, %v410, 4286644096
    %v1174 = vmax.bf16 %v1170, %v1172
    %v1176 = vsel %vm586, %v474, 4286644096
    %v1178 = vmax.bf16 %v1174, %v1176
    %v1180 = vsel %vm586, %v538, 4286644096
    %v1182 = vmax.bf16 %v1178, %v1180
    %v1184 = vsel %vm586, %v27, 4286644096
    %v1187 = vsel %vm586, %v91, 4286644096
    %v1189 = vmax.bf16 %v1184, %v1187
    %v1191 = vsel %vm586, %v155, 4286644096
    %v1193 = vmax.bf16 %v1189, %v1191
    %v1195 = vsel %vm586, %v219, 4286644096
    %v1197 = vmax.bf16 %v1193, %v1195
    %v1199 = vsel %vm586, %v283, 4286644096
    %v1201 = vmax.bf16 %v1197, %v1199
    %v1203 = vsel %vm586, %v347, 4286644096
    %v1205 = vmax.bf16 %v1201, %v1203
    %v1207 = vsel %vm586, %v411, 4286644096
    %v1209 = vmax.bf16 %v1205, %v1207
    %v1211 = vsel %vm586, %v475, 4286644096
    %v1213 = vmax.bf16 %v1209, %v1211
    %v1215 = vsel %vm586, %v539, 4286644096
    %v1217 = vmax.bf16 %v1213, %v1215
    %v1219 = vsel %vm586, %v28, 4286644096
    %v1222 = vsel %vm586, %v92, 4286644096
    %v1224 = vmax.bf16 %v1219, %v1222
    %v1226 = vsel %vm586, %v156, 4286644096
    %v1228 = vmax.bf16 %v1224, %v1226
    %v1230 = vsel %vm586, %v220, 4286644096
    %v1232 = vmax.bf16 %v1228, %v1230
    %v1234 = vsel %vm586, %v284, 4286644096
    %v1236 = vmax.bf16 %v1232, %v1234
    %v1238 = vsel %vm586, %v348, 4286644096
    %v1240 = vmax.bf16 %v1236, %v1238
    %v1242 = vsel %vm586, %v412, 4286644096
    %v1244 = vmax.bf16 %v1240, %v1242
    %v1246 = vsel %vm586, %v476, 4286644096
    %v1248 = vmax.bf16 %v1244, %v1246
    %v1250 = vsel %vm586, %v540, 4286644096
    %v1252 = vmax.bf16 %v1248, %v1250
    %v1254 = vsel %vm586, %v29, 4286644096
    %v1257 = vsel %vm586, %v93, 4286644096
    %v1259 = vmax.bf16 %v1254, %v1257
    %v1261 = vsel %vm586, %v157, 4286644096
    %v1263 = vmax.bf16 %v1259, %v1261
    %v1265 = vsel %vm586, %v221, 4286644096
    %v1267 = vmax.bf16 %v1263, %v1265
    %v1269 = vsel %vm586, %v285, 4286644096
    %v1271 = vmax.bf16 %v1267, %v1269
    %v1273 = vsel %vm586, %v349, 4286644096
    %v1275 = vmax.bf16 %v1271, %v1273
    %v1277 = vsel %vm586, %v413, 4286644096
    %v1279 = vmax.bf16 %v1275, %v1277
    %v1281 = vsel %vm586, %v477, 4286644096
    %v1283 = vmax.bf16 %v1279, %v1281
    %v1285 = vsel %vm586, %v541, 4286644096
    %v1287 = vmax.bf16 %v1283, %v1285
    %v1289 = vsel %vm586, %v30, 4286644096
    %v1292 = vsel %vm586, %v94, 4286644096
    %v1294 = vmax.bf16 %v1289, %v1292
    %v1296 = vsel %vm586, %v158, 4286644096
    %v1298 = vmax.bf16 %v1294, %v1296
    %v1300 = vsel %vm586, %v222, 4286644096
    %v1302 = vmax.bf16 %v1298, %v1300
    %v1304 = vsel %vm586, %v286, 4286644096
    %v1306 = vmax.bf16 %v1302, %v1304
    %v1308 = vsel %vm586, %v350, 4286644096
    %v1310 = vmax.bf16 %v1306, %v1308
    %v1312 = vsel %vm586, %v414, 4286644096
    %v1314 = vmax.bf16 %v1310, %v1312
    %v1316 = vsel %vm586, %v478, 4286644096
    %v1318 = vmax.bf16 %v1314, %v1316
    %v1320 = vsel %vm586, %v542, 4286644096
    %v1322 = vmax.bf16 %v1318, %v1320
    %v1324 = vsel %vm586, %v31, 4286644096
    %v1327 = vsel %vm586, %v95, 4286644096
    %v1329 = vmax.bf16 %v1324, %v1327
    %v1331 = vsel %vm586, %v159, 4286644096
    %v1333 = vmax.bf16 %v1329, %v1331
    %v1335 = vsel %vm586, %v223, 4286644096
    %v1337 = vmax.bf16 %v1333, %v1335
    %v1339 = vsel %vm586, %v287, 4286644096
    %v1341 = vmax.bf16 %v1337, %v1339
    %v1343 = vsel %vm586, %v351, 4286644096
    %v1345 = vmax.bf16 %v1341, %v1343
    %v1347 = vsel %vm586, %v415, 4286644096
    %v1349 = vmax.bf16 %v1345, %v1347
    %v1351 = vsel %vm586, %v479, 4286644096
    %v1353 = vmax.bf16 %v1349, %v1351
    %v1355 = vsel %vm586, %v543, 4286644096
    %v1357 = vmax.bf16 %v1353, %v1355
    %v1359 = vsel %vm586, %v32, 4286644096
    %v1362 = vsel %vm586, %v96, 4286644096
    %v1364 = vmax.bf16 %v1359, %v1362
    %v1366 = vsel %vm586, %v160, 4286644096
    %v1368 = vmax.bf16 %v1364, %v1366
    %v1370 = vsel %vm586, %v224, 4286644096
    %v1372 = vmax.bf16 %v1368, %v1370
    %v1374 = vsel %vm586, %v288, 4286644096
    %v1376 = vmax.bf16 %v1372, %v1374
    %v1378 = vsel %vm586, %v352, 4286644096
    %v1380 = vmax.bf16 %v1376, %v1378
    %v1382 = vsel %vm586, %v416, 4286644096
    %v1384 = vmax.bf16 %v1380, %v1382
    %v1386 = vsel %vm586, %v480, 4286644096
    %v1388 = vmax.bf16 %v1384, %v1386
    %v1390 = vsel %vm586, %v544, 4286644096
    %v1392 = vmax.bf16 %v1388, %v1390
    %v1394 = vsel %vm586, %v33, 4286644096
    %v1397 = vsel %vm586, %v97, 4286644096
    %v1399 = vmax.bf16 %v1394, %v1397
    %v1401 = vsel %vm586, %v161, 4286644096
    %v1403 = vmax.bf16 %v1399, %v1401
    %v1405 = vsel %vm586, %v225, 4286644096
    %v1407 = vmax.bf16 %v1403, %v1405
    %v1409 = vsel %vm586, %v289, 4286644096
    %v1411 = vmax.bf16 %v1407, %v1409
    %v1413 = vsel %vm586, %v353, 4286644096
    %v1415 = vmax.bf16 %v1411, %v1413
    %v1417 = vsel %vm586, %v417, 4286644096
    %v1419 = vmax.bf16 %v1415, %v1417
    %v1421 = vsel %vm586, %v481, 4286644096
    %v1423 = vmax.bf16 %v1419, %v1421
    %v1425 = vsel %vm586, %v545, 4286644096
    %v1427 = vmax.bf16 %v1423, %v1425
    %v1429 = vsel %vm586, %v34, 4286644096
    %v1432 = vsel %vm586, %v98, 4286644096
    %v1434 = vmax.bf16 %v1429, %v1432
    %v1436 = vsel %vm586, %v162, 4286644096
    %v1438 = vmax.bf16 %v1434, %v1436
    %v1440 = vsel %vm586, %v226, 4286644096
    %v1442 = vmax.bf16 %v1438, %v1440
    %v1444 = vsel %vm586, %v290, 4286644096
    %v1446 = vmax.bf16 %v1442, %v1444
    %v1448 = vsel %vm586, %v354, 4286644096
    %v1450 = vmax.bf16 %v1446, %v1448
    %v1452 = vsel %vm586, %v418, 4286644096
    %v1454 = vmax.bf16 %v1450, %v1452
    %v1456 = vsel %vm586, %v482, 4286644096
    %v1458 = vmax.bf16 %v1454, %v1456
    %v1460 = vsel %vm586, %v546, 4286644096
    %v1462 = vmax.bf16 %v1458, %v1460
    %v1464 = vsel %vm586, %v35, 4286644096
    %v1467 = vsel %vm586, %v99, 4286644096
    %v1469 = vmax.bf16 %v1464, %v1467
    %v1471 = vsel %vm586, %v163, 4286644096
    %v1473 = vmax.bf16 %v1469, %v1471
    %v1475 = vsel %vm586, %v227, 4286644096
    %v1477 = vmax.bf16 %v1473, %v1475
    %v1479 = vsel %vm586, %v291, 4286644096
    %v1481 = vmax.bf16 %v1477, %v1479
    %v1483 = vsel %vm586, %v355, 4286644096
    %v1485 = vmax.bf16 %v1481, %v1483
    %v1487 = vsel %vm586, %v419, 4286644096
    %v1489 = vmax.bf16 %v1485, %v1487
    %v1491 = vsel %vm586, %v483, 4286644096
    %v1493 = vmax.bf16 %v1489, %v1491
    %v1495 = vsel %vm586, %v547, 4286644096
    %v1497 = vmax.bf16 %v1493, %v1495
    %v1499 = vsel %vm586, %v36, 4286644096
    %v1502 = vsel %vm586, %v100, 4286644096
    %v1504 = vmax.bf16 %v1499, %v1502
    %v1506 = vsel %vm586, %v164, 4286644096
    %v1508 = vmax.bf16 %v1504, %v1506
    %v1510 = vsel %vm586, %v228, 4286644096
    %v1512 = vmax.bf16 %v1508, %v1510
    %v1514 = vsel %vm586, %v292, 4286644096
    %v1516 = vmax.bf16 %v1512, %v1514
    %v1518 = vsel %vm586, %v356, 4286644096
    %v1520 = vmax.bf16 %v1516, %v1518
    %v1522 = vsel %vm586, %v420, 4286644096
    %v1524 = vmax.bf16 %v1520, %v1522
    %v1526 = vsel %vm586, %v484, 4286644096
    %v1528 = vmax.bf16 %v1524, %v1526
    %v1530 = vsel %vm586, %v548, 4286644096
    %v1532 = vmax.bf16 %v1528, %v1530
    %v1534 = vsel %vm586, %v37, 4286644096
    %v1537 = vsel %vm586, %v101, 4286644096
    %v1539 = vmax.bf16 %v1534, %v1537
    %v1541 = vsel %vm586, %v165, 4286644096
    %v1543 = vmax.bf16 %v1539, %v1541
    %v1545 = vsel %vm586, %v229, 4286644096
    %v1547 = vmax.bf16 %v1543, %v1545
    %v1549 = vsel %vm586, %v293, 4286644096
    %v1551 = vmax.bf16 %v1547, %v1549
    %v1553 = vsel %vm586, %v357, 4286644096
    %v1555 = vmax.bf16 %v1551, %v1553
    %v1557 = vsel %vm586, %v421, 4286644096
    %v1559 = vmax.bf16 %v1555, %v1557
    %v1561 = vsel %vm586, %v485, 4286644096
    %v1563 = vmax.bf16 %v1559, %v1561
    %v1565 = vsel %vm586, %v549, 4286644096
    %v1567 = vmax.bf16 %v1563, %v1565
    %v1569 = vsel %vm586, %v38, 4286644096
    %v1572 = vsel %vm586, %v102, 4286644096
    %v1574 = vmax.bf16 %v1569, %v1572
    %v1576 = vsel %vm586, %v166, 4286644096
    %v1578 = vmax.bf16 %v1574, %v1576
    %v1580 = vsel %vm586, %v230, 4286644096
    %v1582 = vmax.bf16 %v1578, %v1580
    %v1584 = vsel %vm586, %v294, 4286644096
    %v1586 = vmax.bf16 %v1582, %v1584
    %v1588 = vsel %vm586, %v358, 4286644096
    %v1590 = vmax.bf16 %v1586, %v1588
    %v1592 = vsel %vm586, %v422, 4286644096
    %v1594 = vmax.bf16 %v1590, %v1592
    %v1596 = vsel %vm586, %v486, 4286644096
    %v1598 = vmax.bf16 %v1594, %v1596
    %v1600 = vsel %vm586, %v550, 4286644096
    %v1602 = vmax.bf16 %v1598, %v1600
    %v1604 = vsel %vm586, %v39, 4286644096
    %v1607 = vsel %vm586, %v103, 4286644096
    %v1609 = vmax.bf16 %v1604, %v1607
    %v1611 = vsel %vm586, %v167, 4286644096
    %v1613 = vmax.bf16 %v1609, %v1611
    %v1615 = vsel %vm586, %v231, 4286644096
    %v1617 = vmax.bf16 %v1613, %v1615
    %v1619 = vsel %vm586, %v295, 4286644096
    %v1621 = vmax.bf16 %v1617, %v1619
    %v1623 = vsel %vm586, %v359, 4286644096
    %v1625 = vmax.bf16 %v1621, %v1623
    %v1627 = vsel %vm586, %v423, 4286644096
    %v1629 = vmax.bf16 %v1625, %v1627
    %v1631 = vsel %vm586, %v487, 4286644096
    %v1633 = vmax.bf16 %v1629, %v1631
    %v1635 = vsel %vm586, %v551, 4286644096
    %v1637 = vmax.bf16 %v1633, %v1635
    %v1639 = vsel %vm586, %v40, 4286644096
    %v1642 = vsel %vm586, %v104, 4286644096
    %v1644 = vmax.bf16 %v1639, %v1642
    %v1646 = vsel %vm586, %v168, 4286644096
    %v1648 = vmax.bf16 %v1644, %v1646
    %v1650 = vsel %vm586, %v232, 4286644096
    %v1652 = vmax.bf16 %v1648, %v1650
    %v1654 = vsel %vm586, %v296, 4286644096
    %v1656 = vmax.bf16 %v1652, %v1654
    %v1658 = vsel %vm586, %v360, 4286644096
    %v1660 = vmax.bf16 %v1656, %v1658
    %v1662 = vsel %vm586, %v424, 4286644096
    %v1664 = vmax.bf16 %v1660, %v1662
    %v1666 = vsel %vm586, %v488, 4286644096
    %v1668 = vmax.bf16 %v1664, %v1666
    %v1670 = vsel %vm586, %v552, 4286644096
    %v1672 = vmax.bf16 %v1668, %v1670
    %v1674 = vsel %vm586, %v41, 4286644096
    %v1677 = vsel %vm586, %v105, 4286644096
    %v1679 = vmax.bf16 %v1674, %v1677
    %v1681 = vsel %vm586, %v169, 4286644096
    %v1683 = vmax.bf16 %v1679, %v1681
    %v1685 = vsel %vm586, %v233, 4286644096
    %v1687 = vmax.bf16 %v1683, %v1685
    %v1689 = vsel %vm586, %v297, 4286644096
    %v1691 = vmax.bf16 %v1687, %v1689
    %v1693 = vsel %vm586, %v361, 4286644096
    %v1695 = vmax.bf16 %v1691, %v1693
    %v1697 = vsel %vm586, %v425, 4286644096
    %v1699 = vmax.bf16 %v1695, %v1697
    %v1701 = vsel %vm586, %v489, 4286644096
    %v1703 = vmax.bf16 %v1699, %v1701
    %v1705 = vsel %vm586, %v553, 4286644096
    %v1707 = vmax.bf16 %v1703, %v1705
    %v1709 = vsel %vm586, %v42, 4286644096
    %v1712 = vsel %vm586, %v106, 4286644096
    %v1714 = vmax.bf16 %v1709, %v1712
    %v1716 = vsel %vm586, %v170, 4286644096
    %v1718 = vmax.bf16 %v1714, %v1716
    %v1720 = vsel %vm586, %v234, 4286644096
    %v1722 = vmax.bf16 %v1718, %v1720
    %v1724 = vsel %vm586, %v298, 4286644096
    %v1726 = vmax.bf16 %v1722, %v1724
    %v1728 = vsel %vm586, %v362, 4286644096
    %v1730 = vmax.bf16 %v1726, %v1728
    %v1732 = vsel %vm586, %v426, 4286644096
    %v1734 = vmax.bf16 %v1730, %v1732
    %v1736 = vsel %vm586, %v490, 4286644096
    %v1738 = vmax.bf16 %v1734, %v1736
    %v1740 = vsel %vm586, %v554, 4286644096
    %v1742 = vmax.bf16 %v1738, %v1740
    %v1744 = vsel %vm586, %v43, 4286644096
    %v1747 = vsel %vm586, %v107, 4286644096
    %v1749 = vmax.bf16 %v1744, %v1747
    %v1751 = vsel %vm586, %v171, 4286644096
    %v1753 = vmax.bf16 %v1749, %v1751
    %v1755 = vsel %vm586, %v235, 4286644096
    %v1757 = vmax.bf16 %v1753, %v1755
    %v1759 = vsel %vm586, %v299, 4286644096
    %v1761 = vmax.bf16 %v1757, %v1759
    %v1763 = vsel %vm586, %v363, 4286644096
    %v1765 = vmax.bf16 %v1761, %v1763
    %v1767 = vsel %vm586, %v427, 4286644096
    %v1769 = vmax.bf16 %v1765, %v1767
    %v1771 = vsel %vm586, %v491, 4286644096
    %v1773 = vmax.bf16 %v1769, %v1771
    %v1775 = vsel %vm586, %v555, 4286644096
    %v1777 = vmax.bf16 %v1773, %v1775
    %v1779 = vsel %vm586, %v44, 4286644096
    %v1782 = vsel %vm586, %v108, 4286644096
    %v1784 = vmax.bf16 %v1779, %v1782
    %v1786 = vsel %vm586, %v172, 4286644096
    %v1788 = vmax.bf16 %v1784, %v1786
    %v1790 = vsel %vm586, %v236, 4286644096
    %v1792 = vmax.bf16 %v1788, %v1790
    %v1794 = vsel %vm586, %v300, 4286644096
    %v1796 = vmax.bf16 %v1792, %v1794
    %v1798 = vsel %vm586, %v364, 4286644096
    %v1800 = vmax.bf16 %v1796, %v1798
    %v1802 = vsel %vm586, %v428, 4286644096
    %v1804 = vmax.bf16 %v1800, %v1802
    %v1806 = vsel %vm586, %v492, 4286644096
    %v1808 = vmax.bf16 %v1804, %v1806
    %v1810 = vsel %vm586, %v556, 4286644096
    %v1812 = vmax.bf16 %v1808, %v1810
    %v1814 = vsel %vm586, %v45, 4286644096
    %v1817 = vsel %vm586, %v109, 4286644096
    %v1819 = vmax.bf16 %v1814, %v1817
    %v1821 = vsel %vm586, %v173, 4286644096
    %v1823 = vmax.bf16 %v1819, %v1821
    %v1825 = vsel %vm586, %v237, 4286644096
    %v1827 = vmax.bf16 %v1823, %v1825
    %v1829 = vsel %vm586, %v301, 4286644096
    %v1831 = vmax.bf16 %v1827, %v1829
    %v1833 = vsel %vm586, %v365, 4286644096
    %v1835 = vmax.bf16 %v1831, %v1833
    %v1837 = vsel %vm586, %v429, 4286644096
    %v1839 = vmax.bf16 %v1835, %v1837
    %v1841 = vsel %vm586, %v493, 4286644096
    %v1843 = vmax.bf16 %v1839, %v1841
    %v1845 = vsel %vm586, %v557, 4286644096
    %v1847 = vmax.bf16 %v1843, %v1845
    %v1849 = vsel %vm586, %v46, 4286644096
    %v1852 = vsel %vm586, %v110, 4286644096
    %v1854 = vmax.bf16 %v1849, %v1852
    %v1856 = vsel %vm586, %v174, 4286644096
    %v1858 = vmax.bf16 %v1854, %v1856
    %v1860 = vsel %vm586, %v238, 4286644096
    %v1862 = vmax.bf16 %v1858, %v1860
    %v1864 = vsel %vm586, %v302, 4286644096
    %v1866 = vmax.bf16 %v1862, %v1864
    %v1868 = vsel %vm586, %v366, 4286644096
    %v1870 = vmax.bf16 %v1866, %v1868
    %v1872 = vsel %vm586, %v430, 4286644096
    %v1874 = vmax.bf16 %v1870, %v1872
    %v1876 = vsel %vm586, %v494, 4286644096
    %v1878 = vmax.bf16 %v1874, %v1876
    %v1880 = vsel %vm586, %v558, 4286644096
    %v1882 = vmax.bf16 %v1878, %v1880
    %v1884 = vsel %vm586, %v47, 4286644096
    %v1887 = vsel %vm586, %v111, 4286644096
    %v1889 = vmax.bf16 %v1884, %v1887
    %v1891 = vsel %vm586, %v175, 4286644096
    %v1893 = vmax.bf16 %v1889, %v1891
    %v1895 = vsel %vm586, %v239, 4286644096
    %v1897 = vmax.bf16 %v1893, %v1895
    %v1899 = vsel %vm586, %v303, 4286644096
    %v1901 = vmax.bf16 %v1897, %v1899
    %v1903 = vsel %vm586, %v367, 4286644096
    %v1905 = vmax.bf16 %v1901, %v1903
    %v1907 = vsel %vm586, %v431, 4286644096
    %v1909 = vmax.bf16 %v1905, %v1907
    %v1911 = vsel %vm586, %v495, 4286644096
    %v1913 = vmax.bf16 %v1909, %v1911
    %v1915 = vsel %vm586, %v559, 4286644096
    %v1917 = vmax.bf16 %v1913, %v1915
    %v1919 = vsel %vm586, %v48, 4286644096
    %v1922 = vsel %vm586, %v112, 4286644096
    %v1924 = vmax.bf16 %v1919, %v1922
    %v1926 = vsel %vm586, %v176, 4286644096
    %v1928 = vmax.bf16 %v1924, %v1926
    %v1930 = vsel %vm586, %v240, 4286644096
    %v1932 = vmax.bf16 %v1928, %v1930
    %v1934 = vsel %vm586, %v304, 4286644096
    %v1936 = vmax.bf16 %v1932, %v1934
    %v1938 = vsel %vm586, %v368, 4286644096
    %v1940 = vmax.bf16 %v1936, %v1938
    %v1942 = vsel %vm586, %v432, 4286644096
    %v1944 = vmax.bf16 %v1940, %v1942
    %v1946 = vsel %vm586, %v496, 4286644096
    %v1948 = vmax.bf16 %v1944, %v1946
    %v1950 = vsel %vm586, %v560, 4286644096
    %v1952 = vmax.bf16 %v1948, %v1950
    %v1954 = vsel %vm586, %v49, 4286644096
    %v1957 = vsel %vm586, %v113, 4286644096
    %v1959 = vmax.bf16 %v1954, %v1957
    %v1961 = vsel %vm586, %v177, 4286644096
    %v1963 = vmax.bf16 %v1959, %v1961
    %v1965 = vsel %vm586, %v241, 4286644096
    %v1967 = vmax.bf16 %v1963, %v1965
    %v1969 = vsel %vm586, %v305, 4286644096
    %v1971 = vmax.bf16 %v1967, %v1969
    %v1973 = vsel %vm586, %v369, 4286644096
    %v1975 = vmax.bf16 %v1971, %v1973
    %v1977 = vsel %vm586, %v433, 4286644096
    %v1979 = vmax.bf16 %v1975, %v1977
    %v1981 = vsel %vm586, %v497, 4286644096
    %v1983 = vmax.bf16 %v1979, %v1981
    %v1985 = vsel %vm586, %v561, 4286644096
    %v1987 = vmax.bf16 %v1983, %v1985
    %v1989 = vsel %vm586, %v50, 4286644096
    %v1992 = vsel %vm586, %v114, 4286644096
    %v1994 = vmax.bf16 %v1989, %v1992
    %v1996 = vsel %vm586, %v178, 4286644096
    %v1998 = vmax.bf16 %v1994, %v1996
    %v2000 = vsel %vm586, %v242, 4286644096
    %v2002 = vmax.bf16 %v1998, %v2000
    %v2004 = vsel %vm586, %v306, 4286644096
    %v2006 = vmax.bf16 %v2002, %v2004
    %v2008 = vsel %vm586, %v370, 4286644096
    %v2010 = vmax.bf16 %v2006, %v2008
    %v2012 = vsel %vm586, %v434, 4286644096
    %v2014 = vmax.bf16 %v2010, %v2012
    %v2016 = vsel %vm586, %v498, 4286644096
    %v2018 = vmax.bf16 %v2014, %v2016
    %v2020 = vsel %vm586, %v562, 4286644096
    %v2022 = vmax.bf16 %v2018, %v2020
    %v2024 = vsel %vm586, %v51, 4286644096
    %v2027 = vsel %vm586, %v115, 4286644096
    %v2029 = vmax.bf16 %v2024, %v2027
    %v2031 = vsel %vm586, %v179, 4286644096
    %v2033 = vmax.bf16 %v2029, %v2031
    %v2035 = vsel %vm586, %v243, 4286644096
    %v2037 = vmax.bf16 %v2033, %v2035
    %v2039 = vsel %vm586, %v307, 4286644096
    %v2041 = vmax.bf16 %v2037, %v2039
    %v2043 = vsel %vm586, %v371, 4286644096
    %v2045 = vmax.bf16 %v2041, %v2043
    %v2047 = vsel %vm586, %v435, 4286644096
    %v2049 = vmax.bf16 %v2045, %v2047
    %v2051 = vsel %vm586, %v499, 4286644096
    %v2053 = vmax.bf16 %v2049, %v2051
    %v2055 = vsel %vm586, %v563, 4286644096
    %v2057 = vmax.bf16 %v2053, %v2055
    %v2059 = vsel %vm586, %v52, 4286644096
    %v2062 = vsel %vm586, %v116, 4286644096
    %v2064 = vmax.bf16 %v2059, %v2062
    %v2066 = vsel %vm586, %v180, 4286644096
    %v2068 = vmax.bf16 %v2064, %v2066
    %v2070 = vsel %vm586, %v244, 4286644096
    %v2072 = vmax.bf16 %v2068, %v2070
    %v2074 = vsel %vm586, %v308, 4286644096
    %v2076 = vmax.bf16 %v2072, %v2074
    %v2078 = vsel %vm586, %v372, 4286644096
    %v2080 = vmax.bf16 %v2076, %v2078
    %v2082 = vsel %vm586, %v436, 4286644096
    %v2084 = vmax.bf16 %v2080, %v2082
    %v2086 = vsel %vm586, %v500, 4286644096
    %v2088 = vmax.bf16 %v2084, %v2086
    %v2090 = vsel %vm586, %v564, 4286644096
    %v2092 = vmax.bf16 %v2088, %v2090
    %v2094 = vsel %vm586, %v53, 4286644096
    %v2097 = vsel %vm586, %v117, 4286644096
    %v2099 = vmax.bf16 %v2094, %v2097
    %v2101 = vsel %vm586, %v181, 4286644096
    %v2103 = vmax.bf16 %v2099, %v2101
    %v2105 = vsel %vm586, %v245, 4286644096
    %v2107 = vmax.bf16 %v2103, %v2105
    %v2109 = vsel %vm586, %v309, 4286644096
    %v2111 = vmax.bf16 %v2107, %v2109
    %v2113 = vsel %vm586, %v373, 4286644096
    %v2115 = vmax.bf16 %v2111, %v2113
    %v2117 = vsel %vm586, %v437, 4286644096
    %v2119 = vmax.bf16 %v2115, %v2117
    %v2121 = vsel %vm586, %v501, 4286644096
    %v2123 = vmax.bf16 %v2119, %v2121
    %v2125 = vsel %vm586, %v565, 4286644096
    %v2127 = vmax.bf16 %v2123, %v2125
    %v2129 = vsel %vm586, %v54, 4286644096
    %v2132 = vsel %vm586, %v118, 4286644096
    %v2134 = vmax.bf16 %v2129, %v2132
    %v2136 = vsel %vm586, %v182, 4286644096
    %v2138 = vmax.bf16 %v2134, %v2136
    %v2140 = vsel %vm586, %v246, 4286644096
    %v2142 = vmax.bf16 %v2138, %v2140
    %v2144 = vsel %vm586, %v310, 4286644096
    %v2146 = vmax.bf16 %v2142, %v2144
    %v2148 = vsel %vm586, %v374, 4286644096
    %v2150 = vmax.bf16 %v2146, %v2148
    %v2152 = vsel %vm586, %v438, 4286644096
    %v2154 = vmax.bf16 %v2150, %v2152
    %v2156 = vsel %vm586, %v502, 4286644096
    %v2158 = vmax.bf16 %v2154, %v2156
    %v2160 = vsel %vm586, %v566, 4286644096
    %v2162 = vmax.bf16 %v2158, %v2160
    %v2164 = vsel %vm586, %v55, 4286644096
    %v2167 = vsel %vm586, %v119, 4286644096
    %v2169 = vmax.bf16 %v2164, %v2167
    %v2171 = vsel %vm586, %v183, 4286644096
    %v2173 = vmax.bf16 %v2169, %v2171
    %v2175 = vsel %vm586, %v247, 4286644096
    %v2177 = vmax.bf16 %v2173, %v2175
    %v2179 = vsel %vm586, %v311, 4286644096
    %v2181 = vmax.bf16 %v2177, %v2179
    %v2183 = vsel %vm586, %v375, 4286644096
    %v2185 = vmax.bf16 %v2181, %v2183
    %v2187 = vsel %vm586, %v439, 4286644096
    %v2189 = vmax.bf16 %v2185, %v2187
    %v2191 = vsel %vm586, %v503, 4286644096
    %v2193 = vmax.bf16 %v2189, %v2191
    %v2195 = vsel %vm586, %v567, 4286644096
    %v2197 = vmax.bf16 %v2193, %v2195
    %v2199 = vsel %vm586, %v56, 4286644096
    %v2202 = vsel %vm586, %v120, 4286644096
    %v2204 = vmax.bf16 %v2199, %v2202
    %v2206 = vsel %vm586, %v184, 4286644096
    %v2208 = vmax.bf16 %v2204, %v2206
    %v2210 = vsel %vm586, %v248, 4286644096
    %v2212 = vmax.bf16 %v2208, %v2210
    %v2214 = vsel %vm586, %v312, 4286644096
    %v2216 = vmax.bf16 %v2212, %v2214
    %v2218 = vsel %vm586, %v376, 4286644096
    %v2220 = vmax.bf16 %v2216, %v2218
    %v2222 = vsel %vm586, %v440, 4286644096
    %v2224 = vmax.bf16 %v2220, %v2222
    %v2226 = vsel %vm586, %v504, 4286644096
    %v2228 = vmax.bf16 %v2224, %v2226
    %v2230 = vsel %vm586, %v568, 4286644096
    %v2232 = vmax.bf16 %v2228, %v2230
    %v2234 = vsel %vm586, %v57, 4286644096
    %v2237 = vsel %vm586, %v121, 4286644096
    %v2239 = vmax.bf16 %v2234, %v2237
    %v2241 = vsel %vm586, %v185, 4286644096
    %v2243 = vmax.bf16 %v2239, %v2241
    %v2245 = vsel %vm586, %v249, 4286644096
    %v2247 = vmax.bf16 %v2243, %v2245
    %v2249 = vsel %vm586, %v313, 4286644096
    %v2251 = vmax.bf16 %v2247, %v2249
    %v2253 = vsel %vm586, %v377, 4286644096
    %v2255 = vmax.bf16 %v2251, %v2253
    %v2257 = vsel %vm586, %v441, 4286644096
    %v2259 = vmax.bf16 %v2255, %v2257
    %v2261 = vsel %vm586, %v505, 4286644096
    %v2263 = vmax.bf16 %v2259, %v2261
    %v2265 = vsel %vm586, %v569, 4286644096
    %v2267 = vmax.bf16 %v2263, %v2265
    %v2269 = vsel %vm586, %v58, 4286644096
    %v2272 = vsel %vm586, %v122, 4286644096
    %v2274 = vmax.bf16 %v2269, %v2272
    %v2276 = vsel %vm586, %v186, 4286644096
    %v2278 = vmax.bf16 %v2274, %v2276
    %v2280 = vsel %vm586, %v250, 4286644096
    %v2282 = vmax.bf16 %v2278, %v2280
    %v2284 = vsel %vm586, %v314, 4286644096
    %v2286 = vmax.bf16 %v2282, %v2284
    %v2288 = vsel %vm586, %v378, 4286644096
    %v2290 = vmax.bf16 %v2286, %v2288
    %v2292 = vsel %vm586, %v442, 4286644096
    %v2294 = vmax.bf16 %v2290, %v2292
    %v2296 = vsel %vm586, %v506, 4286644096
    %v2298 = vmax.bf16 %v2294, %v2296
    %v2300 = vsel %vm586, %v570, 4286644096
    %v2302 = vmax.bf16 %v2298, %v2300
    %v2304 = vsel %vm586, %v59, 4286644096
    %v2307 = vsel %vm586, %v123, 4286644096
    %v2309 = vmax.bf16 %v2304, %v2307
    %v2311 = vsel %vm586, %v187, 4286644096
    %v2313 = vmax.bf16 %v2309, %v2311
    %v2315 = vsel %vm586, %v251, 4286644096
    %v2317 = vmax.bf16 %v2313, %v2315
    %v2319 = vsel %vm586, %v315, 4286644096
    %v2321 = vmax.bf16 %v2317, %v2319
    %v2323 = vsel %vm586, %v379, 4286644096
    %v2325 = vmax.bf16 %v2321, %v2323
    %v2327 = vsel %vm586, %v443, 4286644096
    %v2329 = vmax.bf16 %v2325, %v2327
    %v2331 = vsel %vm586, %v507, 4286644096
    %v2333 = vmax.bf16 %v2329, %v2331
    %v2335 = vsel %vm586, %v571, 4286644096
    %v2337 = vmax.bf16 %v2333, %v2335
    %v2339 = vsel %vm586, %v60, 4286644096
    %v2342 = vsel %vm586, %v124, 4286644096
    %v2344 = vmax.bf16 %v2339, %v2342
    %v2346 = vsel %vm586, %v188, 4286644096
    %v2348 = vmax.bf16 %v2344, %v2346
    %v2350 = vsel %vm586, %v252, 4286644096
    %v2352 = vmax.bf16 %v2348, %v2350
    %v2354 = vsel %vm586, %v316, 4286644096
    %v2356 = vmax.bf16 %v2352, %v2354
    %v2358 = vsel %vm586, %v380, 4286644096
    %v2360 = vmax.bf16 %v2356, %v2358
    %v2362 = vsel %vm586, %v444, 4286644096
    %v2364 = vmax.bf16 %v2360, %v2362
    %v2366 = vsel %vm586, %v508, 4286644096
    %v2368 = vmax.bf16 %v2364, %v2366
    %v2370 = vsel %vm586, %v572, 4286644096
    %v2372 = vmax.bf16 %v2368, %v2370
    %v2374 = vsel %vm586, %v61, 4286644096
    %v2377 = vsel %vm586, %v125, 4286644096
    %v2379 = vmax.bf16 %v2374, %v2377
    %v2381 = vsel %vm586, %v189, 4286644096
    %v2383 = vmax.bf16 %v2379, %v2381
    %v2385 = vsel %vm586, %v253, 4286644096
    %v2387 = vmax.bf16 %v2383, %v2385
    %v2389 = vsel %vm586, %v317, 4286644096
    %v2391 = vmax.bf16 %v2387, %v2389
    %v2393 = vsel %vm586, %v381, 4286644096
    %v2395 = vmax.bf16 %v2391, %v2393
    %v2397 = vsel %vm586, %v445, 4286644096
    %v2399 = vmax.bf16 %v2395, %v2397
    %v2401 = vsel %vm586, %v509, 4286644096
    %v2403 = vmax.bf16 %v2399, %v2401
    %v2405 = vsel %vm586, %v573, 4286644096
    %v2407 = vmax.bf16 %v2403, %v2405
    %v2409 = vsel %vm586, %v62, 4286644096
    %v2412 = vsel %vm586, %v126, 4286644096
    %v2414 = vmax.bf16 %v2409, %v2412
    %v2416 = vsel %vm586, %v190, 4286644096
    %v2418 = vmax.bf16 %v2414, %v2416
    %v2420 = vsel %vm586, %v254, 4286644096
    %v2422 = vmax.bf16 %v2418, %v2420
    %v2424 = vsel %vm586, %v318, 4286644096
    %v2426 = vmax.bf16 %v2422, %v2424
    %v2428 = vsel %vm586, %v382, 4286644096
    %v2430 = vmax.bf16 %v2426, %v2428
    %v2432 = vsel %vm586, %v446, 4286644096
    %v2434 = vmax.bf16 %v2430, %v2432
    %v2436 = vsel %vm586, %v510, 4286644096
    %v2438 = vmax.bf16 %v2434, %v2436
    %v2440 = vsel %vm586, %v574, 4286644096
    %v2442 = vmax.bf16 %v2438, %v2440
    %v2444 = vsel %vm586, %v63, 4286644096
    %v2447 = vsel %vm586, %v127, 4286644096
    %v2449 = vmax.bf16 %v2444, %v2447
    %v2451 = vsel %vm586, %v191, 4286644096
    %v2453 = vmax.bf16 %v2449, %v2451
    %v2455 = vsel %vm586, %v255, 4286644096
    %v2457 = vmax.bf16 %v2453, %v2455
    %v2459 = vsel %vm586, %v319, 4286644096
    %v2461 = vmax.bf16 %v2457, %v2459
    %v2463 = vsel %vm586, %v383, 4286644096
    %v2465 = vmax.bf16 %v2461, %v2463
    %v2467 = vsel %vm586, %v447, 4286644096
    %v2469 = vmax.bf16 %v2465, %v2467
    %v2471 = vsel %vm586, %v511, 4286644096
    %v2473 = vmax.bf16 %v2469, %v2471
    %v2475 = vsel %vm586, %v575, 4286644096
    %v2477 = vmax.bf16 %v2473, %v2475
    %v2479 = vsel %vm586, %v64, 4286644096
    %v2482 = vsel %vm586, %v128, 4286644096
    %v2484 = vmax.bf16 %v2479, %v2482
    %v2486 = vsel %vm586, %v192, 4286644096
    %v2488 = vmax.bf16 %v2484, %v2486
    %v2490 = vsel %vm586, %v256, 4286644096
    %v2492 = vmax.bf16 %v2488, %v2490
    %v2494 = vsel %vm586, %v320, 4286644096
    %v2496 = vmax.bf16 %v2492, %v2494
    %v2498 = vsel %vm586, %v384, 4286644096
    %v2500 = vmax.bf16 %v2496, %v2498
    %v2502 = vsel %vm586, %v448, 4286644096
    %v2504 = vmax.bf16 %v2500, %v2502
    %v2506 = vsel %vm586, %v512, 4286644096
    %v2508 = vmax.bf16 %v2504, %v2506
    %v2510 = vsel %vm586, %v576, 4286644096
    %v2512 = vmax.bf16 %v2508, %v2510
    %v2514 = vsel %vm586, %v65, 4286644096
    %v2517 = vsel %vm586, %v129, 4286644096
    %v2519 = vmax.bf16 %v2514, %v2517
    %v2521 = vsel %vm586, %v193, 4286644096
    %v2523 = vmax.bf16 %v2519, %v2521
    %v2525 = vsel %vm586, %v257, 4286644096
    %v2527 = vmax.bf16 %v2523, %v2525
    %v2529 = vsel %vm586, %v321, 4286644096
    %v2531 = vmax.bf16 %v2527, %v2529
    %v2533 = vsel %vm586, %v385, 4286644096
    %v2535 = vmax.bf16 %v2531, %v2533
    %v2537 = vsel %vm586, %v449, 4286644096
    %v2539 = vmax.bf16 %v2535, %v2537
    %v2541 = vsel %vm586, %v513, 4286644096
    %v2543 = vmax.bf16 %v2539, %v2541
    %v2545 = vsel %vm586, %v577, 4286644096
    %v2547 = vmax.bf16 %v2543, %v2545
    %v2549 = vsel %vm586, %v66, 4286644096
    %v2552 = vsel %vm586, %v130, 4286644096
    %v2554 = vmax.bf16 %v2549, %v2552
    %v2556 = vsel %vm586, %v194, 4286644096
    %v2558 = vmax.bf16 %v2554, %v2556
    %v2560 = vsel %vm586, %v258, 4286644096
    %v2562 = vmax.bf16 %v2558, %v2560
    %v2564 = vsel %vm586, %v322, 4286644096
    %v2566 = vmax.bf16 %v2562, %v2564
    %v2568 = vsel %vm586, %v386, 4286644096
    %v2570 = vmax.bf16 %v2566, %v2568
    %v2572 = vsel %vm586, %v450, 4286644096
    %v2574 = vmax.bf16 %v2570, %v2572
    %v2576 = vsel %vm586, %v514, 4286644096
    %v2578 = vmax.bf16 %v2574, %v2576
    %v2580 = vsel %vm586, %v578, 4286644096
    %v2582 = vmax.bf16 %v2578, %v2580
    %v2584 = vsel %vm586, %v67, 4286644096
    %v2587 = vsel %vm586, %v131, 4286644096
    %v2589 = vmax.bf16 %v2584, %v2587
    %v2591 = vsel %vm586, %v195, 4286644096
    %v2593 = vmax.bf16 %v2589, %v2591
    %v2595 = vsel %vm586, %v259, 4286644096
    %v2597 = vmax.bf16 %v2593, %v2595
    %v2599 = vsel %vm586, %v323, 4286644096
    %v2601 = vmax.bf16 %v2597, %v2599
    %v2603 = vsel %vm586, %v387, 4286644096
    %v2605 = vmax.bf16 %v2601, %v2603
    %v2607 = vsel %vm586, %v451, 4286644096
    %v2609 = vmax.bf16 %v2605, %v2607
    %v2611 = vsel %vm586, %v515, 4286644096
    %v2613 = vmax.bf16 %v2609, %v2611
    %v2615 = vsel %vm586, %v579, 4286644096
    %v2617 = vmax.bf16 %v2613, %v2615
    %v2619 = vsel %vm586, %v68, 4286644096
    %v2622 = vsel %vm586, %v132, 4286644096
    %v2624 = vmax.bf16 %v2619, %v2622
    %v2626 = vsel %vm586, %v196, 4286644096
    %v2628 = vmax.bf16 %v2624, %v2626
    %v2630 = vsel %vm586, %v260, 4286644096
    %v2632 = vmax.bf16 %v2628, %v2630
    %v2634 = vsel %vm586, %v324, 4286644096
    %v2636 = vmax.bf16 %v2632, %v2634
    %v2638 = vsel %vm586, %v388, 4286644096
    %v2640 = vmax.bf16 %v2636, %v2638
    %v2642 = vsel %vm586, %v452, 4286644096
    %v2644 = vmax.bf16 %v2640, %v2642
    %v2646 = vsel %vm586, %v516, 4286644096
    %v2648 = vmax.bf16 %v2644, %v2646
    %v2650 = vsel %vm586, %v580, 4286644096
    %v2652 = vmax.bf16 %v2648, %v2650
    %v2654 = vsel %vm586, %v69, 4286644096
    %v2657 = vsel %vm586, %v133, 4286644096
    %v2659 = vmax.bf16 %v2654, %v2657
    %v2661 = vsel %vm586, %v197, 4286644096
    %v2663 = vmax.bf16 %v2659, %v2661
    %v2665 = vsel %vm586, %v261, 4286644096
    %v2667 = vmax.bf16 %v2663, %v2665
    %v2669 = vsel %vm586, %v325, 4286644096
    %v2671 = vmax.bf16 %v2667, %v2669
    %v2673 = vsel %vm586, %v389, 4286644096
    %v2675 = vmax.bf16 %v2671, %v2673
    %v2677 = vsel %vm586, %v453, 4286644096
    %v2679 = vmax.bf16 %v2675, %v2677
    %v2681 = vsel %vm586, %v517, 4286644096
    %v2683 = vmax.bf16 %v2679, %v2681
    %v2685 = vsel %vm586, %v581, 4286644096
    %v2687 = vmax.bf16 %v2683, %v2685
    %v2689 = vsel %vm586, %v70, 4286644096
    %v2692 = vsel %vm586, %v134, 4286644096
    %v2694 = vmax.bf16 %v2689, %v2692
    %v2696 = vsel %vm586, %v198, 4286644096
    %v2698 = vmax.bf16 %v2694, %v2696
    %v2700 = vsel %vm586, %v262, 4286644096
    %v2702 = vmax.bf16 %v2698, %v2700
    %v2704 = vsel %vm586, %v326, 4286644096
    %v2706 = vmax.bf16 %v2702, %v2704
    %v2708 = vsel %vm586, %v390, 4286644096
    %v2710 = vmax.bf16 %v2706, %v2708
    %v2712 = vsel %vm586, %v454, 4286644096
    %v2714 = vmax.bf16 %v2710, %v2712
    %v2716 = vsel %vm586, %v518, 4286644096
    %v2718 = vmax.bf16 %v2714, %v2716
    %v2720 = vsel %vm586, %v582, 4286644096
    %v2722 = vmax.bf16 %v2718, %v2720
    %v2724 = vsel %vm586, %v71, 4286644096
    %v2727 = vsel %vm586, %v135, 4286644096
    %v2729 = vmax.bf16 %v2724, %v2727
    %v2731 = vsel %vm586, %v199, 4286644096
    %v2733 = vmax.bf16 %v2729, %v2731
    %v2735 = vsel %vm586, %v263, 4286644096
    %v2737 = vmax.bf16 %v2733, %v2735
    %v2739 = vsel %vm586, %v327, 4286644096
    %v2741 = vmax.bf16 %v2737, %v2739
    %v2743 = vsel %vm586, %v391, 4286644096
    %v2745 = vmax.bf16 %v2741, %v2743
    %v2747 = vsel %vm586, %v455, 4286644096
    %v2749 = vmax.bf16 %v2745, %v2747
    %v2751 = vsel %vm586, %v519, 4286644096
    %v2753 = vmax.bf16 %v2749, %v2751
    %v2755 = vsel %vm586, %v583, 4286644096
    %v2757 = vmax.bf16 %v2753, %v2755
    %v2759 = vsel %vm586, %v72, 4286644096
    %v2762 = vsel %vm586, %v136, 4286644096
    %v2764 = vmax.bf16 %v2759, %v2762
    %v2766 = vsel %vm586, %v200, 4286644096
    %v2768 = vmax.bf16 %v2764, %v2766
    %v2770 = vsel %vm586, %v264, 4286644096
    %v2772 = vmax.bf16 %v2768, %v2770
    %v2774 = vsel %vm586, %v328, 4286644096
    %v2776 = vmax.bf16 %v2772, %v2774
    %v2778 = vsel %vm586, %v392, 4286644096
    %v2780 = vmax.bf16 %v2776, %v2778
    %v2782 = vsel %vm586, %v456, 4286644096
    %v2784 = vmax.bf16 %v2780, %v2782
    %v2786 = vsel %vm586, %v520, 4286644096
    %v2788 = vmax.bf16 %v2784, %v2786
    %v2790 = vsel %vm586, %v584, 4286644096
    %v2792 = vmax.bf16 %v2788, %v2790
    %v2794 = vsel %vm586, %v73, 4286644096
    %v2797 = vsel %vm586, %v137, 4286644096
    %v2799 = vmax.bf16 %v2794, %v2797
    %v2801 = vsel %vm586, %v201, 4286644096
    %v2803 = vmax.bf16 %v2799, %v2801
    %v2805 = vsel %vm586, %v265, 4286644096
    %v2807 = vmax.bf16 %v2803, %v2805
    %v2809 = vsel %vm586, %v329, 4286644096
    %v2811 = vmax.bf16 %v2807, %v2809
    %v2813 = vsel %vm586, %v393, 4286644096
    %v2815 = vmax.bf16 %v2811, %v2813
    %v2817 = vsel %vm586, %v457, 4286644096
    %v2819 = vmax.bf16 %v2815, %v2817
    %v2821 = vsel %vm586, %v521, 4286644096
    %v2823 = vmax.bf16 %v2819, %v2821
    %v2825 = vsel %vm586, %v585, 4286644096
    %v2827 = vmax.bf16 %v2823, %v2825
    %2828 = vst.msk [vmem:[#allocation2] sm:$0xf] %vm586, %v622
    %2829 = vst.msk [vmem:[#allocation2 + $0x4] sm:$0xf] %vm586, %v657
    %2830 = vst.msk [vmem:[#allocation2 + $0x8] sm:$0xf] %vm586, %v692
    %2831 = vst.msk [vmem:[#allocation2 + $0xc] sm:$0xf] %vm586, %v727
    %2832 = vst.msk [vmem:[#allocation2 + $0x10] sm:$0xf] %vm586, %v762
    %2833 = vst.msk [vmem:[#allocation2 + $0x14] sm:$0xf] %vm586, %v797
    %2834 = vst.msk [vmem:[#allocation2 + $0x18] sm:$0xf] %vm586, %v832
    %2835 = vst.msk [vmem:[#allocation2 + $0x1c] sm:$0xf] %vm586, %v867
    %2836 = vst.msk [vmem:[#allocation2 + $0x20] sm:$0xf] %vm586, %v902
    %2837 = vst.msk [vmem:[#allocation2 + $0x24] sm:$0xf] %vm586, %v937
    %2838 = vst.msk [vmem:[#allocation2 + $0x28] sm:$0xf] %vm586, %v972
    %2839 = vst.msk [vmem:[#allocation2 + $0x2c] sm:$0xf] %vm586, %v1007
    %2840 = vst.msk [vmem:[#allocation2 + $0x30] sm:$0xf] %vm586, %v1042
    %2841 = vst.msk [vmem:[#allocation2 + $0x34] sm:$0xf] %vm586, %v1077
    %2842 = vst.msk [vmem:[#allocation2 + $0x38] sm:$0xf] %vm586, %v1112
    %2843 = vst.msk [vmem:[#allocation2 + $0x3c] sm:$0xf] %vm586, %v1147
    %2844 = vst.msk [vmem:[#allocation2 + $0x40] sm:$0xf] %vm586, %v1182
    %2845 = vst.msk [vmem:[#allocation2 + $0x44] sm:$0xf] %vm586, %v1217
    %2846 = vst.msk [vmem:[#allocation2 + $0x48] sm:$0xf] %vm586, %v1252
    %2847 = vst.msk [vmem:[#allocation2 + $0x4c] sm:$0xf] %vm586, %v1287
    %2848 = vst.msk [vmem:[#allocation2 + $0x50] sm:$0xf] %vm586, %v1322
    %2849 = vst.msk [vmem:[#allocation2 + $0x54] sm:$0xf] %vm586, %v1357
    %2850 = vst.msk [vmem:[#allocation2 + $0x58] sm:$0xf] %vm586, %v1392
    %2851 = vst.msk [vmem:[#allocation2 + $0x5c] sm:$0xf] %vm586, %v1427
    %2852 = vst.msk [vmem:[#allocation2 + $0x60] sm:$0xf] %vm586, %v1462
    %2853 = vst.msk [vmem:[#allocation2 + $0x64] sm:$0xf] %vm586, %v1497
    %2854 = vst.msk [vmem:[#allocation2 + $0x68] sm:$0xf] %vm586, %v1532
    %2855 = vst.msk [vmem:[#allocation2 + $0x6c] sm:$0xf] %vm586, %v1567
    %2856 = vst.msk [vmem:[#allocation2 + $0x70] sm:$0xf] %vm586, %v1602
    %2857 = vst.msk [vmem:[#allocation2 + $0x74] sm:$0xf] %vm586, %v1637
    %2858 = vst.msk [vmem:[#allocation2 + $0x78] sm:$0xf] %vm586, %v1672
    %2859 = vst.msk [vmem:[#allocation2 + $0x7c] sm:$0xf] %vm586, %v1707
    %2860 = vst.msk [vmem:[#allocation2 + $0x80] sm:$0xf] %vm586, %v1742
    %2861 = vst.msk [vmem:[#allocation2 + $0x84] sm:$0xf] %vm586, %v1777
    %2862 = vst.msk [vmem:[#allocation2 + $0x88] sm:$0xf] %vm586, %v1812
    %2863 = vst.msk [vmem:[#allocation2 + $0x8c] sm:$0xf] %vm586, %v1847
    %2864 = vst.msk [vmem:[#allocation2 + $0x90] sm:$0xf] %vm586, %v1882
    %2865 = vst.msk [vmem:[#allocation2 + $0x94] sm:$0xf] %vm586, %v1917
    %2866 = vst.msk [vmem:[#allocation2 + $0x98] sm:$0xf] %vm586, %v1952
    %2867 = vst.msk [vmem:[#allocation2 + $0x9c] sm:$0xf] %vm586, %v1987
    %2868 = vst.msk [vmem:[#allocation2 + $0xa0] sm:$0xf] %vm586, %v2022
    %2869 = vst.msk [vmem:[#allocation2 + $0xa4] sm:$0xf] %vm586, %v2057
    %2870 = vst.msk [vmem:[#allocation2 + $0xa8] sm:$0xf] %vm586, %v2092
    %2871 = vst.msk [vmem:[#allocation2 + $0xac] sm:$0xf] %vm586, %v2127
    %2872 = vst.msk [vmem:[#allocation2 + $0xb0] sm:$0xf] %vm586, %v2162
    %2873 = vst.msk [vmem:[#allocation2 + $0xb4] sm:$0xf] %vm586, %v2197
    %2874 = vst.msk [vmem:[#allocation2 + $0xb8] sm:$0xf] %vm586, %v2232
    %2875 = vst.msk [vmem:[#allocation2 + $0xbc] sm:$0xf] %vm586, %v2267
    %2876 = vst.msk [vmem:[#allocation2 + $0xc0] sm:$0xf] %vm586, %v2302
    %2877 = vst.msk [vmem:[#allocation2 + $0xc4] sm:$0xf] %vm586, %v2337
    %2878 = vst.msk [vmem:[#allocation2 + $0xc8] sm:$0xf] %vm586, %v2372
    %2879 = vst.msk [vmem:[#allocation2 + $0xcc] sm:$0xf] %vm586, %v2407
    %2880 = vst.msk [vmem:[#allocation2 + $0xd0] sm:$0xf] %vm586, %v2442
    %2881 = vst.msk [vmem:[#allocation2 + $0xd4] sm:$0xf] %vm586, %v2477
    %2882 = vst.msk [vmem:[#allocation2 + $0xd8] sm:$0xf] %vm586, %v2512
    %2883 = vst.msk [vmem:[#allocation2 + $0xdc] sm:$0xf] %vm586, %v2547
    %2884 = vst.msk [vmem:[#allocation2 + $0xe0] sm:$0xf] %vm586, %v2582
    %2885 = vst.msk [vmem:[#allocation2 + $0xe4] sm:$0xf] %vm586, %v2617
    %2886 = vst.msk [vmem:[#allocation2 + $0xe8] sm:$0xf] %vm586, %v2652
    %2887 = vst.msk [vmem:[#allocation2 + $0xec] sm:$0xf] %vm586, %v2687
    %2888 = vst.msk [vmem:[#allocation2 + $0xf0] sm:$0xf] %vm586, %v2722
    %2889 = vst.msk [vmem:[#allocation2 + $0xf4] sm:$0xf] %vm586, %v2757
    %2890 = vst.msk [vmem:[#allocation2 + $0xf8] sm:$0xf] %vm586, %v2792
    %2891 = vst.msk [vmem:[#allocation2 + $0xfc] sm:$0xf] %vm586, %v2827
    // Predicated region
    $region6: #{_stem_jit.3} parent=1 // pred_check
      _
    $region7: #{_stem_jit.3} parent=1 // pred_check_branch
      %2893 = sbr.rel (0) target = $region9
    $region8: #{_stem_jit.3} parent=1 // pred_region
      %s2895 = ssub.s32 4096, 4096
      %2896 = vsyncadd [#allocation3], %s2895
      %s2897 = sshll.u32 [#allocation2], 4
      %s2898 = int_to_ptr.vmem [resolvable:$true] %s2897
      %2903 = dma.vmem_to_hbm [thread:$0]  %s2898, 4096, %s1, [#allocation3], 64, 64, 4
    $region9: #{_stem_jit.3} parent=1 // pred_fallthru
      _
    // Predicated region
    $region10: #{_stem_jit.3} parent=1 // pred_check
      _
    $region11: #{_stem_jit.3} parent=1 // pred_check_branch
      %2905 = sbr.rel (0) target = $region13
    $region12: #{_stem_jit.3} parent=1 // pred_region
      %2906 = dma.done [#allocation3], 4096
    $region13: #{_stem_jit.3} parent=1 // pred_fallthru
      _
    %2907 = vsyncpa [#allocation3], 1

</llo_original>
